<compile_context>
chip_gen: v7x
topology: tpu7x:2x2x1
jax: 0.10.0
libtpu: 0.0.40
codegen_flags: <defaults>
</compile_context>

<pallas_src>
import functools

import jax
import jax.numpy as jnp
from jax.experimental import pallas as pl
from jax.experimental.pallas import tpu as pltpu

EPS_GEN = 1e-7   # GENConv message eps
BN_EPS = 1e-5    # BatchNorm eps
LANE = 128       # TPU lane width


def _round_up(v, m):
    return ((v + m - 1) // m) * m


def _pad_cols(a, target, value=0.0):
    pad = target - a.shape[-1]
    if pad <= 0:
        return a
    return jnp.pad(a, ((0, 0), (0, pad)), constant_values=value)


def _pad_rows(a, target, value=0.0):
    pad = target - a.shape[0]
    if pad <= 0:
        return a
    return jnp.pad(a, ((0, pad), (0, 0)), constant_values=value)


def _pick_edge_tile():
    # v5e: 4x128^2 MXU -> TE=128; v6e / v7x: 256^2 MXU -> TE=256.
    try:
        kind = jax.devices()[0].device_kind.lower()
    except Exception:
        kind = ""
    if "v5 lite" in kind or "v5e" in kind or "v5litepod" in kind:
        return 128
    return 256


def _vmem_limit_bytes():
    # Derive the scoped-VMEM limit from the chip (64 MiB on v7x, 128 MiB on
    # v5e/v6e) instead of hard-coding, leaving headroom for Mosaic scratch.
    try:
        cap = int(pltpu.get_tpu_info().vmem_capacity_bytes)
    except Exception:
        cap = 64 * 1024 * 1024
    return max(32 * 1024 * 1024, (cap * 3) // 4)


# ---------------------------------------------------------------------------
# Single fused kernel: grid = (num_layers, num_edge_blocks).
# ---------------------------------------------------------------------------
def _deeper_gcn_kernel(
        h_ref, src_ref, dst_ref, eemb_ref, emax_ref,
        scale_ref, shift_ref, w_ref, b_ref,
        fscale_ref, fshift_ref, pool_ref, pw_ref, pb_ref,
        out_ref,
        h_state, x_f32, x_bf, acc_ref, bound_ref,
        *, t, n_real):
    li = pl.program_id(0)            # layer index
    ei = pl.program_id(1)            # edge-block index
    n_l = pl.num_programs(0)
    n_e = pl.num_programs(1)
    n_pad, c = x_f32.shape
    te = src_ref.shape[0]

    # --- one-time: copy the atom-encoder output into the resident h state ----
    @pl.when(jnp.logical_and(li == 0, ei == 0))
    def _init_h():
        h_state[...] = h_ref[...]

    # --- per-layer setup (hoisted out of the edge loop) -----------------------
    @pl.when(ei == 0)
    def _layer_setup():
        hs = h_state[...]
        xn = jnp.maximum(hs * scale_ref[0] + shift_ref[0], 0.0)   # BN(eval)+ReLU
        g0 = jnp.where(li == 0, 1.0, 0.0)                          # layer 0: x = h
        x = g0 * hs + (1.0 - g0) * xn
        x_f32[...] = x
        x_bf[...] = x.astype(jnp.bfloat16)
        # fixed per-channel exp shift: >= t*msg for every edge (t > 0).
        xmax = jnp.max(x, axis=0, keepdims=True)                   # [1, C]
        bound_ref[...] = t * (jnp.maximum(xmax + emax_ref[...], 0.0) + EPS_GEN)
        acc_ref[...] = jnp.zeros_like(acc_ref)

    # --- per-edge-tile work ---------------------------------------------------
    src = src_ref[...]                                             # [TE, 1] int32
    dst = dst_ref[...]                                             # [1, TE] int32

    # gather one-hot [TE, N] built in registers (no HBM one-hot traffic).
    col = jax.lax.broadcasted_iota(jnp.int32, (te, n_pad), 1)
    ssrc = jnp.where(src == col, 1.0, 0.0).astype(jnp.bfloat16)    # [TE, N]
    xj = jnp.dot(ssrc, x_bf[...], preferred_element_type=jnp.float32)  # [TE, C]

    msg = jnp.maximum(xj + eemb_ref[...], 0.0) + EPS_GEN           # [TE, C]
    e_w = jnp.exp(t * msg - bound_ref[...])                        # <= 1, no overflow
    em = jnp.concatenate([e_w, msg * e_w], axis=-1).astype(jnp.bfloat16)  # [TE, 2C]

    # scatter one-hot built pre-transposed [N, TE]: plain matmul segment-sum.
    row = jax.lax.broadcasted_iota(jnp.int32, (n_pad, te), 0)
    sdst_t = jnp.where(row == dst, 1.0, 0.0).astype(jnp.bfloat16)  # [N, TE]
    acc_ref[...] += jnp.dot(sdst_t, em, preferred_element_type=jnp.float32)

    # --- per-layer finalize: softmax aggregation + MLP (+ residual) -----------
    @pl.when(ei == n_e - 1)
    def _layer_finalize():
        acc = acc_ref[...]
        denom = acc[:, :c]
        numer = acc[:, c:]
        # zero in-degree nodes have numer == 0 exactly -> m == 0, no select.
        m = numer * pl.reciprocal(jnp.maximum(denom, 1e-20), approx=True)
        hm = (x_f32[...] + m).astype(jnp.bfloat16)
        base = jnp.dot(hm, w_ref[0], preferred_element_type=jnp.float32) + b_ref[0]
        gres = jnp.where(li > 0, 1.0, 0.0)                         # res+ residual
        mask = jnp.where(
            jax.lax.broadcasted_iota(jnp.int32, (n_pad, 1), 0) < n_real, 1.0, 0.0)
        h_state[...] = (base + gres * h_state[...]) * mask

    # --- readout (final BN -> mean pool -> prediction linear), last grid point
    @pl.when(jnp.logical_and(li == n_l - 1, ei == n_e - 1))
    def _readout():
        hn = h_state[...] * fscale_ref[...] + fshift_ref[...]
        hg = jnp.dot(pool_ref[...], hn, preferred_element_type=jnp.float32)   # [G, C]
        out_ref[...] = jnp.dot(hg, pw_ref[...],
                               preferred_element_type=jnp.float32) + pb_ref[...]


# ---------------------------------------------------------------------------
# Glue (plain JAX): embedding lookups, BN folding, padding, one fused call.
# ---------------------------------------------------------------------------
def bn_eval_scale_shift(gamma, beta, mean, var):
    scale = gamma / jnp.sqrt(var + BN_EPS)
    shift = beta - mean * scale
    return scale[None, :], shift[None, :]


def deeper_gcn_forward(params, x, edge_index, edge_attr, batch, *,
                       num_layers, num_graphs, t=1.0, edge_tile=None):
    hidden = params["conv_w"][0].shape[0]
    num_tasks = params["pred_w"].shape[1]
    C = _round_up(hidden, LANE)
    T_pad = _round_up(num_tasks, LANE)
    N = x.shape[0]
    N_pad = _round_up(N, LANE)
    E = edge_attr.shape[0]
    if edge_tile is None:
        edge_tile = _pick_edge_tile()
    E_pad = _round_up(E, edge_tile)
    G = num_graphs

    # AtomEncoder / BondEncoder: sums of per-feature embedding lookups.
    # TODO(synk): integer embedding-table lookups stay in plain JAX glue
    # (data-dependent gather).
    h = jnp.zeros((N, hidden), jnp.float32)
    for f in range(x.shape[1]):
        h = h + params["atom_emb"][f][x[:, f]]
    edge_emb = jnp.zeros((E, hidden), jnp.float32)
    for f in range(edge_attr.shape[1]):
        edge_emb = edge_emb + params["bond_emb"][f][edge_attr[:, f]]

    # Per-channel max of the bond embeddings over real edges (exp-shift bound).
    emax = _pad_cols(jnp.max(edge_emb, axis=0, keepdims=True), C)

    # Lane/sublane-dense padding: channels & nodes -> multiples of 128,
    # edges -> multiple of the edge tile, tasks -> multiple of 128.
    h0 = _pad_rows(_pad_cols(h, C), N_pad)
    edge_emb = jnp.pad(_pad_cols(edge_emb, C), ((0, E_pad - E), (0, 0)))

    # Padded edges get src/dst == N_pad (outside [0, N_pad)): the in-kernel
    # one-hot rows/cols are all-zero, so they contribute nothing.
    src = jnp.pad(edge_index[0], (0, E_pad - E),
                  constant_values=N_pad).astype(jnp.int32)
    dst = jnp.pad(edge_index[1], (0, E_pad - E),
                  constant_values=N_pad).astype(jnp.int32)
    src2d = src[:, None]                                  # [E_pad, 1]
    dst2d = dst[None, :]                                  # [1, E_pad]

    # Mean-pool matrix with zero columns for padded nodes.
    onehot_b = jax.nn.one_hot(batch, G, dtype=jnp.float32)        # [N, G]
    counts = jnp.maximum(jnp.sum(onehot_b, axis=0), 1.0)
    pool_mat = jnp.pad(onehot_b.T / counts[:, None], ((0, 0), (0, N_pad - N)))

    # Per-layer params stacked along a leading layer axis (indexed by the grid).
    w_s = jnp.stack([_pad_rows(_pad_cols(w, C), C)
                     for w in params["conv_w"]]).astype(jnp.bfloat16)   # [L,C,C]
    b_s = jnp.stack([_pad_cols(b, C) for b in params["conv_b"]])        # [L,1,C]
    pre_scale = [jnp.ones((1, C), jnp.float32)]      # layer 0: no pre-norm
    pre_shift = [jnp.zeros((1, C), jnp.float32)]
    for layer in range(1, num_layers):
        s, sh = bn_eval_scale_shift(*params["norm"][layer - 1])
        pre_scale.append(_pad_cols(s, C, value=1.0))
        pre_shift.append(_pad_cols(sh, C))
    scale_s = jnp.stack(pre_scale)                                       # [L,1,C]
    shift_s = jnp.stack(pre_shift)                                       # [L,1,C]

    fs, fsh = bn_eval_scale_shift(*params["norm"][num_layers - 1])
    fscale = _pad_cols(fs, C, value=1.0)
    fshift = _pad_cols(fsh, C)

    pred_w = jnp.pad(params["pred_w"],
                     ((0, C - hidden), (0, T_pad - num_tasks)))
    pred_b = jnp.pad(params["pred_b"], ((0, 0), (0, T_pad - num_tasks)))

    kernel = functools.partial(_deeper_gcn_kernel, t=float(t), n_real=N)

    out = pl.pallas_call(
        kernel,
        grid=(num_layers, E_pad // edge_tile),
        in_specs=[
            pl.BlockSpec((N_pad, C), lambda l, e: (0, 0)),           # h0 (resident)
            pl.BlockSpec((edge_tile, 1), lambda l, e: (e, 0)),       # src ids
            pl.BlockSpec((1, edge_tile), lambda l, e: (0, e)),       # dst ids
            pl.BlockSpec((edge_tile, C), lambda l, e: (e, 0)),       # edge emb tile
            pl.BlockSpec((1, C), lambda l, e: (0, 0)),               # emax
            pl.BlockSpec((1, 1, C), lambda l, e: (l, 0, 0)),         # prenorm scale
            pl.BlockSpec((1, 1, C), lambda l, e: (l, 0, 0)),         # prenorm shift
            pl.BlockSpec((1, C, C), lambda l, e: (l, 0, 0)),         # conv W (bf16)
            pl.BlockSpec((1, 1, C), lambda l, e: (l, 0, 0)),         # conv b
            pl.BlockSpec((1, C), lambda l, e: (0, 0)),               # final BN scale
            pl.BlockSpec((1, C), lambda l, e: (0, 0)),               # final BN shift
            pl.BlockSpec((G, N_pad), lambda l, e: (0, 0)),           # mean-pool matrix
            pl.BlockSpec((C, T_pad), lambda l, e: (0, 0)),           # pred W
            pl.BlockSpec((1, T_pad), lambda l, e: (0, 0)),           # pred b
        ],
        out_specs=pl.BlockSpec((G, T_pad), lambda l, e: (0, 0)),
        out_shape=jax.ShapeDtypeStruct((G, T_pad), jnp.float32),
        scratch_shapes=[
            pltpu.VMEM((N_pad, C), jnp.float32),        # h (persists across layers)
            pltpu.VMEM((N_pad, C), jnp.float32),        # x = relu(BN(h)), f32
            pltpu.VMEM((N_pad, C), jnp.bfloat16),       # x, bf16 (MXU operand)
            pltpu.VMEM((N_pad, 2 * C), jnp.float32),    # [denom | numer]
            pltpu.VMEM((1, C), jnp.float32),            # per-channel exp bound
        ],
        compiler_params=pltpu.CompilerParams(
            dimension_semantics=("arbitrary", "arbitrary"),   # layer chain, edge reduction
            vmem_limit_bytes=_vmem_limit_bytes()),
    )(h0, src2d, dst2d, edge_emb, emax, scale_s, shift_s, w_s, b_s,
      fscale, fshift, pool_mat, pred_w, pred_b)

    return out[:, :num_tasks]


# ---------------------------------------------------------------------------
# Deterministic parameter construction + example run
# ---------------------------------------------------------------------------
def make_params(key, hidden, num_tasks, num_layers, atom_dims, bond_dims):
    keys = jax.random.split(key, 64)
    k = iter(keys)
    params = {
        "atom_emb": [0.1 * jax.random.normal(next(k), (v, hidden), jnp.float32)
                     for v in atom_dims],
        "bond_emb": [0.1 * jax.random.normal(next(k), (v, hidden), jnp.float32)
                     for v in bond_dims],
        "conv_w": [0.1 * jax.random.normal(next(k), (hidden, hidden), jnp.float32)
                   for _ in range(num_layers)],
        "conv_b": [0.01 * jax.random.normal(next(k), (1, hidden), jnp.float32)
                   for _ in range(num_layers)],
        "norm": [(1.0 + 0.05 * jax.random.normal(next(k), (hidden,), jnp.float32),  # gamma
                  0.05 * jax.random.normal(next(k), (hidden,), jnp.float32),         # beta
                  0.05 * jax.random.normal(next(k), (hidden,), jnp.float32),         # running_mean
                  jax.random.uniform(next(k), (hidden,), jnp.float32, 0.5, 1.5))     # running_var
                 for _ in range(num_layers)],
        "pred_w": 0.1 * jax.random.normal(next(k), (hidden, num_tasks), jnp.float32),
        "pred_b": 0.01 * jax.random.normal(next(k), (1, num_tasks), jnp.float32),
    }
    return params


if __name__ == "__main__":
    NUM_LAYERS = 3
    HIDDEN = 32                 # model hidden size; padded to 128 lanes internally
    NUM_TASKS = 2
    NUM_GRAPHS = 2
    N_PER_GRAPH = 32
    E_PER_GRAPH = 96
    N = NUM_GRAPHS * N_PER_GRAPH          # 64 nodes (padded to 128)
    E = NUM_GRAPHS * E_PER_GRAPH          # 192 edges (padded to the edge tile)
    ATOM_DIMS = [16, 4, 8]                # synthetic per-feature vocab sizes
    BOND_DIMS = [4, 3]

    root = jax.random.PRNGKey(0)
    kp, kx, ke, ks, kd = jax.random.split(root, 5)

    params = make_params(kp, HIDDEN, NUM_TASKS, NUM_LAYERS, ATOM_DIMS, BOND_DIMS)

    # Node categorical features [N, num_atom_features]
    x = jnp.stack([jax.random.randint(jax.random.fold_in(kx, f), (N,), 0, v)
                   for f, v in enumerate(ATOM_DIMS)], axis=1).astype(jnp.int32)
    # Edge categorical features [E, num_bond_features]
    edge_attr = jnp.stack([jax.random.randint(jax.random.fold_in(ke, f), (E,), 0, v)
                           for f, v in enumerate(BOND_DIMS)], axis=1).astype(jnp.int32)

    # Edges confined to their own graph; edge_index[0]=src(j), edge_index[1]=dst(i)
    srcs, dsts = [], []
    for g in range(NUM_GRAPHS):
        lo = g * N_PER_GRAPH
        srcs.append(lo + jax.random.randint(jax.random.fold_in(ks, g),
                                            (E_PER_GRAPH,), 0, N_PER_GRAPH))
        dsts.append(lo + jax.random.randint(jax.random.fold_in(kd, g),
                                            (E_PER_GRAPH,), 0, N_PER_GRAPH))
    edge_index = jnp.stack([jnp.concatenate(srcs), jnp.concatenate(dsts)]).astype(jnp.int32)

    batch = jnp.repeat(jnp.arange(NUM_GRAPHS, dtype=jnp.int32), N_PER_GRAPH)

    out = deeper_gcn_forward(params, x, edge_index, edge_attr, batch,
                             num_layers=NUM_LAYERS, num_graphs=NUM_GRAPHS, t=1.0)
    out = jax.block_until_ready(out)
    assert out.shape == (NUM_GRAPHS, NUM_TASKS)
    assert bool(jnp.all(jnp.isfinite(out)))
    print("KERNEL_OK")
</pallas_src>

<mosaic_0001>
module attributes {stable_mosaic.version = 11 : i64} {
  func.func @_deeper_gcn_kernel(%arg0: i32, %arg1: i32, %arg2: memref<128x128xf32, #tpu.memory_space<vmem>>, %arg3: memref<256x1xi32, #tpu.memory_space<vmem>>, %arg4: memref<1x256xi32, #tpu.memory_space<vmem>>, %arg5: memref<256x128xf32, #tpu.memory_space<vmem>>, %arg6: memref<1x128xf32, #tpu.memory_space<vmem>>, %arg7: memref<1x1x128xf32, #tpu.memory_space<vmem>>, %arg8: memref<1x1x128xf32, #tpu.memory_space<vmem>>, %arg9: memref<1x128x128xbf16, #tpu.memory_space<vmem>>, %arg10: memref<1x1x128xf32, #tpu.memory_space<vmem>>, %arg11: memref<1x128xf32, #tpu.memory_space<vmem>>, %arg12: memref<1x128xf32, #tpu.memory_space<vmem>>, %arg13: memref<2x128xf32, #tpu.memory_space<vmem>>, %arg14: memref<128x128xf32, #tpu.memory_space<vmem>>, %arg15: memref<1x128xf32, #tpu.memory_space<vmem>>, %arg16: memref<2x128xf32, #tpu.memory_space<vmem>>, %arg17: memref<128x128xf32, #tpu.memory_space<vmem>>, %arg18: memref<128x128xf32, #tpu.memory_space<vmem>>, %arg19: memref<128x128xbf16, #tpu.memory_space<vmem>>, %arg20: memref<128x256xf32, #tpu.memory_space<vmem>>, %arg21: memref<1x128xf32, #tpu.memory_space<vmem>>) attributes {dimension_semantics = [#tpu.dimension_semantics<arbitrary>, #tpu.dimension_semantics<arbitrary>], iteration_bounds = array<i64: 3, 1>, scalar_prefetch = 0 : i64, scratch_operands = 5 : i64, tpu.core_type = #tpu.core_type<tc>, window_params = [{pipeline_mode = #tpu.pipeline_mode<synchronous>, transform_indices = @transform_0, window_bounds = array<i64: 128, 128>}, {transform_indices = @transform_1, window_bounds = array<i64: 256, 1>}, {transform_indices = @transform_2, window_bounds = array<i64: 1, 256>}, {transform_indices = @transform_3, window_bounds = array<i64: 256, 128>}, {pipeline_mode = #tpu.pipeline_mode<synchronous>, transform_indices = @transform_4, window_bounds = array<i64: 1, 128>}, {transform_indices = @transform_5, window_bounds = array<i64: 1, 1, 128>}, {transform_indices = @transform_6, window_bounds = array<i64: 1, 1, 128>}, {transform_indices = @transform_7, window_bounds = array<i64: 1, 128, 128>}, {transform_indices = @transform_8, window_bounds = array<i64: 1, 1, 128>}, {pipeline_mode = #tpu.pipeline_mode<synchronous>, transform_indices = @transform_9, window_bounds = array<i64: 1, 128>}, {pipeline_mode = #tpu.pipeline_mode<synchronous>, transform_indices = @transform_10, window_bounds = array<i64: 1, 128>}, {pipeline_mode = #tpu.pipeline_mode<synchronous>, transform_indices = @transform_11, window_bounds = array<i64: 2, 128>}, {pipeline_mode = #tpu.pipeline_mode<synchronous>, transform_indices = @transform_12, window_bounds = array<i64: 128, 128>}, {pipeline_mode = #tpu.pipeline_mode<synchronous>, transform_indices = @transform_13, window_bounds = array<i64: 1, 128>}, {pipeline_mode = #tpu.pipeline_mode<synchronous>, transform_indices = @transform_14, window_bounds = array<i64: 2, 128>}]} {
    %c0_i32 = arith.constant 0 : i32
    %0 = arith.cmpi eq, %arg0, %c0_i32 : i32
    %c0_i32_0 = arith.constant 0 : i32
    %1 = arith.cmpi eq, %arg1, %c0_i32_0 : i32
    %2 = arith.andi %0, %1 : i1
    %3 = arith.extui %2 : i1 to i32
    %c0_i32_1 = arith.constant 0 : i32
    %4 = arith.cmpi ne, %3, %c0_i32_1 : i32
    scf.if %4 {
      %c0_29 = arith.constant 0 : index
      %c0_30 = arith.constant 0 : index
      %53 = vector.load %arg2[%c0_29, %c0_30] : memref<128x128xf32, #tpu.memory_space<vmem>>, vector<128x128xf32>
      %c0_31 = arith.constant 0 : index
      %c0_32 = arith.constant 0 : index
      %54 = vector.load %arg17[%c0_31, %c0_32] : memref<128x128xf32, #tpu.memory_space<vmem>>, vector<128x128xf32>
      tpu.vector_store %arg17[%c0_31, %c0_32], %53 {strides = array<i32>} : memref<128x128xf32, #tpu.memory_space<vmem>>, vector<128x128xf32>,
    } else {
    }
    %c0_i32_2 = arith.constant 0 : i32
    %5 = arith.cmpi eq, %arg1, %c0_i32_2 : i32
    %6 = arith.extui %5 : i1 to i32
    %c0_i32_3 = arith.constant 0 : i32
    %7 = arith.cmpi ne, %6, %c0_i32_3 : i32
    scf.if %7 {
      %c0_29 = arith.constant 0 : index
      %c0_30 = arith.constant 0 : index
      %53 = vector.load %arg17[%c0_29, %c0_30] : memref<128x128xf32, #tpu.memory_space<vmem>>, vector<128x128xf32>
      %c0_31 = arith.constant 0 : index
      %c0_32 = arith.constant 0 : index
      %c0_33 = arith.constant 0 : index
      %54 = vector.load %arg7[%c0_31, %c0_32, %c0_33] : memref<1x1x128xf32, #tpu.memory_space<vmem>>, vector<1x1x128xf32>
      %55 = vector.shape_cast %54 : vector<1x1x128xf32> to vector<1x128xf32>
      %56 = vector.broadcast %55 : vector<1x128xf32> to vector<128x128xf32>
      %57 = arith.mulf %53, %56 : vector<128x128xf32>
      %c0_34 = arith.constant 0 : index
      %c0_35 = arith.constant 0 : index
      %c0_36 = arith.constant 0 : index
      %58 = vector.load %arg8[%c0_34, %c0_35, %c0_36] : memref<1x1x128xf32, #tpu.memory_space<vmem>>, vector<1x1x128xf32>
      %59 = vector.shape_cast %58 : vector<1x1x128xf32> to vector<1x128xf32>
      %60 = vector.broadcast %59 : vector<1x128xf32> to vector<128x128xf32>
      %61 = arith.addf %57, %60 : vector<128x128xf32>
      %cst_37 = arith.constant 0.000000e+00 : f32
      %62 = vector.broadcast %cst_37 : f32 to vector<128x128xf32>
      %63 = arith.maximumf %61, %62 : vector<128x128xf32>
      %c0_i32_38 = arith.constant 0 : i32
      %64 = arith.cmpi eq, %arg0, %c0_i32_38 : i32
      %cst_39 = arith.constant 1.000000e+00 : f32
      %cst_40 = arith.constant 0.000000e+00 : f32
      %65 = arith.select %64, %cst_39, %cst_40 : f32
      %66 = vector.broadcast %65 : f32 to vector<128x128xf32>
      %67 = arith.mulf %66, %53 : vector<128x128xf32>
      %cst_41 = arith.constant 1.000000e+00 : f32
      %68 = arith.subf %cst_41, %65 : f32
      %69 = vector.broadcast %68 : f32 to vector<128x128xf32>
      %70 = arith.mulf %69, %63 : vector<128x128xf32>
      %71 = arith.addf %67, %70 : vector<128x128xf32>
      %c0_42 = arith.constant 0 : index
      %c0_43 = arith.constant 0 : index
      %72 = vector.load %arg18[%c0_42, %c0_43] : memref<128x128xf32, #tpu.memory_space<vmem>>, vector<128x128xf32>
      tpu.vector_store %arg18[%c0_42, %c0_43], %71 {strides = array<i32>} : memref<128x128xf32, #tpu.memory_space<vmem>>, vector<128x128xf32>,
      %73 = arith.truncf %71 : vector<128x128xf32> to vector<128x128xbf16>
      %c0_44 = arith.constant 0 : index
      %c0_45 = arith.constant 0 : index
      %74 = vector.load %arg19[%c0_44, %c0_45] : memref<128x128xbf16, #tpu.memory_space<vmem>>, vector<128x128xbf16>
      tpu.vector_store %arg19[%c0_44, %c0_45], %73 {strides = array<i32>} : memref<128x128xbf16, #tpu.memory_space<vmem>>, vector<128x128xbf16>,
      %cst_46 = arith.constant dense<0xFF800000> : vector<128xf32>
      %75 = vector.multi_reduction <maximumf>, %71, %cst_46 [0] : vector<128x128xf32> to vector<128xf32>
      %76 = vector.shape_cast %75 : vector<128xf32> to vector<1x128xf32>
      %c0_47 = arith.constant 0 : index
      %c0_48 = arith.constant 0 : index
      %77 = vector.load %arg6[%c0_47, %c0_48] : memref<1x128xf32, #tpu.memory_space<vmem>>, vector<1x128xf32>
      %78 = arith.addf %76, %77 : vector<1x128xf32>
      %cst_49 = arith.constant 0.000000e+00 : f32
      %79 = vector.broadcast %cst_49 : f32 to vector<1x128xf32>
      %80 = arith.maximumf %78, %79 : vector<1x128xf32>
      %cst_50 = arith.constant 1.000000e-07 : f32
      %81 = vector.broadcast %cst_50 : f32 to vector<1x128xf32>
      %82 = arith.addf %80, %81 : vector<1x128xf32>
      %cst_51 = arith.constant 1.000000e+00 : f32
      %83 = vector.broadcast %cst_51 : f32 to vector<1x128xf32>
      %84 = arith.mulf %83, %82 : vector<1x128xf32>
      %c0_52 = arith.constant 0 : index
      %c0_53 = arith.constant 0 : index
      %85 = vector.load %arg21[%c0_52, %c0_53] : memref<1x128xf32, #tpu.memory_space<vmem>>, vector<1x128xf32>
      tpu.vector_store %arg21[%c0_52, %c0_53], %84 {strides = array<i32>} : memref<1x128xf32, #tpu.memory_space<vmem>>, vector<1x128xf32>,
      %cst_54 = arith.constant 0.000000e+00 : f32
      %86 = vector.broadcast %cst_54 : f32 to vector<128x256xf32>
      %c0_55 = arith.constant 0 : index
      %c0_56 = arith.constant 0 : index
      %87 = vector.load %arg20[%c0_55, %c0_56] : memref<128x256xf32, #tpu.memory_space<vmem>>, vector<128x256xf32>
      tpu.vector_store %arg20[%c0_55, %c0_56], %86 {strides = array<i32>} : memref<128x256xf32, #tpu.memory_space<vmem>>, vector<128x256xf32>,
    } else {
    }
    %c0 = arith.constant 0 : index
    %c0_4 = arith.constant 0 : index
    %8 = vector.load %arg3[%c0, %c0_4] : memref<256x1xi32, #tpu.memory_space<vmem>>, vector<256x1xi32>
    %c0_5 = arith.constant 0 : index
    %c0_6 = arith.constant 0 : index
    %9 = vector.load %arg4[%c0_5, %c0_6] : memref<1x256xi32, #tpu.memory_space<vmem>>, vector<1x256xi32>
    %10 = tpu.iota {dimensions = array<i32: 1>} : vector<256x128xi32>
    %11 = vector.broadcast %8 : vector<256x1xi32> to vector<256x128xi32>
    %12 = arith.cmpi eq, %11, %10 : vector<256x128xi32>
    %cst = arith.constant 1.000000e+00 : f32
    %cst_7 = arith.constant 0.000000e+00 : f32
    %13 = vector.broadcast %cst : f32 to vector<256x128xf32>
    %14 = vector.broadcast %cst_7 : f32 to vector<256x128xf32>
    %15 = arith.select %12, %13, %14 : vector<256x128xi1>, vector<256x128xf32>
    %16 = arith.truncf %15 : vector<256x128xf32> to vector<256x128xbf16>
    %c0_8 = arith.constant 0 : index
    %c0_9 = arith.constant 0 : index
    %17 = vector.load %arg19[%c0_8, %c0_9] : memref<128x128xbf16, #tpu.memory_space<vmem>>, vector<128x128xbf16>
    %cst_10 = arith.constant dense<0.000000e+00> : vector<256x128xf32>
    %18 = tpu.matmul %16, %17, %cst_10 {dimension_numbers = #tpu.dot_dimension_numbers<[1], [0], [0], [1], [0, 0, 1, 1], [], []>} : vector<256x128xbf16>, vector<128x128xbf16>, vector<256x128xf32> -> vector<256x128xf32>
    %c0_11 = arith.constant 0 : index
    %c0_12 = arith.constant 0 : index
    %19 = vector.load %arg5[%c0_11, %c0_12] : memref<256x128xf32, #tpu.memory_space<vmem>>, vector<256x128xf32>
    %20 = arith.addf %18, %19 : vector<256x128xf32>
    %cst_13 = arith.constant 0.000000e+00 : f32
    %21 = vector.broadcast %cst_13 : f32 to vector<256x128xf32>
    %22 = arith.maximumf %20, %21 : vector<256x128xf32>
    %cst_14 = arith.constant 1.000000e-07 : f32
    %23 = vector.broadcast %cst_14 : f32 to vector<256x128xf32>
    %24 = arith.addf %22, %23 : vector<256x128xf32>
    %cst_15 = arith.constant 1.000000e+00 : f32
    %25 = vector.broadcast %cst_15 : f32 to vector<256x128xf32>
    %26 = arith.mulf %25, %24 : vector<256x128xf32>
    %c0_16 = arith.constant 0 : index
    %c0_17 = arith.constant 0 : index
    %27 = vector.load %arg21[%c0_16, %c0_17] : memref<1x128xf32, #tpu.memory_space<vmem>>, vector<1x128xf32>
    %28 = vector.broadcast %27 : vector<1x128xf32> to vector<256x128xf32>
    %29 = arith.subf %26, %28 : vector<256x128xf32>
    %30 = math.exp %29 : vector<256x128xf32>
    %31 = arith.mulf %24, %30 : vector<256x128xf32>
    %32 = tpu.concatenate %30, %31 in 1 : vector<256x128xf32>, vector<256x128xf32> -> vector<256x256xf32>
    %33 = arith.truncf %32 : vector<256x256xf32> to vector<256x256xbf16>
    %34 = tpu.iota {dimensions = array<i32: 0>} : vector<128x256xi32>
    %35 = vector.broadcast %9 : vector<1x256xi32> to vector<128x256xi32>
    %36 = arith.cmpi eq, %34, %35 : vector<128x256xi32>
    %cst_18 = arith.constant 1.000000e+00 : f32
    %cst_19 = arith.constant 0.000000e+00 : f32
    %37 = vector.broadcast %cst_18 : f32 to vector<128x256xf32>
    %38 = vector.broadcast %cst_19 : f32 to vector<128x256xf32>
    %39 = arith.select %36, %37, %38 : vector<128x256xi1>, vector<128x256xf32>
    %40 = arith.truncf %39 : vector<128x256xf32> to vector<128x256xbf16>
    %c0_20 = arith.constant 0 : index
    %c0_21 = arith.constant 0 : index
    %41 = vector.load %arg20[%c0_20, %c0_21] : memref<128x256xf32, #tpu.memory_space<vmem>>, vector<128x256xf32>
    %cst_22 = arith.constant dense<0.000000e+00> : vector<128x256xf32>
    %42 = tpu.matmul %40, %33, %cst_22 {dimension_numbers = #tpu.dot_dimension_numbers<[1], [0], [0], [1], [0, 0, 1, 1], [], []>} : vector<128x256xbf16>, vector<256x256xbf16>, vector<128x256xf32> -> vector<128x256xf32>
    %43 = arith.addf %41, %42 : vector<128x256xf32>
    %c0_23 = arith.constant 0 : index
    %c0_24 = arith.constant 0 : index
    %44 = vector.load %arg20[%c0_23, %c0_24] : memref<128x256xf32, #tpu.memory_space<vmem>>, vector<128x256xf32>
    tpu.vector_store %arg20[%c0_23, %c0_24], %43 {strides = array<i32>} : memref<128x256xf32, #tpu.memory_space<vmem>>, vector<128x256xf32>,
    %c0_i32_25 = arith.constant 0 : i32
    %45 = arith.cmpi eq, %arg1, %c0_i32_25 : i32
    %46 = arith.extui %45 : i1 to i32
    %c0_i32_26 = arith.constant 0 : i32
    %47 = arith.cmpi ne, %46, %c0_i32_26 : i32
    scf.if %47 {
      %c0_29 = arith.constant 0 : index
      %c0_30 = arith.constant 0 : index
      %53 = vector.load %arg20[%c0_29, %c0_30] : memref<128x256xf32, #tpu.memory_space<vmem>>, vector<128x256xf32>
      %54 = vector.extract_strided_slice %53 {offsets = [0, 0], sizes = [128, 128], strides = [1, 1]} : vector<128x256xf32> to vector<128x128xf32>
      %55 = vector.extract_strided_slice %53 {offsets = [0, 128], sizes = [128, 128], strides = [1, 1]} : vector<128x256xf32> to vector<128x128xf32>
      %cst_31 = arith.constant 9.99999968E-21 : f32
      %56 = vector.broadcast %cst_31 : f32 to vector<128x128xf32>
      %57 = arith.maximumf %54, %56 : vector<128x128xf32>
      %58 = tpu.reciprocal %57 {approx = true} : vector<128x128xf32> -> vector<128x128xf32>
      %59 = arith.mulf %55, %58 : vector<128x128xf32>
      %c0_32 = arith.constant 0 : index
      %c0_33 = arith.constant 0 : index
      %60 = vector.load %arg18[%c0_32, %c0_33] : memref<128x128xf32, #tpu.memory_space<vmem>>, vector<128x128xf32>
      %61 = arith.addf %60, %59 : vector<128x128xf32>
      %62 = arith.truncf %61 : vector<128x128xf32> to vector<128x128xbf16>
      %c0_34 = arith.constant 0 : index
      %c0_35 = arith.constant 0 : index
      %c0_36 = arith.constant 0 : index
      %63 = vector.load %arg9[%c0_34, %c0_35, %c0_36] : memref<1x128x128xbf16, #tpu.memory_space<vmem>>, vector<1x128x128xbf16>
      %64 = vector.shape_cast %63 : vector<1x128x128xbf16> to vector<128x128xbf16>
      %cst_37 = arith.constant dense<0.000000e+00> : vector<128x128xf32>
      %65 = tpu.matmul %62, %64, %cst_37 {dimension_numbers = #tpu.dot_dimension_numbers<[1], [0], [0], [1], [0, 0, 1, 1], [], []>} : vector<128x128xbf16>, vector<128x128xbf16>, vector<128x128xf32> -> vector<128x128xf32>
      %c0_38 = arith.constant 0 : index
      %c0_39 = arith.constant 0 : index
      %c0_40 = arith.constant 0 : index
      %66 = vector.load %arg10[%c0_38, %c0_39, %c0_40] : memref<1x1x128xf32, #tpu.memory_space<vmem>>, vector<1x1x128xf32>
      %67 = vector.shape_cast %66 : vector<1x1x128xf32> to vector<1x128xf32>
      %68 = vector.broadcast %67 : vector<1x128xf32> to vector<128x128xf32>
      %69 = arith.addf %65, %68 : vector<128x128xf32>
      %c0_i32_41 = arith.constant 0 : i32
      %70 = arith.cmpi sgt, %arg0, %c0_i32_41 : i32
      %cst_42 = arith.constant 1.000000e+00 : f32
      %cst_43 = arith.constant 0.000000e+00 : f32
      %71 = arith.select %70, %cst_42, %cst_43 : f32
      %72 = tpu.iota {dimensions = array<i32: 0>} : vector<128x1xi32>
      %c64_i32 = arith.constant 64 : i32
      %73 = vector.broadcast %c64_i32 : i32 to vector<128x1xi32>
      %74 = arith.cmpi slt, %72, %73 : vector<128x1xi32>
      %cst_44 = arith.constant 1.000000e+00 : f32
      %cst_45 = arith.constant 0.000000e+00 : f32
      %75 = vector.broadcast %cst_44 : f32 to vector<128x1xf32>
      %76 = vector.broadcast %cst_45 : f32 to vector<128x1xf32>
      %77 = arith.select %74, %75, %76 : vector<128x1xi1>, vector<128x1xf32>
      %c0_46 = arith.constant 0 : index
      %c0_47 = arith.constant 0 : index
      %78 = vector.load %arg17[%c0_46, %c0_47] : memref<128x128xf32, #tpu.memory_space<vmem>>, vector<128x128xf32>
      %79 = vector.broadcast %71 : f32 to vector<128x128xf32>
      %80 = arith.mulf %79, %78 : vector<128x128xf32>
      %81 = arith.addf %69, %80 : vector<128x128xf32>
      %82 = vector.broadcast %77 : vector<128x1xf32> to vector<128x128xf32>
      %83 = arith.mulf %81, %82 : vector<128x128xf32>
      %c0_48 = arith.constant 0 : index
      %c0_49 = arith.constant 0 : index
      %84 = vector.load %arg17[%c0_48, %c0_49] : memref<128x128xf32, #tpu.memory_space<vmem>>, vector<128x128xf32>
      tpu.vector_store %arg17[%c0_48, %c0_49], %83 {strides = array<i32>} : memref<128x128xf32, #tpu.memory_space<vmem>>, vector<128x128xf32>,
    } else {
    }
    %c2_i32 = arith.constant 2 : i32
    %48 = arith.cmpi eq, %arg0, %c2_i32 : i32
    %c0_i32_27 = arith.constant 0 : i32
    %49 = arith.cmpi eq, %arg1, %c0_i32_27 : i32
    %50 = arith.andi %48, %49 : i1
    %51 = arith.extui %50 : i1 to i32
    %c0_i32_28 = arith.constant 0 : i32
    %52 = arith.cmpi ne, %51, %c0_i32_28 : i32
    scf.if %52 {
      %c0_29 = arith.constant 0 : index
      %c0_30 = arith.constant 0 : index
      %53 = vector.load %arg17[%c0_29, %c0_30] : memref<128x128xf32, #tpu.memory_space<vmem>>, vector<128x128xf32>
      %c0_31 = arith.constant 0 : index
      %c0_32 = arith.constant 0 : index
      %54 = vector.load %arg11[%c0_31, %c0_32] : memref<1x128xf32, #tpu.memory_space<vmem>>, vector<1x128xf32>
      %55 = vector.broadcast %54 : vector<1x128xf32> to vector<128x128xf32>
      %56 = arith.mulf %53, %55 : vector<128x128xf32>
      %c0_33 = arith.constant 0 : index
      %c0_34 = arith.constant 0 : index
      %57 = vector.load %arg12[%c0_33, %c0_34] : memref<1x128xf32, #tpu.memory_space<vmem>>, vector<1x128xf32>
      %58 = vector.broadcast %57 : vector<1x128xf32> to vector<128x128xf32>
      %59 = arith.addf %56, %58 : vector<128x128xf32>
      %c0_35 = arith.constant 0 : index
      %c0_36 = arith.constant 0 : index
      %60 = vector.load %arg13[%c0_35, %c0_36] : memref<2x128xf32, #tpu.memory_space<vmem>>, vector<2x128xf32>
      %cst_37 = arith.constant dense<0.000000e+00> : vector<2x128xf32>
      %61 = tpu.matmul %60, %59, %cst_37 {dimension_numbers = #tpu.dot_dimension_numbers<[1], [0], [0], [1], [0, 0, 1, 1], [], []>} : vector<2x128xf32>, vector<128x128xf32>, vector<2x128xf32> -> vector<2x128xf32>
      %c0_38 = arith.constant 0 : index
      %c0_39 = arith.constant 0 : index
      %62 = vector.load %arg14[%c0_38, %c0_39] : memref<128x128xf32, #tpu.memory_space<vmem>>, vector<128x128xf32>
      %cst_40 = arith.constant dense<0.000000e+00> : vector<2x128xf32>
      %63 = tpu.matmul %61, %62, %cst_40 {dimension_numbers = #tpu.dot_dimension_numbers<[1], [0], [0], [1], [0, 0, 1, 1], [], []>} : vector<2x128xf32>, vector<128x128xf32>, vector<2x128xf32> -> vector<2x128xf32>
      %c0_41 = arith.constant 0 : index
      %c0_42 = arith.constant 0 : index
      %64 = vector.load %arg15[%c0_41, %c0_42] : memref<1x128xf32, #tpu.memory_space<vmem>>, vector<1x128xf32>
      %65 = vector.broadcast %64 : vector<1x128xf32> to vector<2x128xf32>
      %66 = arith.addf %63, %65 : vector<2x128xf32>
      %c0_43 = arith.constant 0 : index
      %c0_44 = arith.constant 0 : index
      %67 = vector.load %arg16[%c0_43, %c0_44] : memref<2x128xf32, #tpu.memory_space<vmem>>, vector<2x128xf32>
      tpu.vector_store %arg16[%c0_43, %c0_44], %66 {strides = array<i32>} : memref<2x128xf32, #tpu.memory_space<vmem>>, vector<2x128xf32>,
    } else {
    }
    return
  }
  func.func @transform_0(%arg0: i32, %arg1: i32) -> (i32, i32) {
    %c0_i32 = arith.constant 0 : i32
    %c0_i32_0 = arith.constant 0 : i32
    %c0_i32_1 = arith.constant 0 : i32
    return %c0_i32, %c0_i32_0 : i32, i32
  }
  func.func @transform_1(%arg0: i32, %arg1: i32) -> (i32, i32) {
    %c0_i32 = arith.constant 0 : i32
    %c0_i32_0 = arith.constant 0 : i32
    return %arg1, %c0_i32 : i32, i32
  }
  func.func @transform_2(%arg0: i32, %arg1: i32) -> (i32, i32) {
    %c0_i32 = arith.constant 0 : i32
    %c0_i32_0 = arith.constant 0 : i32
    return %c0_i32, %arg1 : i32, i32
  }
  func.func @transform_3(%arg0: i32, %arg1: i32) -> (i32, i32) {
    %c0_i32 = arith.constant 0 : i32
    %c0_i32_0 = arith.constant 0 : i32
    return %arg1, %c0_i32 : i32, i32
  }
  func.func @transform_4(%arg0: i32, %arg1: i32) -> (i32, i32) {
    %c0_i32 = arith.constant 0 : i32
    %c0_i32_0 = arith.constant 0 : i32
    %c0_i32_1 = arith.constant 0 : i32
    return %c0_i32, %c0_i32_0 : i32, i32
  }
  func.func @transform_5(%arg0: i32, %arg1: i32) -> (i32, i32, i32) {
    %c0_i32 = arith.constant 0 : i32
    %c0_i32_0 = arith.constant 0 : i32
    %c0_i32_1 = arith.constant 0 : i32
    return %arg0, %c0_i32, %c0_i32_0 : i32, i32, i32
  }
  func.func @transform_6(%arg0: i32, %arg1: i32) -> (i32, i32, i32) {
    %c0_i32 = arith.constant 0 : i32
    %c0_i32_0 = arith.constant 0 : i32
    %c0_i32_1 = arith.constant 0 : i32
    return %arg0, %c0_i32, %c0_i32_0 : i32, i32, i32
  }
  func.func @transform_7(%arg0: i32, %arg1: i32) -> (i32, i32, i32) {
    %c0_i32 = arith.constant 0 : i32
    %c0_i32_0 = arith.constant 0 : i32
    %c0_i32_1 = arith.constant 0 : i32
    return %arg0, %c0_i32, %c0_i32_0 : i32, i32, i32
  }
  func.func @transform_8(%arg0: i32, %arg1: i32) -> (i32, i32, i32) {
    %c0_i32 = arith.constant 0 : i32
    %c0_i32_0 = arith.constant 0 : i32
    %c0_i32_1 = arith.constant 0 : i32
    return %arg0, %c0_i32, %c0_i32_0 : i32, i32, i32
  }
  func.func @transform_9(%arg0: i32, %arg1: i32) -> (i32, i32) {
    %c0_i32 = arith.constant 0 : i32
    %c0_i32_0 = arith.constant 0 : i32
    %c0_i32_1 = arith.constant 0 : i32
    return %c0_i32, %c0_i32_0 : i32, i32
  }
  func.func @transform_10(%arg0: i32, %arg1: i32) -> (i32, i32) {
    %c0_i32 = arith.constant 0 : i32
    %c0_i32_0 = arith.constant 0 : i32
    %c0_i32_1 = arith.constant 0 : i32
    return %c0_i32, %c0_i32_0 : i32, i32
  }
  func.func @transform_11(%arg0: i32, %arg1: i32) -> (i32, i32) {
    %c0_i32 = arith.constant 0 : i32
    %c0_i32_0 = arith.constant 0 : i32
    %c0_i32_1 = arith.constant 0 : i32
    return %c0_i32, %c0_i32_0 : i32, i32
  }
  func.func @transform_12(%arg0: i32, %arg1: i32) -> (i32, i32) {
    %c0_i32 = arith.constant 0 : i32
    %c0_i32_0 = arith.constant 0 : i32
    %c0_i32_1 = arith.constant 0 : i32
    return %c0_i32, %c0_i32_0 : i32, i32
  }
  func.func @transform_13(%arg0: i32, %arg1: i32) -> (i32, i32) {
    %c0_i32 = arith.constant 0 : i32
    %c0_i32_0 = arith.constant 0 : i32
    %c0_i32_1 = arith.constant 0 : i32
    return %c0_i32, %c0_i32_0 : i32, i32
  }
  func.func @transform_14(%arg0: i32, %arg1: i32) -> (i32, i32) {
    %c0_i32 = arith.constant 0 : i32
    %c0_i32_0 = arith.constant 0 : i32
    %c0_i32_1 = arith.constant 0 : i32
    return %c0_i32, %c0_i32_0 : i32, i32
  }
}

</mosaic_0001>

<llo_original>
// kernel: tpu_custom_call.1
$region0: #{tpu_custom_call.1}
  #allocation0 [shape = 'u32[]', space=smem, size = 0x4, offset = 0x4, fixed_abs, tag = 'smem constant byte address 0x4 - core index']
  #allocation1 [shape = 'u32[144,128]{1,0:T(1,128)}', space=vmem, size = 0x12000, scoped, tag = 'internal scratch']
  #allocation2 [shape = 'f32[128,128]{1,0:T(8,128)}', space=vmem, size = 0x10000, scoped, tag = 'scratch operand']
  #allocation3 [shape = 'f32[128,128]{1,0:T(8,128)}', space=vmem, size = 0x10000, scoped, tag = 'scratch operand']
  #allocation4 [shape = 'bf16[128,128]{1,0:T(16,128)(2,1)}', space=vmem, size = 0x8000, scoped, tag = 'scratch operand']
  #allocation5 [shape = 'f32[128,256]{1,0:T(8,128)}', space=vmem, size = 0x20000, scoped, tag = 'scratch operand']
  #allocation6 [shape = 'f32[1,128]{1,0:T(1,128)}', space=vmem, size = 0x200, scoped, tag = 'scratch operand']
  %s0 = inlined_call_operand.hbm [shape: f32[128,128], index: 0, kind: input, shape index: {}]
  %s1 = inlined_call_operand.vmem [shape: s32[256,1], index: 1, kind: input, shape index: {}]
  %s2 = inlined_call_operand.vmem [shape: s32[1,256], index: 2, kind: input, shape index: {}]
  %s3 = inlined_call_operand.vmem [shape: f32[256,128], index: 3, kind: input, shape index: {}]
  %s4 = inlined_call_operand.vmem [shape: f32[1,128], index: 4, kind: input, shape index: {}]
  %s5 = inlined_call_operand.vmem [shape: f32[3,1,128], index: 5, kind: input, shape index: {}]
  %s6 = inlined_call_operand.vmem [shape: f32[3,1,128], index: 6, kind: input, shape index: {}]
  %s7 = inlined_call_operand.hbm [shape: bf16[3,128,128], index: 7, kind: input, shape index: {}]
  %s8 = inlined_call_operand.vmem [shape: f32[3,1,128], index: 8, kind: input, shape index: {}]
  %s9 = inlined_call_operand.vmem [shape: f32[1,128], index: 9, kind: input, shape index: {}]
  %s10 = inlined_call_operand.vmem [shape: f32[1,128], index: 10, kind: input, shape index: {}]
  %s11 = inlined_call_operand.vmem [shape: f32[2,128], index: 11, kind: input, shape index: {}]
  %s12 = inlined_call_operand.hbm [shape: f32[128,128], index: 12, kind: input, shape index: {}]
  %s13 = inlined_call_operand.vmem [shape: f32[1,128], index: 13, kind: input, shape index: {}]
  %s14 = inlined_call_operand.hbm [shape: f32[2,128], index: 14, kind: output, shape index: {}]
  %s15 = sld [smem:[#allocation0]]
  $region117: #{tpu_custom_call.1} parent=0
    _
  %s17 = ssub.s32 1, %s15
  %s18 = scalar_select 0, %s17, %s15
  $region1: #{tpu_custom_call.1} parent=0
    #allocation7 [shape = 'u8[65536]{0}', space=vmem, size = 0x10000, scoped, tag = 'input window, operand 0, single buffered']
    #allocation8 [shape = 's32[2]{0}', space=sflag, size = 0x8, scoped, tag = 'scoped memory for tpu_custom_call.1']
    #allocation9 [shape = 's32[2]{0}', space=sflag, size = 0x8, scoped, tag = 'scoped memory for tpu_custom_call.1']
    #allocation10 [shape = 'u8[65536]{0}', space=vmem, size = 0x10000, scoped, tag = 'input window, operand 7']
    #allocation11 [shape = 's32[2]{0}', space=sflag, size = 0x8, scoped, tag = 'scoped memory for tpu_custom_call.1']
    #allocation12 [shape = 'u8[65536]{0}', space=vmem, size = 0x10000, scoped, tag = 'input window, operand 12, single buffered']
    #allocation13 [shape = 'u8[1024]{0}', space=vmem, size = 0x400, scoped, tag = 'output window, operand 0, single buffered']
    %19 = vsyncpa [#allocation8], 0
    %20 = vsyncpa [#allocation11], 0
    %s21 = scalar_lea.sflag [#allocation11], 1
    %22 = vsyncpa %s21, 0
    %23 = vsyncpa [#allocation9], 0
    loop: start=0, step=1, limit=5
    $region2: #{tpu_custom_call.1} parent=1 // loop_pre_header
      _
    $region3: #{tpu_custom_call.1} parent=1 // loop_header
      %s25 = sphi 0, %s29
      %p26 = scmp.ge.s32.totalorder %s25, 5
      %s32 = sphi 0, %s44
      %s33 = sphi 0, %s40
      %s34 = sphi 0, %s32
      %s35 = sphi 0, %s33
      %s36 = sphi 0, %s34
      %s37 = sphi 0, %s35
      %s45 = sphi 0, %s45
      %s47 = sphi 0, %s45
      %s48 = sphi 0, %s47
      %s62 = sphi 0, %s48
      %s68 = sphi 0, %s70
      %s71 = sphi 0, %s68
      %s72 = sphi 0, %s71
      %s88 = sphi 0, %s72
      %s94 = sphi 0, %s96
      %s97 = sphi 0, %s94
      %s98 = sphi 0, %s97
      %s114 = sphi 0, %s98
      %s120 = sphi 0, %s122
      %s123 = sphi 0, %s120
      %s124 = sphi 0, %s123
      %s140 = sphi 0, %s124
      %s144 = sphi 0, %s144
      %s146 = sphi 0, %s144
      %s147 = sphi 0, %s146
      %s161 = sphi 0, %s147
      %s167 = sphi 0, %s169
      %s170 = sphi 0, %s167
      %s171 = sphi 0, %s170
      %s187 = sphi 0, %s171
      %s193 = sphi 0, %s195
      %s196 = sphi 0, %s193
      %s197 = sphi 0, %s196
      %s213 = sphi 0, %s197
      %s219 = sphi 0, %s221
      %s222 = sphi 0, %s219
      %s223 = sphi 0, %s222
      %s239 = sphi 0, %s223
      %s245 = sphi 0, %s247
      %s248 = sphi 0, %s245
      %s249 = sphi 0, %s248
      %s265 = sphi 0, %s249
      %s269 = sphi 0, %s269
      %s271 = sphi 0, %s269
      %s272 = sphi 0, %s271
      %s286 = sphi 0, %s272
      %s290 = sphi 0, %s290
      %s292 = sphi 0, %s290
      %s293 = sphi 0, %s292
      %s307 = sphi 0, %s293
      %s311 = sphi 0, %s311
      %s313 = sphi 0, %s311
      %s314 = sphi 0, %s313
      %s328 = sphi 0, %s314
      %s332 = sphi 0, %s332
      %s334 = sphi 0, %s332
      %s335 = sphi 0, %s334
      %s349 = sphi 0, %s335
      %s353 = sphi 0, %s353
      %s355 = sphi 0, %s353
      %s356 = sphi 0, %s355
      %s370 = sphi 0, %s356
      %s374 = sphi 0, %s374
      %s376 = sphi 0, %s374
      %s377 = sphi 0, %s376
      %s391 = sphi 0, %s377
    $region4: #{tpu_custom_call.1} parent=1 // loop_header_branch
      %28 = sbr.rel (%p26) target = $region8
    $region5: #{tpu_custom_call.1} parent=1 // loop_body
      %s30 = ssub.s32 %s25, 1
      %s31 = ssub.s32 %s25, 2
      %s38 = sadd.s32 1, %s33
      %p39 = scmp.ge.s32.totalorder %s38, 1
      %s40 = scalar_select %p39, 0, %s38
      %s41 = sadd.s32 1, %s32
      %s42 = scalar_select %p39, %s41, %s32
      %p43 = scmp.ge.s32.totalorder %s42, 3
      %s44 = scalar_select %p43, 0, %s42
      %s46 = sadd.s32 %s45, 1
      %p49 = scmp.eq.s32.totalorder %s25, 2
      %p50 = scmp.ne.s32.totalorder %s45, %s47
      %p51 = scmp.eq.s32.totalorder %s25, 0
      %p52 = por %p50, %p51
      %p53 = scmp.ne.s32.totalorder %s45, %s47
      %p54 = scmp.eq.s32.totalorder %s30, 2
      %p55 = por %p53, %p54
      %p56 = scmp.ne.s32.totalorder %s47, %s48
      %p57 = scmp.eq.s32.totalorder %s30, 0
      %p58 = por %p56, %p57
      %p59 = scmp.ne.s32.totalorder %s47, %s48
      %p60 = scmp.eq.s32.totalorder %s31, 2
      %p61 = por %p59, %p60
      %p63 = scmp.ne.s32.totalorder %s48, %s62
      %p64 = scmp.eq.s32.totalorder %s31, 0
      %p65 = por %p63, %p64
      %s66 = ssub.s32 %s33, %s40
      %p67 = scmp.eq.s32.totalorder %s66, 0
      %s69 = sadd.s32 %s68, 1
      %s70 = scalar_select %p67, %s68, %s69
      %p73 = pneg %p67
      %p74 = scmp.eq.s32.totalorder %s25, 2
      %p75 = por %p73, %p74
      %p76 = scmp.ne.s32.totalorder %s68, %s71
      %p77 = scmp.eq.s32.totalorder %s25, 0
      %p78 = por %p76, %p77
      %p79 = scmp.ne.s32.totalorder %s68, %s71
      %p80 = scmp.eq.s32.totalorder %s30, 2
      %p81 = por %p79, %p80
      %p82 = scmp.ne.s32.totalorder %s71, %s72
      %p83 = scmp.eq.s32.totalorder %s30, 0
      %p84 = por %p82, %p83
      %p85 = scmp.ne.s32.totalorder %s71, %s72
      %p86 = scmp.eq.s32.totalorder %s31, 2
      %p87 = por %p85, %p86
      %p89 = scmp.ne.s32.totalorder %s72, %s88
      %p90 = scmp.eq.s32.totalorder %s31, 0
      %p91 = por %p89, %p90
      %s92 = ssub.s32 %s33, %s40
      %p93 = scmp.eq.s32.totalorder %s92, 0
      %s95 = sadd.s32 %s94, 1
      %s96 = scalar_select %p93, %s94, %s95
      %p99 = pneg %p93
      %p100 = scmp.eq.s32.totalorder %s25, 2
      %p101 = por %p99, %p100
      %p102 = scmp.ne.s32.totalorder %s94, %s97
      %p103 = scmp.eq.s32.totalorder %s25, 0
      %p104 = por %p102, %p103
      %p105 = scmp.ne.s32.totalorder %s94, %s97
      %p106 = scmp.eq.s32.totalorder %s30, 2
      %p107 = por %p105, %p106
      %p108 = scmp.ne.s32.totalorder %s97, %s98
      %p109 = scmp.eq.s32.totalorder %s30, 0
      %p110 = por %p108, %p109
      %p111 = scmp.ne.s32.totalorder %s97, %s98
      %p112 = scmp.eq.s32.totalorder %s31, 2
      %p113 = por %p111, %p112
      %p115 = scmp.ne.s32.totalorder %s98, %s114
      %p116 = scmp.eq.s32.totalorder %s31, 0
      %p117 = por %p115, %p116
      %s118 = ssub.s32 %s33, %s40
      %p119 = scmp.eq.s32.totalorder %s118, 0
      %s121 = sadd.s32 %s120, 1
      %s122 = scalar_select %p119, %s120, %s121
      %p125 = pneg %p119
      %p126 = scmp.eq.s32.totalorder %s25, 2
      %p127 = por %p125, %p126
      %p128 = scmp.ne.s32.totalorder %s120, %s123
      %p129 = scmp.eq.s32.totalorder %s25, 0
      %p130 = por %p128, %p129
      %p131 = scmp.ne.s32.totalorder %s120, %s123
      %p132 = scmp.eq.s32.totalorder %s30, 2
      %p133 = por %p131, %p132
      %p134 = scmp.ne.s32.totalorder %s123, %s124
      %p135 = scmp.eq.s32.totalorder %s30, 0
      %p136 = por %p134, %p135
      %p137 = scmp.ne.s32.totalorder %s123, %s124
      %p138 = scmp.eq.s32.totalorder %s31, 2
      %p139 = por %p137, %p138
      %p141 = scmp.ne.s32.totalorder %s124, %s140
      %p142 = scmp.eq.s32.totalorder %s31, 0
      %p143 = por %p141, %p142
      %s145 = sadd.s32 %s144, 1
      %p148 = scmp.eq.s32.totalorder %s25, 2
      %p149 = scmp.ne.s32.totalorder %s144, %s146
      %p150 = scmp.eq.s32.totalorder %s25, 0
      %p151 = por %p149, %p150
      %p152 = scmp.ne.s32.totalorder %s144, %s146
      %p153 = scmp.eq.s32.totalorder %s30, 2
      %p154 = por %p152, %p153
      %p155 = scmp.ne.s32.totalorder %s146, %s147
      %p156 = scmp.eq.s32.totalorder %s30, 0
      %p157 = por %p155, %p156
      %p158 = scmp.ne.s32.totalorder %s146, %s147
      %p159 = scmp.eq.s32.totalorder %s31, 2
      %p160 = por %p158, %p159
      %p162 = scmp.ne.s32.totalorder %s147, %s161
      %p163 = scmp.eq.s32.totalorder %s31, 0
      %p164 = por %p162, %p163
      %s165 = ssub.s32 %s32, %s44
      %p166 = scmp.eq.s32.totalorder %s165, 0
      %s168 = sadd.s32 %s167, 1
      %s169 = scalar_select %p166, %s167, %s168
      %p172 = pneg %p166
      %p173 = scmp.eq.s32.totalorder %s25, 2
      %p174 = por %p172, %p173
      %p175 = scmp.ne.s32.totalorder %s167, %s170
      %p176 = scmp.eq.s32.totalorder %s25, 0
      %p177 = por %p175, %p176
      %p178 = scmp.ne.s32.totalorder %s167, %s170
      %p179 = scmp.eq.s32.totalorder %s30, 2
      %p180 = por %p178, %p179
      %p181 = scmp.ne.s32.totalorder %s170, %s171
      %p182 = scmp.eq.s32.totalorder %s30, 0
      %p183 = por %p181, %p182
      %p184 = scmp.ne.s32.totalorder %s170, %s171
      %p185 = scmp.eq.s32.totalorder %s31, 2
      %p186 = por %p184, %p185
      %p188 = scmp.ne.s32.totalorder %s171, %s187
      %p189 = scmp.eq.s32.totalorder %s31, 0
      %p190 = por %p188, %p189
      %s191 = ssub.s32 %s32, %s44
      %p192 = scmp.eq.s32.totalorder %s191, 0
      %s194 = sadd.s32 %s193, 1
      %s195 = scalar_select %p192, %s193, %s194
      %p198 = pneg %p192
      %p199 = scmp.eq.s32.totalorder %s25, 2
      %p200 = por %p198, %p199
      %p201 = scmp.ne.s32.totalorder %s193, %s196
      %p202 = scmp.eq.s32.totalorder %s25, 0
      %p203 = por %p201, %p202
      %p204 = scmp.ne.s32.totalorder %s193, %s196
      %p205 = scmp.eq.s32.totalorder %s30, 2
      %p206 = por %p204, %p205
      %p207 = scmp.ne.s32.totalorder %s196, %s197
      %p208 = scmp.eq.s32.totalorder %s30, 0
      %p209 = por %p207, %p208
      %p210 = scmp.ne.s32.totalorder %s196, %s197
      %p211 = scmp.eq.s32.totalorder %s31, 2
      %p212 = por %p210, %p211
      %p214 = scmp.ne.s32.totalorder %s197, %s213
      %p215 = scmp.eq.s32.totalorder %s31, 0
      %p216 = por %p214, %p215
      %s217 = ssub.s32 %s32, %s44
      %p218 = scmp.eq.s32.totalorder %s217, 0
      %s220 = sadd.s32 %s219, 1
      %s221 = scalar_select %p218, %s219, %s220
      %p224 = pneg %p218
      %p225 = scmp.eq.s32.totalorder %s25, 2
      %p226 = por %p224, %p225
      %p227 = scmp.ne.s32.totalorder %s219, %s222
      %p228 = scmp.eq.s32.totalorder %s25, 0
      %p229 = por %p227, %p228
      %p230 = scmp.ne.s32.totalorder %s219, %s222
      %p231 = scmp.eq.s32.totalorder %s30, 2
      %p232 = por %p230, %p231
      %p233 = scmp.ne.s32.totalorder %s222, %s223
      %p234 = scmp.eq.s32.totalorder %s30, 0
      %p235 = por %p233, %p234
      %p236 = scmp.ne.s32.totalorder %s222, %s223
      %p237 = scmp.eq.s32.totalorder %s31, 2
      %p238 = por %p236, %p237
      %p240 = scmp.ne.s32.totalorder %s223, %s239
      %p241 = scmp.eq.s32.totalorder %s31, 0
      %p242 = por %p240, %p241
      %s243 = ssub.s32 %s32, %s44
      %p244 = scmp.eq.s32.totalorder %s243, 0
      %s246 = sadd.s32 %s245, 1
      %s247 = scalar_select %p244, %s245, %s246
      %p250 = pneg %p244
      %p251 = scmp.eq.s32.totalorder %s25, 2
      %p252 = por %p250, %p251
      %p253 = scmp.ne.s32.totalorder %s245, %s248
      %p254 = scmp.eq.s32.totalorder %s25, 0
      %p255 = por %p253, %p254
      %p256 = scmp.ne.s32.totalorder %s245, %s248
      %p257 = scmp.eq.s32.totalorder %s30, 2
      %p258 = por %p256, %p257
      %p259 = scmp.ne.s32.totalorder %s248, %s249
      %p260 = scmp.eq.s32.totalorder %s30, 0
      %p261 = por %p259, %p260
      %p262 = scmp.ne.s32.totalorder %s248, %s249
      %p263 = scmp.eq.s32.totalorder %s31, 2
      %p264 = por %p262, %p263
      %p266 = scmp.ne.s32.totalorder %s249, %s265
      %p267 = scmp.eq.s32.totalorder %s31, 0
      %p268 = por %p266, %p267
      %s270 = sadd.s32 %s269, 1
      %p273 = scmp.eq.s32.totalorder %s25, 2
      %p274 = scmp.ne.s32.totalorder %s269, %s271
      %p275 = scmp.eq.s32.totalorder %s25, 0
      %p276 = por %p274, %p275
      %p277 = scmp.ne.s32.totalorder %s269, %s271
      %p278 = scmp.eq.s32.totalorder %s30, 2
      %p279 = por %p277, %p278
      %p280 = scmp.ne.s32.totalorder %s271, %s272
      %p281 = scmp.eq.s32.totalorder %s30, 0
      %p282 = por %p280, %p281
      %p283 = scmp.ne.s32.totalorder %s271, %s272
      %p284 = scmp.eq.s32.totalorder %s31, 2
      %p285 = por %p283, %p284
      %p287 = scmp.ne.s32.totalorder %s272, %s286
      %p288 = scmp.eq.s32.totalorder %s31, 0
      %p289 = por %p287, %p288
      %s291 = sadd.s32 %s290, 1
      %p294 = scmp.eq.s32.totalorder %s25, 2
      %p295 = scmp.ne.s32.totalorder %s290, %s292
      %p296 = scmp.eq.s32.totalorder %s25, 0
      %p297 = por %p295, %p296
      %p298 = scmp.ne.s32.totalorder %s290, %s292
      %p299 = scmp.eq.s32.totalorder %s30, 2
      %p300 = por %p298, %p299
      %p301 = scmp.ne.s32.totalorder %s292, %s293
      %p302 = scmp.eq.s32.totalorder %s30, 0
      %p303 = por %p301, %p302
      %p304 = scmp.ne.s32.totalorder %s292, %s293
      %p305 = scmp.eq.s32.totalorder %s31, 2
      %p306 = por %p304, %p305
      %p308 = scmp.ne.s32.totalorder %s293, %s307
      %p309 = scmp.eq.s32.totalorder %s31, 0
      %p310 = por %p308, %p309
      %s312 = sadd.s32 %s311, 1
      %p315 = scmp.eq.s32.totalorder %s25, 2
      %p316 = scmp.ne.s32.totalorder %s311, %s313
      %p317 = scmp.eq.s32.totalorder %s25, 0
      %p318 = por %p316, %p317
      %p319 = scmp.ne.s32.totalorder %s311, %s313
      %p320 = scmp.eq.s32.totalorder %s30, 2
      %p321 = por %p319, %p320
      %p322 = scmp.ne.s32.totalorder %s313, %s314
      %p323 = scmp.eq.s32.totalorder %s30, 0
      %p324 = por %p322, %p323
      %p325 = scmp.ne.s32.totalorder %s313, %s314
      %p326 = scmp.eq.s32.totalorder %s31, 2
      %p327 = por %p325, %p326
      %p329 = scmp.ne.s32.totalorder %s314, %s328
      %p330 = scmp.eq.s32.totalorder %s31, 0
      %p331 = por %p329, %p330
      %s333 = sadd.s32 %s332, 1
      %p336 = scmp.eq.s32.totalorder %s25, 2
      %p337 = scmp.ne.s32.totalorder %s332, %s334
      %p338 = scmp.eq.s32.totalorder %s25, 0
      %p339 = por %p337, %p338
      %p340 = scmp.ne.s32.totalorder %s332, %s334
      %p341 = scmp.eq.s32.totalorder %s30, 2
      %p342 = por %p340, %p341
      %p343 = scmp.ne.s32.totalorder %s334, %s335
      %p344 = scmp.eq.s32.totalorder %s30, 0
      %p345 = por %p343, %p344
      %p346 = scmp.ne.s32.totalorder %s334, %s335
      %p347 = scmp.eq.s32.totalorder %s31, 2
      %p348 = por %p346, %p347
      %p350 = scmp.ne.s32.totalorder %s335, %s349
      %p351 = scmp.eq.s32.totalorder %s31, 0
      %p352 = por %p350, %p351
      %s354 = sadd.s32 %s353, 1
      %p357 = scmp.eq.s32.totalorder %s25, 2
      %p358 = scmp.ne.s32.totalorder %s353, %s355
      %p359 = scmp.eq.s32.totalorder %s25, 0
      %p360 = por %p358, %p359
      %p361 = scmp.ne.s32.totalorder %s353, %s355
      %p362 = scmp.eq.s32.totalorder %s30, 2
      %p363 = por %p361, %p362
      %p364 = scmp.ne.s32.totalorder %s355, %s356
      %p365 = scmp.eq.s32.totalorder %s30, 0
      %p366 = por %p364, %p365
      %p367 = scmp.ne.s32.totalorder %s355, %s356
      %p368 = scmp.eq.s32.totalorder %s31, 2
      %p369 = por %p367, %p368
      %p371 = scmp.ne.s32.totalorder %s356, %s370
      %p372 = scmp.eq.s32.totalorder %s31, 0
      %p373 = por %p371, %p372
      %s375 = sadd.s32 %s374, 1
      %p378 = scmp.eq.s32.totalorder %s25, 2
      %p379 = scmp.ne.s32.totalorder %s374, %s376
      %p380 = scmp.eq.s32.totalorder %s25, 0
      %p381 = por %p379, %p380
      %p382 = scmp.ne.s32.totalorder %s374, %s376
      %p383 = scmp.eq.s32.totalorder %s30, 2
      %p384 = por %p382, %p383
      %p385 = scmp.ne.s32.totalorder %s376, %s377
      %p386 = scmp.eq.s32.totalorder %s30, 0
      %p387 = por %p385, %p386
      %p388 = scmp.ne.s32.totalorder %s376, %s377
      %p389 = scmp.eq.s32.totalorder %s31, 2
      %p390 = por %p388, %p389
      %p392 = scmp.ne.s32.totalorder %s377, %s391
      %p393 = scmp.eq.s32.totalorder %s31, 0
      %p394 = por %p392, %p393
      %p395 = scmp.le.s32.totalorder 1, %s25
      %p396 = scmp.lt.s32.totalorder %s25, 4
      %p397 = pnand %p395, %p396
      %p398 = pneg %p397
      // Predicated region
      $region9: #{tpu_custom_call.1} parent=5 // pred_check
        _
      $region10: #{tpu_custom_call.1} parent=5 // pred_check_branch
        %400 = sbr.rel (%p397) target = $region12
      $region11: #{tpu_custom_call.1} parent=5 // pred_region
        %s401 = ssub.s32 %s25, 1
        // Predicated region
        $region13: #{tpu_custom_call.1} parent=11 // pred_check
          %p402 = pneg %p58
        $region14: #{tpu_custom_call.1} parent=11 // pred_check_branch
          %404 = sbr.rel (%p402) target = $region16
        $region15: #{tpu_custom_call.1} parent=11 // pred_region
          %s406 = ssub.s32 2048, 2048
          %407 = vsyncadd [#allocation8], %s406
          %s408 = sshll.u32 [#allocation7], 4
          %s409 = int_to_ptr.vmem [resolvable:$true] %s408
          %414 = dma.hbm_to_vmem [thread:$0]  %s0, 2048, %s409, [#allocation8], 128, 128, 8
        $region16: #{tpu_custom_call.1} parent=11 // pred_fallthru
          _
        // Predicated region
        $region17: #{tpu_custom_call.1} parent=11 // pred_check
          %p415 = pneg %p84
        $region18: #{tpu_custom_call.1} parent=11 // pred_check_branch
          %417 = sbr.rel (%p415) target = $region20
        $region19: #{tpu_custom_call.1} parent=11 // pred_region
          %s418 = smul.u32 32, %s35
          %p419 = scmp.lt.s32.totalorder %s418, 31
          %s420 = scalar_select %p419, %s418, 31
          %s421 = smul.addr %s420, 8
          %s422 = scalar_lea.vmem %s1, %s421
          %s423 = smul.u32 32, %s35
        $region20: #{tpu_custom_call.1} parent=11 // pred_fallthru
          _
        // Predicated region
        $region21: #{tpu_custom_call.1} parent=11 // pred_check
          %p424 = pneg %p110
        $region22: #{tpu_custom_call.1} parent=11 // pred_check_branch
          %426 = sbr.rel (%p424) target = $region24
        $region23: #{tpu_custom_call.1} parent=11 // pred_region
          %s427 = smul.u32 2, %s35
          %p428 = scmp.lt.s32.totalorder %s427, 1
          %s429 = scalar_select %p428, %s427, 1
          %s430 = scalar_lea.vmem %s2, %s429
          %s431 = smul.u32 2, %s35
        $region24: #{tpu_custom_call.1} parent=11 // pred_fallthru
          _
        // Predicated region
        $region25: #{tpu_custom_call.1} parent=11 // pred_check
          %p432 = pneg %p136
        $region26: #{tpu_custom_call.1} parent=11 // pred_check_branch
          %434 = sbr.rel (%p432) target = $region28
        $region27: #{tpu_custom_call.1} parent=11 // pred_region
          %s435 = smul.u32 32, %s35
          %p436 = scmp.lt.s32.totalorder %s435, 31
          %s437 = scalar_select %p436, %s435, 31
          %s438 = smul.addr %s437, 8
          %s439 = scalar_lea.vmem %s3, %s438
          %s440 = smul.u32 32, %s35
        $region28: #{tpu_custom_call.1} parent=11 // pred_fallthru
          _
        // Predicated region
        $region29: #{tpu_custom_call.1} parent=11 // pred_check
          %p441 = pneg %p157
        $region30: #{tpu_custom_call.1} parent=11 // pred_check_branch
          %443 = sbr.rel (%p441) target = $region32
        $region31: #{tpu_custom_call.1} parent=11 // pred_region
          _
        $region32: #{tpu_custom_call.1} parent=11 // pred_fallthru
          _
        // Predicated region
        $region33: #{tpu_custom_call.1} parent=11 // pred_check
          %p444 = pneg %p282
        $region34: #{tpu_custom_call.1} parent=11 // pred_check_branch
          %446 = sbr.rel (%p444) target = $region36
        $region35: #{tpu_custom_call.1} parent=11 // pred_region
          _
        $region36: #{tpu_custom_call.1} parent=11 // pred_fallthru
          _
        // Predicated region
        $region37: #{tpu_custom_call.1} parent=11 // pred_check
          %p447 = pneg %p303
        $region38: #{tpu_custom_call.1} parent=11 // pred_check_branch
          %449 = sbr.rel (%p447) target = $region40
        $region39: #{tpu_custom_call.1} parent=11 // pred_region
          _
        $region40: #{tpu_custom_call.1} parent=11 // pred_fallthru
          _
        // Predicated region
        $region41: #{tpu_custom_call.1} parent=11 // pred_check
          %p450 = pneg %p324
        $region42: #{tpu_custom_call.1} parent=11 // pred_check_branch
          %452 = sbr.rel (%p450) target = $region44
        $region43: #{tpu_custom_call.1} parent=11 // pred_region
          _
        $region44: #{tpu_custom_call.1} parent=11 // pred_fallthru
          _
        // Predicated region
        $region45: #{tpu_custom_call.1} parent=11 // pred_check
          %p453 = pneg %p345
        $region46: #{tpu_custom_call.1} parent=11 // pred_check_branch
          %455 = sbr.rel (%p453) target = $region48
        $region47: #{tpu_custom_call.1} parent=11 // pred_region
          %s457 = ssub.s32 2048, 2048
          %458 = vsyncadd [#allocation11], %s457
          %s459 = sshll.u32 [#allocation12], 4
          %s460 = int_to_ptr.vmem [resolvable:$true] %s459
          %465 = dma.hbm_to_vmem [thread:$0]  %s12, 2048, %s460, [#allocation11], 128, 128, 8
        $region48: #{tpu_custom_call.1} parent=11 // pred_fallthru
          _
        // Predicated region
        $region49: #{tpu_custom_call.1} parent=11 // pred_check
          %p466 = pneg %p366
        $region50: #{tpu_custom_call.1} parent=11 // pred_check_branch
          %468 = sbr.rel (%p466) target = $region52
        $region51: #{tpu_custom_call.1} parent=11 // pred_region
          _
        $region52: #{tpu_custom_call.1} parent=11 // pred_fallthru
          _
      $region12: #{tpu_custom_call.1} parent=5 // pred_fallthru
        _
      %p469 = scmp.lt.s32.totalorder %s25, 3
      // Predicated region
      $region53: #{tpu_custom_call.1} parent=5 // pred_check
        %p470 = pneg %p469
      $region54: #{tpu_custom_call.1} parent=5 // pred_check_branch
        %472 = sbr.rel (%p470) target = $region56
      $region55: #{tpu_custom_call.1} parent=5 // pred_region
        // Predicated region
        $region57: #{tpu_custom_call.1} parent=55 // pred_check
          %p473 = pneg %p177
        $region58: #{tpu_custom_call.1} parent=55 // pred_check_branch
          %475 = sbr.rel (%p473) target = $region60
        $region59: #{tpu_custom_call.1} parent=55 // pred_region
          %p476 = scmp.lt.s32.totalorder %s32, 2
          %s477 = scalar_select %p476, %s32, 2
          %s478 = scalar_lea.vmem %s5, %s477
        $region60: #{tpu_custom_call.1} parent=55 // pred_fallthru
          _
        // Predicated region
        $region61: #{tpu_custom_call.1} parent=55 // pred_check
          %p479 = pneg %p203
        $region62: #{tpu_custom_call.1} parent=55 // pred_check_branch
          %481 = sbr.rel (%p479) target = $region64
        $region63: #{tpu_custom_call.1} parent=55 // pred_region
          %p482 = scmp.lt.s32.totalorder %s32, 2
          %s483 = scalar_select %p482, %s32, 2
          %s484 = scalar_lea.vmem %s6, %s483
        $region64: #{tpu_custom_call.1} parent=55 // pred_fallthru
          _
        // Predicated region
        $region65: #{tpu_custom_call.1} parent=55 // pred_check
          %p485 = pneg %p229
        $region66: #{tpu_custom_call.1} parent=55 // pred_check_branch
          %487 = sbr.rel (%p485) target = $region68
        $region67: #{tpu_custom_call.1} parent=55 // pred_region
          %s488 = sand.u32 %s25, 1
          %s489 = scalar_lea.sflag [#allocation11], %s488
          %s490 = sand.u32 %s219, 1
          %s491 = smul.addr %s490, 64
          %s492 = scalar_lea.vmem [#allocation10], %s491
          %s494 = ssub.s32 1024, 1024
          %495 = vsyncadd %s489, %s494
          %s496 = smul.addr %s32, 16
          %s497 = smul.addr %s496, 64
          %s498 = scalar_lea.hbm %s7, %s497
          %s499 = sshll.u32 %s492, 4
          %s500 = int_to_ptr.vmem [resolvable:$true] %s499
          %505 = dma.hbm_to_vmem [thread:$0]  %s498, 1024, %s500, %s489, 64, 64, 4
        $region68: #{tpu_custom_call.1} parent=55 // pred_fallthru
          _
        // Predicated region
        $region69: #{tpu_custom_call.1} parent=55 // pred_check
          %p506 = pneg %p255
        $region70: #{tpu_custom_call.1} parent=55 // pred_check_branch
          %508 = sbr.rel (%p506) target = $region72
        $region71: #{tpu_custom_call.1} parent=55 // pred_region
          %p509 = scmp.lt.s32.totalorder %s32, 2
          %s510 = scalar_select %p509, %s32, 2
          %s511 = scalar_lea.vmem %s8, %s510
        $region72: #{tpu_custom_call.1} parent=55 // pred_fallthru
          _
      $region56: #{tpu_custom_call.1} parent=5 // pred_fallthru
        _
      %p512 = scmp.le.s32.totalorder 1, %s25
      %p513 = scmp.lt.s32.totalorder %s25, 4
      %p514 = pnand %p512, %p513
      %p515 = pneg %p514
      // Predicated region
      $region73: #{tpu_custom_call.1} parent=5 // pred_check
        _
      $region74: #{tpu_custom_call.1} parent=5 // pred_check_branch
        %517 = sbr.rel (%p514) target = $region76
      $region75: #{tpu_custom_call.1} parent=5 // pred_region
        %s518 = ssub.s32 %s25, 1
        // Predicated region
        $region77: #{tpu_custom_call.1} parent=75 // pred_check
          %p519 = pneg %p58
        $region78: #{tpu_custom_call.1} parent=75 // pred_check_branch
          %521 = sbr.rel (%p519) target = $region80
        $region79: #{tpu_custom_call.1} parent=75 // pred_region
          %522 = dma.done [#allocation8], 2048
        $region80: #{tpu_custom_call.1} parent=75 // pred_fallthru
          _
        %s523 = sand.u32 %s30, 1
        %s524 = scalar_lea.sflag [#allocation11], %s523
        %s525 = sand.u32 %s222, 1
        %s526 = smul.addr %s525, 64
        %s527 = scalar_lea.vmem [#allocation10], %s526
        // Predicated region
        $region81: #{tpu_custom_call.1} parent=75 // pred_check
          %p528 = pneg %p235
        $region82: #{tpu_custom_call.1} parent=75 // pred_check_branch
          %530 = sbr.rel (%p528) target = $region84
        $region83: #{tpu_custom_call.1} parent=75 // pred_region
          %531 = dma.done %s524, 1024
        $region84: #{tpu_custom_call.1} parent=75 // pred_fallthru
          _
        // Predicated region
        $region85: #{tpu_custom_call.1} parent=75 // pred_check
          %p532 = pneg %p345
        $region86: #{tpu_custom_call.1} parent=75 // pred_check_branch
          %534 = sbr.rel (%p532) target = $region88
        $region87: #{tpu_custom_call.1} parent=75 // pred_region
          %535 = dma.done [#allocation11], 2048
        $region88: #{tpu_custom_call.1} parent=75 // pred_fallthru
          _
        %p536 = pneg %p58
        %p537 = pneg %p55
        %s538 = smul.u32 32, %s35
        %p539 = scmp.lt.s32.totalorder %s538, 31
        %s540 = scalar_select %p539, %s538, 31
        %s541 = smul.addr %s540, 8
        %s542 = scalar_lea.vmem %s1, %s541
        %p543 = pneg %p84
        %p544 = pneg %p81
        %s545 = smul.u32 2, %s35
        %p546 = scmp.lt.s32.totalorder %s545, 1
        %s547 = scalar_select %p546, %s545, 1
        %s548 = scalar_lea.vmem %s2, %s547
        %p549 = pneg %p110
        %p550 = pneg %p107
        %s551 = smul.u32 32, %s35
        %p552 = scmp.lt.s32.totalorder %s551, 31
        %s553 = scalar_select %p552, %s551, 31
        %s554 = smul.addr %s553, 8
        %s555 = scalar_lea.vmem %s3, %s554
        %p556 = pneg %p136
        %p557 = pneg %p133
        %p558 = pneg %p157
        %p559 = pneg %p154
        %p560 = scmp.lt.s32.totalorder %s34, 2
        %s561 = scalar_select %p560, %s34, 2
        %s562 = scalar_lea.vmem %s5, %s561
        %p563 = pneg %p183
        %p564 = pneg %p180
        %p565 = scmp.lt.s32.totalorder %s34, 2
        %s566 = scalar_select %p565, %s34, 2
        %s567 = scalar_lea.vmem %s6, %s566
        %p568 = pneg %p209
        %p569 = pneg %p206
        %s570 = sand.u32 %s30, 1
        %s571 = scalar_lea.sflag [#allocation11], %s570
        %s572 = sand.u32 %s222, 1
        %s573 = smul.addr %s572, 64
        %s574 = scalar_lea.vmem [#allocation10], %s573
        %p575 = pneg %p235
        %p576 = pneg %p232
        %p577 = scmp.lt.s32.totalorder %s34, 2
        %s578 = scalar_select %p577, %s34, 2
        %s579 = scalar_lea.vmem %s8, %s578
        %p580 = pneg %p261
        %p581 = pneg %p258
        %p582 = pneg %p282
        %p583 = pneg %p279
        %p584 = pneg %p303
        %p585 = pneg %p300
        %p586 = pneg %p324
        %p587 = pneg %p321
        %p588 = pneg %p345
        %p589 = pneg %p342
        %p590 = pneg %p366
        %p591 = pneg %p363
        %p592 = pneg %p387
        %p593 = pneg %p384
        %s594 = smul.u32 32, %s35
        %p595 = scmp.lt.s32.totalorder %s594, 31
        %s596 = scalar_select %p595, %s594, 31
        %s597 = smul.addr %s596, 8
        %s598 = scalar_lea.vmem %s1, %s597
        %s599 = smul.u32 32, %s35
        %s600 = smul.u32 2, %s35
        %p601 = scmp.lt.s32.totalorder %s600, 1
        %s602 = scalar_select %p601, %s600, 1
        %s603 = scalar_lea.vmem %s2, %s602
        %s604 = smul.u32 2, %s35
        %s605 = smul.u32 32, %s35
        %p606 = scmp.lt.s32.totalorder %s605, 31
        %s607 = scalar_select %p606, %s605, 31
        %s608 = smul.addr %s607, 8
        %s609 = scalar_lea.vmem %s3, %s608
        %s610 = smul.u32 32, %s35
        %p611 = scmp.lt.s32.totalorder %s34, 2
        %s612 = scalar_select %p611, %s34, 2
        %s613 = scalar_lea.vmem %s5, %s612
        %p614 = scmp.lt.s32.totalorder %s34, 2
        %s615 = scalar_select %p614, %s34, 2
        %s616 = scalar_lea.vmem %s6, %s615
        %p617 = scmp.lt.s32.totalorder %s34, 2
        %s618 = scalar_select %p617, %s34, 2
        %s619 = scalar_lea.vmem %s8, %s618
        %p621 = scmp.eq.s32.totalorder %s34, 0
        %p622 = scmp.eq.s32.totalorder %s35, 0
        %p623 = pnand %p621, %p622
        %p624 = pneg %p623
        // Predicated region
        $region89: #{tpu_custom_call.1} parent=75 // pred_check
          _
        $region90: #{tpu_custom_call.1} parent=75 // pred_check_branch
          %626 = sbr.rel (%p623) target = $region92
        $region91: #{tpu_custom_call.1} parent=75 // pred_region
          %v627 = vld [vmem:[#allocation7] sm:$0xff]
          %v628 = vld [vmem:[#allocation7 + $0x8] sm:$0xff]
          %v629 = vld [vmem:[#allocation7 + $0x10] sm:$0xff]
          %v630 = vld [vmem:[#allocation7 + $0x18] sm:$0xff]
          %v631 = vld [vmem:[#allocation7 + $0x20] sm:$0xff]
          %v632 = vld [vmem:[#allocation7 + $0x28] sm:$0xff]
          %v633 = vld [vmem:[#allocation7 + $0x30] sm:$0xff]
          %v634 = vld [vmem:[#allocation7 + $0x38] sm:$0xff]
          %v635 = vld [vmem:[#allocation7 + $0x40] sm:$0xff]
          %v636 = vld [vmem:[#allocation7 + $0x48] sm:$0xff]
          %v637 = vld [vmem:[#allocation7 + $0x50] sm:$0xff]
          %v638 = vld [vmem:[#allocation7 + $0x58] sm:$0xff]
          %v639 = vld [vmem:[#allocation7 + $0x60] sm:$0xff]
          %v640 = vld [vmem:[#allocation7 + $0x68] sm:$0xff]
          %v641 = vld [vmem:[#allocation7 + $0x70] sm:$0xff]
          %v642 = vld [vmem:[#allocation7 + $0x78] sm:$0xff]
          %643 = vst [vmem:[#allocation2] sm:$0xff] %v627
          %644 = vst [vmem:[#allocation2 + $0x8] sm:$0xff] %v628
          %645 = vst [vmem:[#allocation2 + $0x10] sm:$0xff] %v629
          %646 = vst [vmem:[#allocation2 + $0x18] sm:$0xff] %v630
          %647 = vst [vmem:[#allocation2 + $0x20] sm:$0xff] %v631
          %648 = vst [vmem:[#allocation2 + $0x28] sm:$0xff] %v632
          %649 = vst [vmem:[#allocation2 + $0x30] sm:$0xff] %v633
          %650 = vst [vmem:[#allocation2 + $0x38] sm:$0xff] %v634
          %651 = vst [vmem:[#allocation2 + $0x40] sm:$0xff] %v635
          %652 = vst [vmem:[#allocation2 + $0x48] sm:$0xff] %v636
          %653 = vst [vmem:[#allocation2 + $0x50] sm:$0xff] %v637
          %654 = vst [vmem:[#allocation2 + $0x58] sm:$0xff] %v638
          %655 = vst [vmem:[#allocation2 + $0x60] sm:$0xff] %v639
          %656 = vst [vmem:[#allocation2 + $0x68] sm:$0xff] %v640
          %657 = vst [vmem:[#allocation2 + $0x70] sm:$0xff] %v641
          %658 = vst [vmem:[#allocation2 + $0x78] sm:$0xff] %v642
        $region92: #{tpu_custom_call.1} parent=75 // pred_fallthru
          _
        // Predicated region
        $region93: #{tpu_custom_call.1} parent=75 // pred_check
          %p659 = pneg %p622
        $region94: #{tpu_custom_call.1} parent=75 // pred_check_branch
          %661 = sbr.rel (%p659) target = $region96
        $region95: #{tpu_custom_call.1} parent=75 // pred_region
          %v662 = vld [vmem:[#allocation2] sm:$0xff]
          %v663 = vld [vmem:[#allocation2 + $0x8] sm:$0xff]
          %v664 = vld [vmem:[#allocation2 + $0x10] sm:$0xff]
          %v665 = vld [vmem:[#allocation2 + $0x18] sm:$0xff]
          %v666 = vld [vmem:[#allocation2 + $0x20] sm:$0xff]
          %v667 = vld [vmem:[#allocation2 + $0x28] sm:$0xff]
          %v668 = vld [vmem:[#allocation2 + $0x30] sm:$0xff]
          %v669 = vld [vmem:[#allocation2 + $0x38] sm:$0xff]
          %v670 = vld [vmem:[#allocation2 + $0x40] sm:$0xff]
          %v671 = vld [vmem:[#allocation2 + $0x48] sm:$0xff]
          %v672 = vld [vmem:[#allocation2 + $0x50] sm:$0xff]
          %v673 = vld [vmem:[#allocation2 + $0x58] sm:$0xff]
          %v674 = vld [vmem:[#allocation2 + $0x60] sm:$0xff]
          %v675 = vld [vmem:[#allocation2 + $0x68] sm:$0xff]
          %v676 = vld [vmem:[#allocation2 + $0x70] sm:$0xff]
          %v677 = vld [vmem:[#allocation2 + $0x78] sm:$0xff]
          %v678 = vld [vmem:[%s613] sm:$0x1]
          %v680 = vlaneseq
          %v681 = vshrl.u32 %v680, 7
          %v682 = vsub.s32 0, %v681
          %v683 = vrot.slane %v678, %v682
          %v685 = vmul.f32 %v662, %v683
          %v686 = vmul.f32 %v663, %v683
          %v687 = vmul.f32 %v664, %v683
          %v688 = vmul.f32 %v665, %v683
          %v689 = vmul.f32 %v666, %v683
          %v690 = vmul.f32 %v667, %v683
          %v691 = vmul.f32 %v668, %v683
          %v692 = vmul.f32 %v669, %v683
          %v693 = vmul.f32 %v670, %v683
          %v694 = vmul.f32 %v671, %v683
          %v695 = vmul.f32 %v672, %v683
          %v696 = vmul.f32 %v673, %v683
          %v697 = vmul.f32 %v674, %v683
          %v698 = vmul.f32 %v675, %v683
          %v699 = vmul.f32 %v676, %v683
          %v700 = vmul.f32 %v677, %v683
          %v701 = vld [vmem:[%s616] sm:$0x1]
          %v703 = vlaneseq
          %v704 = vshrl.u32 %v703, 7
          %v705 = vsub.s32 0, %v704
          %v706 = vrot.slane %v701, %v705
          %v708 = vadd.f32 %v685, %v706
          %v709 = vadd.f32 %v686, %v706
          %v710 = vadd.f32 %v687, %v706
          %v711 = vadd.f32 %v688, %v706
          %v712 = vadd.f32 %v689, %v706
          %v713 = vadd.f32 %v690, %v706
          %v714 = vadd.f32 %v691, %v706
          %v715 = vadd.f32 %v692, %v706
          %v716 = vadd.f32 %v693, %v706
          %v717 = vadd.f32 %v694, %v706
          %v718 = vadd.f32 %v695, %v706
          %v719 = vadd.f32 %v696, %v706
          %v720 = vadd.f32 %v697, %v706
          %v721 = vadd.f32 %v698, %v706
          %v722 = vadd.f32 %v699, %v706
          %v723 = vadd.f32 %v700, %v706
          %v724 = vmax.f32 %v708, 0.0
          %v725 = vmax.f32 %v709, 0.0
          %v726 = vmax.f32 %v710, 0.0
          %v727 = vmax.f32 %v711, 0.0
          %v728 = vmax.f32 %v712, 0.0
          %v729 = vmax.f32 %v713, 0.0
          %v730 = vmax.f32 %v714, 0.0
          %v731 = vmax.f32 %v715, 0.0
          %v732 = vmax.f32 %v716, 0.0
          %v733 = vmax.f32 %v717, 0.0
          %v734 = vmax.f32 %v718, 0.0
          %v735 = vmax.f32 %v719, 0.0
          %v736 = vmax.f32 %v720, 0.0
          %v737 = vmax.f32 %v721, 0.0
          %v738 = vmax.f32 %v722, 0.0
          %v739 = vmax.f32 %v723, 0.0
          %s740 = scalar_select %p621, 1.0, 0.0
          %v741 = vstv %s740
          %v742 = vmul.f32 %v741, %v662
          %v743 = vmul.f32 %v741, %v663
          %v744 = vmul.f32 %v741, %v664
          %v745 = vmul.f32 %v741, %v665
          %v746 = vmul.f32 %v741, %v666
          %v747 = vmul.f32 %v741, %v667
          %v748 = vmul.f32 %v741, %v668
          %v749 = vmul.f32 %v741, %v669
          %v750 = vmul.f32 %v741, %v670
          %v751 = vmul.f32 %v741, %v671
          %v752 = vmul.f32 %v741, %v672
          %v753 = vmul.f32 %v741, %v673
          %v754 = vmul.f32 %v741, %v674
          %v755 = vmul.f32 %v741, %v675
          %v756 = vmul.f32 %v741, %v676
          %v757 = vmul.f32 %v741, %v677
          %s758 = ssub.f32 1.0, %s740
          %v759 = vstv %s758
          %v760 = vmul.f32 %v759, %v724
          %v761 = vmul.f32 %v759, %v725
          %v762 = vmul.f32 %v759, %v726
          %v763 = vmul.f32 %v759, %v727
          %v764 = vmul.f32 %v759, %v728
          %v765 = vmul.f32 %v759, %v729
          %v766 = vmul.f32 %v759, %v730
          %v767 = vmul.f32 %v759, %v731
          %v768 = vmul.f32 %v759, %v732
          %v769 = vmul.f32 %v759, %v733
          %v770 = vmul.f32 %v759, %v734
          %v771 = vmul.f32 %v759, %v735
          %v772 = vmul.f32 %v759, %v736
          %v773 = vmul.f32 %v759, %v737
          %v774 = vmul.f32 %v759, %v738
          %v775 = vmul.f32 %v759, %v739
          %v776 = vadd.f32 %v742, %v760
          %v777 = vadd.f32 %v743, %v761
          %v778 = vadd.f32 %v744, %v762
          %v779 = vadd.f32 %v745, %v763
          %v780 = vadd.f32 %v746, %v764
          %v781 = vadd.f32 %v747, %v765
          %v782 = vadd.f32 %v748, %v766
          %v783 = vadd.f32 %v749, %v767
          %v784 = vadd.f32 %v750, %v768
          %v785 = vadd.f32 %v751, %v769
          %v786 = vadd.f32 %v752, %v770
          %v787 = vadd.f32 %v753, %v771
          %v788 = vadd.f32 %v754, %v772
          %v789 = vadd.f32 %v755, %v773
          %v790 = vadd.f32 %v756, %v774
          %v791 = vadd.f32 %v757, %v775
          %792 = vst [vmem:[#allocation3] sm:$0xff] %v776
          %793 = vst [vmem:[#allocation3 + $0x8] sm:$0xff] %v777
          %794 = vst [vmem:[#allocation3 + $0x10] sm:$0xff] %v778
          %795 = vst [vmem:[#allocation3 + $0x18] sm:$0xff] %v779
          %796 = vst [vmem:[#allocation3 + $0x20] sm:$0xff] %v780
          %797 = vst [vmem:[#allocation3 + $0x28] sm:$0xff] %v781
          %798 = vst [vmem:[#allocation3 + $0x30] sm:$0xff] %v782
          %799 = vst [vmem:[#allocation3 + $0x38] sm:$0xff] %v783
          %800 = vst [vmem:[#allocation3 + $0x40] sm:$0xff] %v784
          %801 = vst [vmem:[#allocation3 + $0x48] sm:$0xff] %v785
          %802 = vst [vmem:[#allocation3 + $0x50] sm:$0xff] %v786
          %803 = vst [vmem:[#allocation3 + $0x58] sm:$0xff] %v787
          %804 = vst [vmem:[#allocation3 + $0x60] sm:$0xff] %v788
          %805 = vst [vmem:[#allocation3 + $0x68] sm:$0xff] %v789
          %806 = vst [vmem:[#allocation3 + $0x70] sm:$0xff] %v790
          %807 = vst [vmem:[#allocation3 + $0x78] sm:$0xff] %v791
          %v808 = vpack.c.bf16 %v777, %v776
          %v809 = vpack.c.bf16 %v779, %v778
          %v810 = vpack.c.bf16 %v781, %v780
          %v811 = vpack.c.bf16 %v783, %v782
          %v812 = vpack.c.bf16 %v785, %v784
          %v813 = vpack.c.bf16 %v787, %v786
          %v814 = vpack.c.bf16 %v789, %v788
          %v815 = vpack.c.bf16 %v791, %v790
          %816 = vst [vmem:[#allocation4] sm:$0xff] %v808
          %817 = vst [vmem:[#allocation4 + $0x8] sm:$0xff] %v809
          %818 = vst [vmem:[#allocation4 + $0x10] sm:$0xff] %v810
          %819 = vst [vmem:[#allocation4 + $0x18] sm:$0xff] %v811
          %820 = vst [vmem:[#allocation4 + $0x20] sm:$0xff] %v812
          %821 = vst [vmem:[#allocation4 + $0x28] sm:$0xff] %v813
          %822 = vst [vmem:[#allocation4 + $0x30] sm:$0xff] %v814
          %823 = vst [vmem:[#allocation4 + $0x38] sm:$0xff] %v815
          %v824 = vmax.f32 %v776, %v780
          %v825 = vmax.f32 %v777, %v781
          %v826 = vmax.f32 %v778, %v782
          %v827 = vmax.f32 %v779, %v783
          %v828 = vmax.f32 %v824, %v784
          %v829 = vmax.f32 %v825, %v785
          %v830 = vmax.f32 %v826, %v786
          %v831 = vmax.f32 %v827, %v787
          %v832 = vmax.f32 %v828, %v788
          %v833 = vmax.f32 %v829, %v789
          %v834 = vmax.f32 %v830, %v790
          %v835 = vmax.f32 %v831, %v791
          %v836 = vmax.f32 %v832, %v833
          %v837 = vmax.f32 %v834, %v835
          %v838 = vmax.f32 %v836, %v837
          %v839 = vrot.slane %v838, 4
          %v840 = vmax.f32 %v838, %v839
          %v841 = vrot.slane %v840, 2
          %v842 = vmax.f32 %v840, %v841
          %v843 = vrot.slane %v842, 1
          %v844 = vmax.f32 %v842, %v843
          %v845 = vld [vmem:[%s4] sm:$0x1]
          %v846 = vadd.f32 %v844, %v845
          %v847 = vmax.f32 %v846, 0.0
          %v848 = vadd.f32 %v847, 1e-07
          %849 = vst [vmem:[#allocation6] sm:$0x1] %v848
          %850 = vst [vmem:[#allocation5] sm:$0xff] 0.0
          %851 = vst [vmem:[#allocation5 + $0x8] sm:$0xff] 0.0
          %852 = vst [vmem:[#allocation5 + $0x10] sm:$0xff] 0.0
          %853 = vst [vmem:[#allocation5 + $0x18] sm:$0xff] 0.0
          %854 = vst [vmem:[#allocation5 + $0x20] sm:$0xff] 0.0
          %855 = vst [vmem:[#allocation5 + $0x28] sm:$0xff] 0.0
          %856 = vst [vmem:[#allocation5 + $0x30] sm:$0xff] 0.0
          %857 = vst [vmem:[#allocation5 + $0x38] sm:$0xff] 0.0
          %858 = vst [vmem:[#allocation5 + $0x40] sm:$0xff] 0.0
          %859 = vst [vmem:[#allocation5 + $0x48] sm:$0xff] 0.0
          %860 = vst [vmem:[#allocation5 + $0x50] sm:$0xff] 0.0
          %861 = vst [vmem:[#allocation5 + $0x58] sm:$0xff] 0.0
          %862 = vst [vmem:[#allocation5 + $0x60] sm:$0xff] 0.0
          %863 = vst [vmem:[#allocation5 + $0x68] sm:$0xff] 0.0
          %864 = vst [vmem:[#allocation5 + $0x70] sm:$0xff] 0.0
          %865 = vst [vmem:[#allocation5 + $0x78] sm:$0xff] 0.0
          %866 = vst [vmem:[#allocation5 + $0x80] sm:$0xff] 0.0
          %867 = vst [vmem:[#allocation5 + $0x88] sm:$0xff] 0.0
          %868 = vst [vmem:[#allocation5 + $0x90] sm:$0xff] 0.0
          %869 = vst [vmem:[#allocation5 + $0x98] sm:$0xff] 0.0
          %870 = vst [vmem:[#allocation5 + $0xa0] sm:$0xff] 0.0
          %871 = vst [vmem:[#allocation5 + $0xa8] sm:$0xff] 0.0
          %872 = vst [vmem:[#allocation5 + $0xb0] sm:$0xff] 0.0
          %873 = vst [vmem:[#allocation5 + $0xb8] sm:$0xff] 0.0
          %874 = vst [vmem:[#allocation5 + $0xc0] sm:$0xff] 0.0
          %875 = vst [vmem:[#allocation5 + $0xc8] sm:$0xff] 0.0
          %876 = vst [vmem:[#allocation5 + $0xd0] sm:$0xff] 0.0
          %877 = vst [vmem:[#allocation5 + $0xd8] sm:$0xff] 0.0
          %878 = vst [vmem:[#allocation5 + $0xe0] sm:$0xff] 0.0
          %879 = vst [vmem:[#allocation5 + $0xe8] sm:$0xff] 0.0
          %880 = vst [vmem:[#allocation5 + $0xf0] sm:$0xff] 0.0
          %881 = vst [vmem:[#allocation5 + $0xf8] sm:$0xff] 0.0
        $region96: #{tpu_custom_call.1} parent=75 // pred_fallthru
          _
        %v882 = vld [vmem:[%s598] sm:$0xff]
        %v883 = vld [vmem:[%s598 + $0x8] sm:$0xff]
        %v884 = vld [vmem:[%s598 + $0x10] sm:$0xff]
        %v885 = vld [vmem:[%s598 + $0x18] sm:$0xff]
        %v886 = vld [vmem:[%s598 + $0x20] sm:$0xff]
        %v887 = vld [vmem:[%s598 + $0x28] sm:$0xff]
        %v888 = vld [vmem:[%s598 + $0x30] sm:$0xff]
        %v889 = vld [vmem:[%s598 + $0x38] sm:$0xff]
        %v890 = vld [vmem:[%s598 + $0x40] sm:$0xff]
        %v891 = vld [vmem:[%s598 + $0x48] sm:$0xff]
        %v892 = vld [vmem:[%s598 + $0x50] sm:$0xff]
        %v893 = vld [vmem:[%s598 + $0x58] sm:$0xff]
        %v894 = vld [vmem:[%s598 + $0x60] sm:$0xff]
        %v895 = vld [vmem:[%s598 + $0x68] sm:$0xff]
        %v896 = vld [vmem:[%s598 + $0x70] sm:$0xff]
        %v897 = vld [vmem:[%s598 + $0x78] sm:$0xff]
        %v898 = vld [vmem:[%s598 + $0x80] sm:$0xff]
        %v899 = vld [vmem:[%s598 + $0x88] sm:$0xff]
        %v900 = vld [vmem:[%s598 + $0x90] sm:$0xff]
        %v901 = vld [vmem:[%s598 + $0x98] sm:$0xff]
        %v902 = vld [vmem:[%s598 + $0xa0] sm:$0xff]
        %v903 = vld [vmem:[%s598 + $0xa8] sm:$0xff]
        %v904 = vld [vmem:[%s598 + $0xb0] sm:$0xff]
        %v905 = vld [vmem:[%s598 + $0xb8] sm:$0xff]
        %v906 = vld [vmem:[%s598 + $0xc0] sm:$0xff]
        %v907 = vld [vmem:[%s598 + $0xc8] sm:$0xff]
        %v908 = vld [vmem:[%s598 + $0xd0] sm:$0xff]
        %v909 = vld [vmem:[%s598 + $0xd8] sm:$0xff]
        %v910 = vld [vmem:[%s598 + $0xe0] sm:$0xff]
        %v911 = vld [vmem:[%s598 + $0xe8] sm:$0xff]
        %v912 = vld [vmem:[%s598 + $0xf0] sm:$0xff]
        %v913 = vld [vmem:[%s598 + $0xf8] sm:$0xff]
        %v914 = vld [vmem:[%s603] sm:$0x3]
        %v915 = vlaneseq
        %v916 = vand.u32 %v915, 127
        %917 = vset.pattern.permute.xlu0 0
        %918 = vperm.xlu0 %917, %v882
        %v919 = vpop.permute.xlu0 %918
        %920 = vset.pattern.permute.xlu0 0
        %921 = vperm.xlu0 %920, %v883
        %v922 = vpop.permute.xlu0 %921
        %923 = vset.pattern.permute.xlu0 0
        %924 = vperm.xlu0 %923, %v884
        %v925 = vpop.permute.xlu0 %924
        %926 = vset.pattern.permute.xlu0 0
        %927 = vperm.xlu0 %926, %v885
        %v928 = vpop.permute.xlu0 %927
        %929 = vset.pattern.permute.xlu0 0
        %930 = vperm.xlu0 %929, %v886
        %v931 = vpop.permute.xlu0 %930
        %932 = vset.pattern.permute.xlu0 0
        %933 = vperm.xlu0 %932, %v887
        %v934 = vpop.permute.xlu0 %933
        %935 = vset.pattern.permute.xlu0 0
        %936 = vperm.xlu0 %935, %v888
        %v937 = vpop.permute.xlu0 %936
        %938 = vset.pattern.permute.xlu0 0
        %939 = vperm.xlu0 %938, %v889
        %v940 = vpop.permute.xlu0 %939
        %941 = vset.pattern.permute.xlu0 0
        %942 = vperm.xlu0 %941, %v890
        %v943 = vpop.permute.xlu0 %942
        %944 = vset.pattern.permute.xlu0 0
        %945 = vperm.xlu0 %944, %v891
        %v946 = vpop.permute.xlu0 %945
        %947 = vset.pattern.permute.xlu0 0
        %948 = vperm.xlu0 %947, %v892
        %v949 = vpop.permute.xlu0 %948
        %950 = vset.pattern.permute.xlu0 0
        %951 = vperm.xlu0 %950, %v893
        %v952 = vpop.permute.xlu0 %951
        %953 = vset.pattern.permute.xlu0 0
        %954 = vperm.xlu0 %953, %v894
        %v955 = vpop.permute.xlu0 %954
        %956 = vset.pattern.permute.xlu0 0
        %957 = vperm.xlu0 %956, %v895
        %v958 = vpop.permute.xlu0 %957
        %959 = vset.pattern.permute.xlu0 0
        %960 = vperm.xlu0 %959, %v896
        %v961 = vpop.permute.xlu0 %960
        %962 = vset.pattern.permute.xlu0 0
        %963 = vperm.xlu0 %962, %v897
        %v964 = vpop.permute.xlu0 %963
        %965 = vset.pattern.permute.xlu0 0
        %966 = vperm.xlu0 %965, %v898
        %v967 = vpop.permute.xlu0 %966
        %968 = vset.pattern.permute.xlu0 0
        %969 = vperm.xlu0 %968, %v899
        %v970 = vpop.permute.xlu0 %969
        %971 = vset.pattern.permute.xlu0 0
        %972 = vperm.xlu0 %971, %v900
        %v973 = vpop.permute.xlu0 %972
        %974 = vset.pattern.permute.xlu0 0
        %975 = vperm.xlu0 %974, %v901
        %v976 = vpop.permute.xlu0 %975
        %977 = vset.pattern.permute.xlu0 0
        %978 = vperm.xlu0 %977, %v902
        %v979 = vpop.permute.xlu0 %978
        %980 = vset.pattern.permute.xlu0 0
        %981 = vperm.xlu0 %980, %v903
        %v982 = vpop.permute.xlu0 %981
        %983 = vset.pattern.permute.xlu0 0
        %984 = vperm.xlu0 %983, %v904
        %v985 = vpop.permute.xlu0 %984
        %986 = vset.pattern.permute.xlu0 0
        %987 = vperm.xlu0 %986, %v905
        %v988 = vpop.permute.xlu0 %987
        %989 = vset.pattern.permute.xlu0 0
        %990 = vperm.xlu0 %989, %v906
        %v991 = vpop.permute.xlu0 %990
        %992 = vset.pattern.permute.xlu0 0
        %993 = vperm.xlu0 %992, %v907
        %v994 = vpop.permute.xlu0 %993
        %995 = vset.pattern.permute.xlu0 0
        %996 = vperm.xlu0 %995, %v908
        %v997 = vpop.permute.xlu0 %996
        %998 = vset.pattern.permute.xlu0 0
        %999 = vperm.xlu0 %998, %v909
        %v1000 = vpop.permute.xlu0 %999
        %1001 = vset.pattern.permute.xlu0 0
        %1002 = vperm.xlu0 %1001, %v910
        %v1003 = vpop.permute.xlu0 %1002
        %1004 = vset.pattern.permute.xlu0 0
        %1005 = vperm.xlu0 %1004, %v911
        %v1006 = vpop.permute.xlu0 %1005
        %1007 = vset.pattern.permute.xlu0 0
        %1008 = vperm.xlu0 %1007, %v912
        %v1009 = vpop.permute.xlu0 %1008
        %1010 = vset.pattern.permute.xlu0 0
        %1011 = vperm.xlu0 %1010, %v913
        %v1012 = vpop.permute.xlu0 %1011
        %vm1013 = vcmp.eq.s32.totalorder %v919, %v916
        %vm1014 = vcmp.eq.s32.totalorder %v922, %v916
        %vm1015 = vcmp.eq.s32.totalorder %v925, %v916
        %vm1016 = vcmp.eq.s32.totalorder %v928, %v916
        %vm1017 = vcmp.eq.s32.totalorder %v931, %v916
        %vm1018 = vcmp.eq.s32.totalorder %v934, %v916
        %vm1019 = vcmp.eq.s32.totalorder %v937, %v916
        %vm1020 = vcmp.eq.s32.totalorder %v940, %v916
        %vm1021 = vcmp.eq.s32.totalorder %v943, %v916
        %vm1022 = vcmp.eq.s32.totalorder %v946, %v916
        %vm1023 = vcmp.eq.s32.totalorder %v949, %v916
        %vm1024 = vcmp.eq.s32.totalorder %v952, %v916
        %vm1025 = vcmp.eq.s32.totalorder %v955, %v916
        %vm1026 = vcmp.eq.s32.totalorder %v958, %v916
        %vm1027 = vcmp.eq.s32.totalorder %v961, %v916
        %vm1028 = vcmp.eq.s32.totalorder %v964, %v916
        %vm1029 = vcmp.eq.s32.totalorder %v967, %v916
        %vm1030 = vcmp.eq.s32.totalorder %v970, %v916
        %vm1031 = vcmp.eq.s32.totalorder %v973, %v916
        %vm1032 = vcmp.eq.s32.totalorder %v976, %v916
        %vm1033 = vcmp.eq.s32.totalorder %v979, %v916
        %vm1034 = vcmp.eq.s32.totalorder %v982, %v916
        %vm1035 = vcmp.eq.s32.totalorder %v985, %v916
        %vm1036 = vcmp.eq.s32.totalorder %v988, %v916
        %vm1037 = vcmp.eq.s32.totalorder %v991, %v916
        %vm1038 = vcmp.eq.s32.totalorder %v994, %v916
        %vm1039 = vcmp.eq.s32.totalorder %v997, %v916
        %vm1040 = vcmp.eq.s32.totalorder %v1000, %v916
        %vm1041 = vcmp.eq.s32.totalorder %v1003, %v916
        %vm1042 = vcmp.eq.s32.totalorder %v1006, %v916
        %vm1043 = vcmp.eq.s32.totalorder %v1009, %v916
        %vm1044 = vcmp.eq.s32.totalorder %v1012, %v916
        %v1045 = vsel %vm1013, 1.0, 0.0
        %v1046 = vsel %vm1014, 1.0, 0.0
        %v1047 = vsel %vm1015, 1.0, 0.0
        %v1048 = vsel %vm1016, 1.0, 0.0
        %v1049 = vsel %vm1017, 1.0, 0.0
        %v1050 = vsel %vm1018, 1.0, 0.0
        %v1051 = vsel %vm1019, 1.0, 0.0
        %v1052 = vsel %vm1020, 1.0, 0.0
        %v1053 = vsel %vm1021, 1.0, 0.0
        %v1054 = vsel %vm1022, 1.0, 0.0
        %v1055 = vsel %vm1023, 1.0, 0.0
        %v1056 = vsel %vm1024, 1.0, 0.0
        %v1057 = vsel %vm1025, 1.0, 0.0
        %v1058 = vsel %vm1026, 1.0, 0.0
        %v1059 = vsel %vm1027, 1.0, 0.0
        %v1060 = vsel %vm1028, 1.0, 0.0
        %v1061 = vsel %vm1029, 1.0, 0.0
        %v1062 = vsel %vm1030, 1.0, 0.0
        %v1063 = vsel %vm1031, 1.0, 0.0
        %v1064 = vsel %vm1032, 1.0, 0.0
        %v1065 = vsel %vm1033, 1.0, 0.0
        %v1066 = vsel %vm1034, 1.0, 0.0
        %v1067 = vsel %vm1035, 1.0, 0.0
        %v1068 = vsel %vm1036, 1.0, 0.0
        %v1069 = vsel %vm1037, 1.0, 0.0
        %v1070 = vsel %vm1038, 1.0, 0.0
        %v1071 = vsel %vm1039, 1.0, 0.0
        %v1072 = vsel %vm1040, 1.0, 0.0
        %v1073 = vsel %vm1041, 1.0, 0.0
        %v1074 = vsel %vm1042, 1.0, 0.0
        %v1075 = vsel %vm1043, 1.0, 0.0
        %v1076 = vsel %vm1044, 1.0, 0.0
        %v1077 = vpack.c.bf16 %v1046, %v1045
        %v1078 = vpack.c.bf16 %v1048, %v1047
        %v1079 = vpack.c.bf16 %v1050, %v1049
        %v1080 = vpack.c.bf16 %v1052, %v1051
        %v1081 = vpack.c.bf16 %v1054, %v1053
        %v1082 = vpack.c.bf16 %v1056, %v1055
        %v1083 = vpack.c.bf16 %v1058, %v1057
        %v1084 = vpack.c.bf16 %v1060, %v1059
        %v1085 = vpack.c.bf16 %v1062, %v1061
        %v1086 = vpack.c.bf16 %v1064, %v1063
        %v1087 = vpack.c.bf16 %v1066, %v1065
        %v1088 = vpack.c.bf16 %v1068, %v1067
        %v1089 = vpack.c.bf16 %v1070, %v1069
        %v1090 = vpack.c.bf16 %v1072, %v1071
        %v1091 = vpack.c.bf16 %v1074, %v1073
        %v1092 = vpack.c.bf16 %v1076, %v1075
        %v1093 = vld [vmem:[#allocation4] sm:$0xff]
        %v1094 = vld [vmem:[#allocation4 + $0x8] sm:$0xff]
        %v1095 = vld [vmem:[#allocation4 + $0x10] sm:$0xff]
        %v1096 = vld [vmem:[#allocation4 + $0x18] sm:$0xff]
        %v1097 = vld [vmem:[#allocation4 + $0x20] sm:$0xff]
        %v1098 = vld [vmem:[#allocation4 + $0x28] sm:$0xff]
        %v1099 = vld [vmem:[#allocation4 + $0x30] sm:$0xff]
        %v1100 = vld [vmem:[#allocation4 + $0x38] sm:$0xff]
        %v1101 = vld [vmem:[%s609] sm:$0xff]
        %v1102 = vld [vmem:[%s609 + $0x8] sm:$0xff]
        %v1103 = vld [vmem:[%s609 + $0x10] sm:$0xff]
        %v1104 = vld [vmem:[%s609 + $0x18] sm:$0xff]
        %v1105 = vld [vmem:[%s609 + $0x20] sm:$0xff]
        %v1106 = vld [vmem:[%s609 + $0x28] sm:$0xff]
        %v1107 = vld [vmem:[%s609 + $0x30] sm:$0xff]
        %v1108 = vld [vmem:[%s609 + $0x38] sm:$0xff]
        %v1109 = vld [vmem:[%s609 + $0x40] sm:$0xff]
        %v1110 = vld [vmem:[%s609 + $0x48] sm:$0xff]
        %v1111 = vld [vmem:[%s609 + $0x50] sm:$0xff]
        %v1112 = vld [vmem:[%s609 + $0x58] sm:$0xff]
        %v1113 = vld [vmem:[%s609 + $0x60] sm:$0xff]
        %v1114 = vld [vmem:[%s609 + $0x68] sm:$0xff]
        %v1115 = vld [vmem:[%s609 + $0x70] sm:$0xff]
        %v1116 = vld [vmem:[%s609 + $0x78] sm:$0xff]
        %v1117 = vld [vmem:[%s609 + $0x80] sm:$0xff]
        %v1118 = vld [vmem:[%s609 + $0x88] sm:$0xff]
        %v1119 = vld [vmem:[%s609 + $0x90] sm:$0xff]
        %v1120 = vld [vmem:[%s609 + $0x98] sm:$0xff]
        %v1121 = vld [vmem:[%s609 + $0xa0] sm:$0xff]
        %v1122 = vld [vmem:[%s609 + $0xa8] sm:$0xff]
        %v1123 = vld [vmem:[%s609 + $0xb0] sm:$0xff]
        %v1124 = vld [vmem:[%s609 + $0xb8] sm:$0xff]
        %v1125 = vld [vmem:[%s609 + $0xc0] sm:$0xff]
        %v1126 = vld [vmem:[%s609 + $0xc8] sm:$0xff]
        %v1127 = vld [vmem:[%s609 + $0xd0] sm:$0xff]
        %v1128 = vld [vmem:[%s609 + $0xd8] sm:$0xff]
        %v1129 = vld [vmem:[%s609 + $0xe0] sm:$0xff]
        %v1130 = vld [vmem:[%s609 + $0xe8] sm:$0xff]
        %v1131 = vld [vmem:[%s609 + $0xf0] sm:$0xff]
        %v1132 = vld [vmem:[%s609 + $0xf8] sm:$0xff]
        %1133 = vmatprep.subr.bf16.mxu0 0
        %1134 = vmatpush1.bf16.msra.mxu0 %v1093
        %1135 = vmatprep.subr.bf16.mxu0 0
        %1136 = vmatpush1.bf16.msra.mxu0 %v1094
        %1137 = vmatprep.subr.bf16.mxu0 0
        %1138 = vmatpush1.bf16.msra.mxu0 %v1095
        %1139 = vmatprep.subr.bf16.mxu0 0
        %1140 = vmatpush1.bf16.msra.mxu0 %v1096
        %1141 = vmatprep.subr.bf16.mxu0 0
        %1142 = vmatpush1.bf16.msra.mxu0 %v1097
        %1143 = vmatprep.subr.bf16.mxu0 0
        %1144 = vmatpush1.bf16.msra.mxu0 %v1098
        %1145 = vmatprep.subr.bf16.mxu0 0
        %1146 = vmatpush1.bf16.msra.mxu0 %v1099
        %1147 = vmatprep.subr.bf16.mxu0 0
        %1148 = vmatpush1.bf16.msra.mxu0 %v1100
        %1149 = vmatprep.subr.bf16.mxu0 0
        %1150 = vmatpush1.bf16.msra.mxu0 0
        %1151 = vmatprep.subr.bf16.mxu0 0
        %1152 = vmatpush1.bf16.msra.mxu0 0
        %1153 = vmatprep.subr.bf16.mxu0 0
        %1154 = vmatpush1.bf16.msra.mxu0 0
        %1155 = vmatprep.subr.bf16.mxu0 0
        %1156 = vmatpush1.bf16.msra.mxu0 0
        %1157 = vmatprep.subr.bf16.mxu0 0
        %1158 = vmatpush1.bf16.msra.mxu0 0
        %1159 = vmatprep.subr.bf16.mxu0 0
        %1160 = vmatpush1.bf16.msra.mxu0 0
        %1161 = vmatprep.subr.bf16.mxu0 0
        %1162 = vmatpush1.bf16.msra.mxu0 0
        %1163 = vmatprep.subr.bf16.mxu0 0
        %1164 = vmatpush1.bf16.msra.mxu0 0
        %1165 = vmatprep.mubr.bf16.mxu0 0
        %1166 = vmatmul.mubr.bf16.gmra.mrb[0].mxu0 %v1077
        %v1167 = vpop.f32.mrb[0].mxu0
        %v1168 = vadd.f32 %v1101, %v1167
        %v1169 = vpop.f32.mrb[0].mxu0
        %v1170 = vpop.f32.mrb[0].mxu0
        %v1171 = vadd.f32 %v1102, %v1170
        %v1172 = vpop.f32.mrb[0].mxu0
        %1173 = vmatprep.mubr.bf16.mxu0 0
        %1174 = vmatmul.mubr.bf16.gmra.mrb[0].mxu0 %v1078
        %v1175 = vpop.f32.mrb[0].mxu0
        %v1176 = vadd.f32 %v1103, %v1175
        %v1177 = vpop.f32.mrb[0].mxu0
        %v1178 = vpop.f32.mrb[0].mxu0
        %v1179 = vadd.f32 %v1104, %v1178
        %v1180 = vpop.f32.mrb[0].mxu0
        %1181 = vmatprep.mubr.bf16.mxu0 0
        %1182 = vmatmul.mubr.bf16.gmra.mrb[0].mxu0 %v1079
        %v1183 = vpop.f32.mrb[0].mxu0
        %v1184 = vadd.f32 %v1105, %v1183
        %v1185 = vpop.f32.mrb[0].mxu0
        %v1186 = vpop.f32.mrb[0].mxu0
        %v1187 = vadd.f32 %v1106, %v1186
        %v1188 = vpop.f32.mrb[0].mxu0
        %1189 = vmatprep.mubr.bf16.mxu0 0
        %1190 = vmatmul.mubr.bf16.gmra.mrb[0].mxu0 %v1080
        %v1191 = vpop.f32.mrb[0].mxu0
        %v1192 = vadd.f32 %v1107, %v1191
        %v1193 = vpop.f32.mrb[0].mxu0
        %v1194 = vpop.f32.mrb[0].mxu0
        %v1195 = vadd.f32 %v1108, %v1194
        %v1196 = vpop.f32.mrb[0].mxu0
        %1197 = vmatprep.mubr.bf16.mxu0 0
        %1198 = vmatmul.mubr.bf16.gmra.mrb[0].mxu0 %v1081
        %v1199 = vpop.f32.mrb[0].mxu0
        %v1200 = vadd.f32 %v1109, %v1199
        %v1201 = vpop.f32.mrb[0].mxu0
        %v1202 = vpop.f32.mrb[0].mxu0
        %v1203 = vadd.f32 %v1110, %v1202
        %v1204 = vpop.f32.mrb[0].mxu0
        %1205 = vmatprep.mubr.bf16.mxu0 0
        %1206 = vmatmul.mubr.bf16.gmra.mrb[0].mxu0 %v1082
        %v1207 = vpop.f32.mrb[0].mxu0
        %v1208 = vadd.f32 %v1111, %v1207
        %v1209 = vpop.f32.mrb[0].mxu0
        %v1210 = vpop.f32.mrb[0].mxu0
        %v1211 = vadd.f32 %v1112, %v1210
        %v1212 = vpop.f32.mrb[0].mxu0
        %1213 = vmatprep.mubr.bf16.mxu0 0
        %1214 = vmatmul.mubr.bf16.gmra.mrb[0].mxu0 %v1083
        %v1215 = vpop.f32.mrb[0].mxu0
        %v1216 = vadd.f32 %v1113, %v1215
        %v1217 = vpop.f32.mrb[0].mxu0
        %v1218 = vpop.f32.mrb[0].mxu0
        %v1219 = vadd.f32 %v1114, %v1218
        %v1220 = vpop.f32.mrb[0].mxu0
        %1221 = vmatprep.mubr.bf16.mxu0 0
        %1222 = vmatmul.mubr.bf16.gmra.mrb[0].mxu0 %v1084
        %v1223 = vpop.f32.mrb[0].mxu0
        %v1224 = vadd.f32 %v1115, %v1223
        %v1225 = vpop.f32.mrb[0].mxu0
        %v1226 = vpop.f32.mrb[0].mxu0
        %v1227 = vadd.f32 %v1116, %v1226
        %v1228 = vpop.f32.mrb[0].mxu0
        %1229 = vmatprep.mubr.bf16.mxu0 0
        %1230 = vmatmul.mubr.bf16.gmra.mrb[0].mxu0 %v1085
        %v1231 = vpop.f32.mrb[0].mxu0
        %v1232 = vadd.f32 %v1117, %v1231
        %v1233 = vpop.f32.mrb[0].mxu0
        %v1234 = vpop.f32.mrb[0].mxu0
        %v1235 = vadd.f32 %v1118, %v1234
        %v1236 = vpop.f32.mrb[0].mxu0
        %1237 = vmatprep.mubr.bf16.mxu0 0
        %1238 = vmatmul.mubr.bf16.gmra.mrb[0].mxu0 %v1086
        %v1239 = vpop.f32.mrb[0].mxu0
        %v1240 = vadd.f32 %v1119, %v1239
        %v1241 = vpop.f32.mrb[0].mxu0
        %v1242 = vpop.f32.mrb[0].mxu0
        %v1243 = vadd.f32 %v1120, %v1242
        %v1244 = vpop.f32.mrb[0].mxu0
        %1245 = vmatprep.mubr.bf16.mxu0 0
        %1246 = vmatmul.mubr.bf16.gmra.mrb[0].mxu0 %v1087
        %v1247 = vpop.f32.mrb[0].mxu0
        %v1248 = vadd.f32 %v1121, %v1247
        %v1249 = vpop.f32.mrb[0].mxu0
        %v1250 = vpop.f32.mrb[0].mxu0
        %v1251 = vadd.f32 %v1122, %v1250
        %v1252 = vpop.f32.mrb[0].mxu0
        %1253 = vmatprep.mubr.bf16.mxu0 0
        %1254 = vmatmul.mubr.bf16.gmra.mrb[0].mxu0 %v1088
        %v1255 = vpop.f32.mrb[0].mxu0
        %v1256 = vadd.f32 %v1123, %v1255
        %v1257 = vpop.f32.mrb[0].mxu0
        %v1258 = vpop.f32.mrb[0].mxu0
        %v1259 = vadd.f32 %v1124, %v1258
        %v1260 = vpop.f32.mrb[0].mxu0
        %1261 = vmatprep.mubr.bf16.mxu0 0
        %1262 = vmatmul.mubr.bf16.gmra.mrb[0].mxu0 %v1089
        %v1263 = vpop.f32.mrb[0].mxu0
        %v1264 = vadd.f32 %v1125, %v1263
        %v1265 = vpop.f32.mrb[0].mxu0
        %v1266 = vpop.f32.mrb[0].mxu0
        %v1267 = vadd.f32 %v1126, %v1266
        %v1268 = vpop.f32.mrb[0].mxu0
        %1269 = vmatprep.mubr.bf16.mxu0 0
        %1270 = vmatmul.mubr.bf16.gmra.mrb[0].mxu0 %v1090
        %v1271 = vpop.f32.mrb[0].mxu0
        %v1272 = vadd.f32 %v1127, %v1271
        %v1273 = vpop.f32.mrb[0].mxu0
        %v1274 = vpop.f32.mrb[0].mxu0
        %v1275 = vadd.f32 %v1128, %v1274
        %v1276 = vpop.f32.mrb[0].mxu0
        %1277 = vmatprep.mubr.bf16.mxu0 0
        %1278 = vmatmul.mubr.bf16.gmra.mrb[0].mxu0 %v1091
        %v1279 = vpop.f32.mrb[0].mxu0
        %v1280 = vadd.f32 %v1129, %v1279
        %v1281 = vpop.f32.mrb[0].mxu0
        %v1282 = vpop.f32.mrb[0].mxu0
        %v1283 = vadd.f32 %v1130, %v1282
        %v1284 = vpop.f32.mrb[0].mxu0
        %1285 = vmatprep.mubr.bf16.mxu0 0
        %1286 = vmatmul.mubr.bf16.gmra.mrb[0].mxu0 %v1092
        %v1287 = vpop.f32.mrb[0].mxu0
        %v1288 = vadd.f32 %v1131, %v1287
        %v1289 = vpop.f32.mrb[0].mxu0
        %v1290 = vpop.f32.mrb[0].mxu0
        %v1291 = vadd.f32 %v1132, %v1290
        %v1292 = vpop.f32.mrb[0].mxu0
        %1293 = vdwg.mxu0
        %v1294 = vmax.f32 %v1168, 0.0
        %v1295 = vmax.f32 %v1171, 0.0
        %v1296 = vmax.f32 %v1176, 0.0
        %v1297 = vmax.f32 %v1179, 0.0
        %v1298 = vmax.f32 %v1184, 0.0
        %v1299 = vmax.f32 %v1187, 0.0
        %v1300 = vmax.f32 %v1192, 0.0
        %v1301 = vmax.f32 %v1195, 0.0
        %v1302 = vmax.f32 %v1200, 0.0
        %v1303 = vmax.f32 %v1203, 0.0
        %v1304 = vmax.f32 %v1208, 0.0
        %v1305 = vmax.f32 %v1211, 0.0
        %v1306 = vmax.f32 %v1216, 0.0
        %v1307 = vmax.f32 %v1219, 0.0
        %v1308 = vmax.f32 %v1224, 0.0
        %v1309 = vmax.f32 %v1227, 0.0
        %v1310 = vmax.f32 %v1232, 0.0
        %v1311 = vmax.f32 %v1235, 0.0
        %v1312 = vmax.f32 %v1240, 0.0
        %v1313 = vmax.f32 %v1243, 0.0
        %v1314 = vmax.f32 %v1248, 0.0
        %v1315 = vmax.f32 %v1251, 0.0
        %v1316 = vmax.f32 %v1256, 0.0
        %v1317 = vmax.f32 %v1259, 0.0
        %v1318 = vmax.f32 %v1264, 0.0
        %v1319 = vmax.f32 %v1267, 0.0
        %v1320 = vmax.f32 %v1272, 0.0
        %v1321 = vmax.f32 %v1275, 0.0
        %v1322 = vmax.f32 %v1280, 0.0
        %v1323 = vmax.f32 %v1283, 0.0
        %v1324 = vmax.f32 %v1288, 0.0
        %v1325 = vmax.f32 %v1291, 0.0
        %v1326 = vadd.f32 %v1294, 1e-07
        %v1327 = vadd.f32 %v1295, 1e-07
        %v1328 = vadd.f32 %v1296, 1e-07
        %v1329 = vadd.f32 %v1297, 1e-07
        %v1330 = vadd.f32 %v1298, 1e-07
        %v1331 = vadd.f32 %v1299, 1e-07
        %v1332 = vadd.f32 %v1300, 1e-07
        %v1333 = vadd.f32 %v1301, 1e-07
        %v1334 = vadd.f32 %v1302, 1e-07
        %v1335 = vadd.f32 %v1303, 1e-07
        %v1336 = vadd.f32 %v1304, 1e-07
        %v1337 = vadd.f32 %v1305, 1e-07
        %v1338 = vadd.f32 %v1306, 1e-07
        %v1339 = vadd.f32 %v1307, 1e-07
        %v1340 = vadd.f32 %v1308, 1e-07
        %v1341 = vadd.f32 %v1309, 1e-07
        %v1342 = vadd.f32 %v1310, 1e-07
        %v1343 = vadd.f32 %v1311, 1e-07
        %v1344 = vadd.f32 %v1312, 1e-07
        %v1345 = vadd.f32 %v1313, 1e-07
        %v1346 = vadd.f32 %v1314, 1e-07
        %v1347 = vadd.f32 %v1315, 1e-07
        %v1348 = vadd.f32 %v1316, 1e-07
        %v1349 = vadd.f32 %v1317, 1e-07
        %v1350 = vadd.f32 %v1318, 1e-07
        %v1351 = vadd.f32 %v1319, 1e-07
        %v1352 = vadd.f32 %v1320, 1e-07
        %v1353 = vadd.f32 %v1321, 1e-07
        %v1354 = vadd.f32 %v1322, 1e-07
        %v1355 = vadd.f32 %v1323, 1e-07
        %v1356 = vadd.f32 %v1324, 1e-07
        %v1357 = vadd.f32 %v1325, 1e-07
        %v1358 = vld [vmem:[#allocation6] sm:$0x1]
        %v1360 = vlaneseq
        %v1361 = vshrl.u32 %v1360, 7
        %v1362 = vsub.s32 0, %v1361
        %v1363 = vrot.slane %v1358, %v1362
        %v1365 = vsub.f32 %v1326, %v1363
        %v1366 = vsub.f32 %v1327, %v1363
        %v1367 = vsub.f32 %v1328, %v1363
        %v1368 = vsub.f32 %v1329, %v1363
        %v1369 = vsub.f32 %v1330, %v1363
        %v1370 = vsub.f32 %v1331, %v1363
        %v1371 = vsub.f32 %v1332, %v1363
        %v1372 = vsub.f32 %v1333, %v1363
        %v1373 = vsub.f32 %v1334, %v1363
        %v1374 = vsub.f32 %v1335, %v1363
        %v1375 = vsub.f32 %v1336, %v1363
        %v1376 = vsub.f32 %v1337, %v1363
        %v1377 = vsub.f32 %v1338, %v1363
        %v1378 = vsub.f32 %v1339, %v1363
        %v1379 = vsub.f32 %v1340, %v1363
        %v1380 = vsub.f32 %v1341, %v1363
        %v1381 = vsub.f32 %v1342, %v1363
        %v1382 = vsub.f32 %v1343, %v1363
        %v1383 = vsub.f32 %v1344, %v1363
        %v1384 = vsub.f32 %v1345, %v1363
        %v1385 = vsub.f32 %v1346, %v1363
        %v1386 = vsub.f32 %v1347, %v1363
        %v1387 = vsub.f32 %v1348, %v1363
        %v1388 = vsub.f32 %v1349, %v1363
        %v1389 = vsub.f32 %v1350, %v1363
        %v1390 = vsub.f32 %v1351, %v1363
        %v1391 = vsub.f32 %v1352, %v1363
        %v1392 = vsub.f32 %v1353, %v1363
        %v1393 = vsub.f32 %v1354, %v1363
        %v1394 = vsub.f32 %v1355, %v1363
        %v1395 = vsub.f32 %v1356, %v1363
        %v1396 = vsub.f32 %v1357, %v1363
        %v1397 = vmul.f32 %v1365, 1.442695
        %v1398 = vpow.pop %v1397
        %v1399 = vmul.f32 %v1366, 1.442695
        %v1400 = vpow.pop %v1399
        %v1401 = vmul.f32 %v1367, 1.442695
        %v1402 = vpow.pop %v1401
        %v1403 = vmul.f32 %v1368, 1.442695
        %v1404 = vpow.pop %v1403
        %v1405 = vmul.f32 %v1369, 1.442695
        %v1406 = vpow.pop %v1405
        %v1407 = vmul.f32 %v1370, 1.442695
        %v1408 = vpow.pop %v1407
        %v1409 = vmul.f32 %v1371, 1.442695
        %v1410 = vpow.pop %v1409
        %v1411 = vmul.f32 %v1372, 1.442695
        %v1412 = vpow.pop %v1411
        %v1413 = vmul.f32 %v1373, 1.442695
        %v1414 = vpow.pop %v1413
        %v1415 = vmul.f32 %v1374, 1.442695
        %v1416 = vpow.pop %v1415
        %v1417 = vmul.f32 %v1375, 1.442695
        %v1418 = vpow.pop %v1417
        %v1419 = vmul.f32 %v1376, 1.442695
        %v1420 = vpow.pop %v1419
        %v1421 = vmul.f32 %v1377, 1.442695
        %v1422 = vpow.pop %v1421
        %v1423 = vmul.f32 %v1378, 1.442695
        %v1424 = vpow.pop %v1423
        %v1425 = vmul.f32 %v1379, 1.442695
        %v1426 = vpow.pop %v1425
        %v1427 = vmul.f32 %v1380, 1.442695
        %v1428 = vpow.pop %v1427
        %v1429 = vmul.f32 %v1381, 1.442695
        %v1430 = vpow.pop %v1429
        %v1431 = vmul.f32 %v1382, 1.442695
        %v1432 = vpow.pop %v1431
        %v1433 = vmul.f32 %v1383, 1.442695
        %v1434 = vpow.pop %v1433
        %v1435 = vmul.f32 %v1384, 1.442695
        %v1436 = vpow.pop %v1435
        %v1437 = vmul.f32 %v1385, 1.442695
        %v1438 = vpow.pop %v1437
        %v1439 = vmul.f32 %v1386, 1.442695
        %v1440 = vpow.pop %v1439
        %v1441 = vmul.f32 %v1387, 1.442695
        %v1442 = vpow.pop %v1441
        %v1443 = vmul.f32 %v1388, 1.442695
        %v1444 = vpow.pop %v1443
        %v1445 = vmul.f32 %v1389, 1.442695
        %v1446 = vpow.pop %v1445
        %v1447 = vmul.f32 %v1390, 1.442695
        %v1448 = vpow.pop %v1447
        %v1449 = vmul.f32 %v1391, 1.442695
        %v1450 = vpow.pop %v1449
        %v1451 = vmul.f32 %v1392, 1.442695
        %v1452 = vpow.pop %v1451
        %v1453 = vmul.f32 %v1393, 1.442695
        %v1454 = vpow.pop %v1453
        %v1455 = vmul.f32 %v1394, 1.442695
        %v1456 = vpow.pop %v1455
        %v1457 = vmul.f32 %v1395, 1.442695
        %v1458 = vpow.pop %v1457
        %v1459 = vmul.f32 %v1396, 1.442695
        %v1460 = vpow.pop %v1459
        %v1461 = vmul.f32 %v1326, %v1398
        %v1462 = vmul.f32 %v1327, %v1400
        %v1463 = vmul.f32 %v1328, %v1402
        %v1464 = vmul.f32 %v1329, %v1404
        %v1465 = vmul.f32 %v1330, %v1406
        %v1466 = vmul.f32 %v1331, %v1408
        %v1467 = vmul.f32 %v1332, %v1410
        %v1468 = vmul.f32 %v1333, %v1412
        %v1469 = vmul.f32 %v1334, %v1414
        %v1470 = vmul.f32 %v1335, %v1416
        %v1471 = vmul.f32 %v1336, %v1418
        %v1472 = vmul.f32 %v1337, %v1420
        %v1473 = vmul.f32 %v1338, %v1422
        %v1474 = vmul.f32 %v1339, %v1424
        %v1475 = vmul.f32 %v1340, %v1426
        %v1476 = vmul.f32 %v1341, %v1428
        %v1477 = vmul.f32 %v1342, %v1430
        %v1478 = vmul.f32 %v1343, %v1432
        %v1479 = vmul.f32 %v1344, %v1434
        %v1480 = vmul.f32 %v1345, %v1436
        %v1481 = vmul.f32 %v1346, %v1438
        %v1482 = vmul.f32 %v1347, %v1440
        %v1483 = vmul.f32 %v1348, %v1442
        %v1484 = vmul.f32 %v1349, %v1444
        %v1485 = vmul.f32 %v1350, %v1446
        %v1486 = vmul.f32 %v1351, %v1448
        %v1487 = vmul.f32 %v1352, %v1450
        %v1488 = vmul.f32 %v1353, %v1452
        %v1489 = vmul.f32 %v1354, %v1454
        %v1490 = vmul.f32 %v1355, %v1456
        %v1491 = vmul.f32 %v1356, %v1458
        %v1492 = vmul.f32 %v1357, %v1460
        %v1493 = vpack.c.bf16 %v1400, %v1398
        %v1494 = vpack.c.bf16 %v1462, %v1461
        %v1495 = vpack.c.bf16 %v1404, %v1402
        %v1496 = vpack.c.bf16 %v1464, %v1463
        %v1497 = vpack.c.bf16 %v1408, %v1406
        %v1498 = vpack.c.bf16 %v1466, %v1465
        %v1499 = vpack.c.bf16 %v1412, %v1410
        %v1500 = vpack.c.bf16 %v1468, %v1467
        %v1501 = vpack.c.bf16 %v1416, %v1414
        %v1502 = vpack.c.bf16 %v1470, %v1469
        %v1503 = vpack.c.bf16 %v1420, %v1418
        %v1504 = vpack.c.bf16 %v1472, %v1471
        %v1505 = vpack.c.bf16 %v1424, %v1422
        %v1506 = vpack.c.bf16 %v1474, %v1473
        %v1507 = vpack.c.bf16 %v1428, %v1426
        %v1508 = vpack.c.bf16 %v1476, %v1475
        %v1509 = vpack.c.bf16 %v1432, %v1430
        %v1510 = vpack.c.bf16 %v1478, %v1477
        %v1511 = vpack.c.bf16 %v1436, %v1434
        %v1512 = vpack.c.bf16 %v1480, %v1479
        %v1513 = vpack.c.bf16 %v1440, %v1438
        %v1514 = vpack.c.bf16 %v1482, %v1481
        %v1515 = vpack.c.bf16 %v1444, %v1442
        %v1516 = vpack.c.bf16 %v1484, %v1483
        %v1517 = vpack.c.bf16 %v1448, %v1446
        %v1518 = vpack.c.bf16 %v1486, %v1485
        %v1519 = vpack.c.bf16 %v1452, %v1450
        %v1520 = vpack.c.bf16 %v1488, %v1487
        %v1521 = vpack.c.bf16 %v1456, %v1454
        %v1522 = vpack.c.bf16 %v1490, %v1489
        %v1523 = vpack.c.bf16 %v1460, %v1458
        %v1524 = vpack.c.bf16 %v1492, %v1491
        %v1525 = vlaneseq
        %v1526 = vshrl.u32 %v1525, 7
        %v1527 = vadd.s32 %v1526, 8
        %v1528 = vadd.s32 %v1526, 16
        %v1529 = vadd.s32 %v1526, 24
        %v1530 = vadd.s32 %v1526, 32
        %v1531 = vadd.s32 %v1526, 40
        %v1532 = vadd.s32 %v1526, 48
        %v1533 = vadd.s32 %v1526, 56
        %v1534 = vadd.s32 %v1526, 64
        %v1535 = vadd.s32 %v1526, 72
        %v1536 = vadd.s32 %v1526, 80
        %v1537 = vadd.s32 %v1526, 88
        %v1538 = vadd.s32 %v1526, 96
        %v1539 = vadd.s32 %v1526, 104
        %v1540 = vadd.s32 %v1526, 112
        %v1541 = vadd.s32 %v1526, 120
        %v1542 = vlaneseq
        %v1543 = vshrl.u32 %v1542, 7
        %v1544 = vsub.s32 0, %v1543
        %v1545 = vrot.slane %v914, %v1544
        %v1546 = vlaneseq
        %v1547 = vshrl.u32 %v1546, 7
        %v1548 = vsub.s32 1, %v1547
        %v1549 = vrot.slane %v914, %v1548
        %vm1550 = vcmp.eq.s32.totalorder %v1526, %v1545
        %vm1551 = vcmp.eq.s32.totalorder %v1526, %v1549
        %vm1552 = vcmp.eq.s32.totalorder %v1527, %v1545
        %vm1553 = vcmp.eq.s32.totalorder %v1527, %v1549
        %vm1554 = vcmp.eq.s32.totalorder %v1528, %v1545
        %vm1555 = vcmp.eq.s32.totalorder %v1528, %v1549
        %vm1556 = vcmp.eq.s32.totalorder %v1529, %v1545
        %vm1557 = vcmp.eq.s32.totalorder %v1529, %v1549
        %vm1558 = vcmp.eq.s32.totalorder %v1530, %v1545
        %vm1559 = vcmp.eq.s32.totalorder %v1530, %v1549
        %vm1560 = vcmp.eq.s32.totalorder %v1531, %v1545
        %vm1561 = vcmp.eq.s32.totalorder %v1531, %v1549
        %vm1562 = vcmp.eq.s32.totalorder %v1532, %v1545
        %vm1563 = vcmp.eq.s32.totalorder %v1532, %v1549
        %vm1564 = vcmp.eq.s32.totalorder %v1533, %v1545
        %vm1565 = vcmp.eq.s32.totalorder %v1533, %v1549
        %vm1566 = vcmp.eq.s32.totalorder %v1534, %v1545
        %vm1567 = vcmp.eq.s32.totalorder %v1534, %v1549
        %vm1568 = vcmp.eq.s32.totalorder %v1535, %v1545
        %vm1569 = vcmp.eq.s32.totalorder %v1535, %v1549
        %vm1570 = vcmp.eq.s32.totalorder %v1536, %v1545
        %vm1571 = vcmp.eq.s32.totalorder %v1536, %v1549
        %vm1572 = vcmp.eq.s32.totalorder %v1537, %v1545
        %vm1573 = vcmp.eq.s32.totalorder %v1537, %v1549
        %vm1574 = vcmp.eq.s32.totalorder %v1538, %v1545
        %vm1575 = vcmp.eq.s32.totalorder %v1538, %v1549
        %vm1576 = vcmp.eq.s32.totalorder %v1539, %v1545
        %vm1577 = vcmp.eq.s32.totalorder %v1539, %v1549
        %vm1578 = vcmp.eq.s32.totalorder %v1540, %v1545
        %vm1579 = vcmp.eq.s32.totalorder %v1540, %v1549
        %vm1580 = vcmp.eq.s32.totalorder %v1541, %v1545
        %vm1581 = vcmp.eq.s32.totalorder %v1541, %v1549
        %v1582 = vsel %vm1550, 1.0, 0.0
        %v1583 = vsel %vm1551, 1.0, 0.0
        %v1584 = vsel %vm1552, 1.0, 0.0
        %v1585 = vsel %vm1553, 1.0, 0.0
        %v1586 = vsel %vm1554, 1.0, 0.0
        %v1587 = vsel %vm1555, 1.0, 0.0
        %v1588 = vsel %vm1556, 1.0, 0.0
        %v1589 = vsel %vm1557, 1.0, 0.0
        %v1590 = vsel %vm1558, 1.0, 0.0
        %v1591 = vsel %vm1559, 1.0, 0.0
        %v1592 = vsel %vm1560, 1.0, 0.0
        %v1593 = vsel %vm1561, 1.0, 0.0
        %v1594 = vsel %vm1562, 1.0, 0.0
        %v1595 = vsel %vm1563, 1.0, 0.0
        %v1596 = vsel %vm1564, 1.0, 0.0
        %v1597 = vsel %vm1565, 1.0, 0.0
        %v1598 = vsel %vm1566, 1.0, 0.0
        %v1599 = vsel %vm1567, 1.0, 0.0
        %v1600 = vsel %vm1568, 1.0, 0.0
        %v1601 = vsel %vm1569, 1.0, 0.0
        %v1602 = vsel %vm1570, 1.0, 0.0
        %v1603 = vsel %vm1571, 1.0, 0.0
        %v1604 = vsel %vm1572, 1.0, 0.0
        %v1605 = vsel %vm1573, 1.0, 0.0
        %v1606 = vsel %vm1574, 1.0, 0.0
        %v1607 = vsel %vm1575, 1.0, 0.0
        %v1608 = vsel %vm1576, 1.0, 0.0
        %v1609 = vsel %vm1577, 1.0, 0.0
        %v1610 = vsel %vm1578, 1.0, 0.0
        %v1611 = vsel %vm1579, 1.0, 0.0
        %v1612 = vsel %vm1580, 1.0, 0.0
        %v1613 = vsel %vm1581, 1.0, 0.0
        %v1614 = vpack.c.bf16 %v1584, %v1582
        %v1615 = vpack.c.bf16 %v1585, %v1583
        %v1616 = vpack.c.bf16 %v1588, %v1586
        %v1617 = vpack.c.bf16 %v1589, %v1587
        %v1618 = vpack.c.bf16 %v1592, %v1590
        %v1619 = vpack.c.bf16 %v1593, %v1591
        %v1620 = vpack.c.bf16 %v1596, %v1594
        %v1621 = vpack.c.bf16 %v1597, %v1595
        %v1622 = vpack.c.bf16 %v1600, %v1598
        %v1623 = vpack.c.bf16 %v1601, %v1599
        %v1624 = vpack.c.bf16 %v1604, %v1602
        %v1625 = vpack.c.bf16 %v1605, %v1603
        %v1626 = vpack.c.bf16 %v1608, %v1606
        %v1627 = vpack.c.bf16 %v1609, %v1607
        %v1628 = vpack.c.bf16 %v1612, %v1610
        %v1629 = vpack.c.bf16 %v1613, %v1611
        %v1630 = vld [vmem:[#allocation5] sm:$0xff]
        %v1631 = vld [vmem:[#allocation5 + $0x8] sm:$0xff]
        %v1632 = vld [vmem:[#allocation5 + $0x10] sm:$0xff]
        %v1633 = vld [vmem:[#allocation5 + $0x18] sm:$0xff]
        %v1634 = vld [vmem:[#allocation5 + $0x20] sm:$0xff]
        %v1635 = vld [vmem:[#allocation5 + $0x28] sm:$0xff]
        %v1636 = vld [vmem:[#allocation5 + $0x30] sm:$0xff]
        %v1637 = vld [vmem:[#allocation5 + $0x38] sm:$0xff]
        %v1638 = vld [vmem:[#allocation5 + $0x40] sm:$0xff]
        %v1639 = vld [vmem:[#allocation5 + $0x48] sm:$0xff]
        %v1640 = vld [vmem:[#allocation5 + $0x50] sm:$0xff]
        %v1641 = vld [vmem:[#allocation5 + $0x58] sm:$0xff]
        %v1642 = vld [vmem:[#allocation5 + $0x60] sm:$0xff]
        %v1643 = vld [vmem:[#allocation5 + $0x68] sm:$0xff]
        %v1644 = vld [vmem:[#allocation5 + $0x70] sm:$0xff]
        %v1645 = vld [vmem:[#allocation5 + $0x78] sm:$0xff]
        %v1646 = vld [vmem:[#allocation5 + $0x80] sm:$0xff]
        %v1647 = vld [vmem:[#allocation5 + $0x88] sm:$0xff]
        %v1648 = vld [vmem:[#allocation5 + $0x90] sm:$0xff]
        %v1649 = vld [vmem:[#allocation5 + $0x98] sm:$0xff]
        %v1650 = vld [vmem:[#allocation5 + $0xa0] sm:$0xff]
        %v1651 = vld [vmem:[#allocation5 + $0xa8] sm:$0xff]
        %v1652 = vld [vmem:[#allocation5 + $0xb0] sm:$0xff]
        %v1653 = vld [vmem:[#allocation5 + $0xb8] sm:$0xff]
        %v1654 = vld [vmem:[#allocation5 + $0xc0] sm:$0xff]
        %v1655 = vld [vmem:[#allocation5 + $0xc8] sm:$0xff]
        %v1656 = vld [vmem:[#allocation5 + $0xd0] sm:$0xff]
        %v1657 = vld [vmem:[#allocation5 + $0xd8] sm:$0xff]
        %v1658 = vld [vmem:[#allocation5 + $0xe0] sm:$0xff]
        %v1659 = vld [vmem:[#allocation5 + $0xe8] sm:$0xff]
        %v1660 = vld [vmem:[#allocation5 + $0xf0] sm:$0xff]
        %v1661 = vld [vmem:[#allocation5 + $0xf8] sm:$0xff]
        %1662 = vmatprep.subr.bf16.mxu0 %v1494
        %1663 = vmatpush1.bf16.msra.mxu0 %v1493
        %1664 = vmatprep.subr.bf16.mxu0 %v1496
        %1665 = vmatpush1.bf16.msra.mxu0 %v1495
        %1666 = vmatprep.subr.bf16.mxu0 %v1498
        %1667 = vmatpush1.bf16.msra.mxu0 %v1497
        %1668 = vmatprep.subr.bf16.mxu0 %v1500
        %1669 = vmatpush1.bf16.msra.mxu0 %v1499
        %1670 = vmatprep.subr.bf16.mxu0 %v1502
        %1671 = vmatpush1.bf16.msra.mxu0 %v1501
        %1672 = vmatprep.subr.bf16.mxu0 %v1504
        %1673 = vmatpush1.bf16.msra.mxu0 %v1503
        %1674 = vmatprep.subr.bf16.mxu0 %v1506
        %1675 = vmatpush1.bf16.msra.mxu0 %v1505
        %1676 = vmatprep.subr.bf16.mxu0 %v1508
        %1677 = vmatpush1.bf16.msra.mxu0 %v1507
        %1678 = vmatprep.subr.bf16.mxu0 %v1510
        %1679 = vmatpush1.bf16.msra.mxu0 %v1509
        %1680 = vmatprep.subr.bf16.mxu0 %v1512
        %1681 = vmatpush1.bf16.msra.mxu0 %v1511
        %1682 = vmatprep.subr.bf16.mxu0 %v1514
        %1683 = vmatpush1.bf16.msra.mxu0 %v1513
        %1684 = vmatprep.subr.bf16.mxu0 %v1516
        %1685 = vmatpush1.bf16.msra.mxu0 %v1515
        %1686 = vmatprep.subr.bf16.mxu0 %v1518
        %1687 = vmatpush1.bf16.msra.mxu0 %v1517
        %1688 = vmatprep.subr.bf16.mxu0 %v1520
        %1689 = vmatpush1.bf16.msra.mxu0 %v1519
        %1690 = vmatprep.subr.bf16.mxu0 %v1522
        %1691 = vmatpush1.bf16.msra.mxu0 %v1521
        %1692 = vmatprep.subr.bf16.mxu0 %v1524
        %1693 = vmatpush1.bf16.msra.mxu0 %v1523
        %1694 = vmatprep.mubr.bf16.mxu0 %v1615
        %1695 = vmatmul.mubr.bf16.gmra.mrb[0].mxu0 %v1614
        %v1696 = vpop.f32.mrb[0].mxu0
        %v1697 = vadd.f32 0.0, %v1696
        %v1698 = vpop.f32.mrb[0].mxu0
        %v1699 = vadd.f32 0.0, %v1698
        %v1700 = vpop.f32.mrb[0].mxu0
        %v1701 = vadd.f32 0.0, %v1700
        %v1702 = vpop.f32.mrb[0].mxu0
        %v1703 = vadd.f32 0.0, %v1702
        %1704 = vmatprep.mubr.bf16.mxu0 %v1617
        %1705 = vmatmul.mubr.bf16.gmra.mrb[0].mxu0 %v1616
        %v1706 = vpop.f32.mrb[0].mxu0
        %v1707 = vadd.f32 0.0, %v1706
        %v1708 = vpop.f32.mrb[0].mxu0
        %v1709 = vadd.f32 0.0, %v1708
        %v1710 = vpop.f32.mrb[0].mxu0
        %v1711 = vadd.f32 0.0, %v1710
        %v1712 = vpop.f32.mrb[0].mxu0
        %v1713 = vadd.f32 0.0, %v1712
        %1714 = vmatprep.mubr.bf16.mxu0 %v1619
        %1715 = vmatmul.mubr.bf16.gmra.mrb[0].mxu0 %v1618
        %v1716 = vpop.f32.mrb[0].mxu0
        %v1717 = vadd.f32 0.0, %v1716
        %v1718 = vpop.f32.mrb[0].mxu0
        %v1719 = vadd.f32 0.0, %v1718
        %v1720 = vpop.f32.mrb[0].mxu0
        %v1721 = vadd.f32 0.0, %v1720
        %v1722 = vpop.f32.mrb[0].mxu0
        %v1723 = vadd.f32 0.0, %v1722
        %1724 = vmatprep.mubr.bf16.mxu0 %v1621
        %1725 = vmatmul.mubr.bf16.gmra.mrb[0].mxu0 %v1620
        %v1726 = vpop.f32.mrb[0].mxu0
        %v1727 = vadd.f32 0.0, %v1726
        %v1728 = vpop.f32.mrb[0].mxu0
        %v1729 = vadd.f32 0.0, %v1728
        %v1730 = vpop.f32.mrb[0].mxu0
        %v1731 = vadd.f32 0.0, %v1730
        %v1732 = vpop.f32.mrb[0].mxu0
        %v1733 = vadd.f32 0.0, %v1732
        %1734 = vmatprep.mubr.bf16.mxu0 %v1623
        %1735 = vmatmul.mubr.bf16.gmra.mrb[0].mxu0 %v1622
        %v1736 = vpop.f32.mrb[0].mxu0
        %v1737 = vadd.f32 0.0, %v1736
        %v1738 = vpop.f32.mrb[0].mxu0
        %v1739 = vadd.f32 0.0, %v1738
        %v1740 = vpop.f32.mrb[0].mxu0
        %v1741 = vadd.f32 0.0, %v1740
        %v1742 = vpop.f32.mrb[0].mxu0
        %v1743 = vadd.f32 0.0, %v1742
        %1744 = vmatprep.mubr.bf16.mxu0 %v1625
        %1745 = vmatmul.mubr.bf16.gmra.mrb[0].mxu0 %v1624
        %v1746 = vpop.f32.mrb[0].mxu0
        %v1747 = vadd.f32 0.0, %v1746
        %v1748 = vpop.f32.mrb[0].mxu0
        %v1749 = vadd.f32 0.0, %v1748
        %v1750 = vpop.f32.mrb[0].mxu0
        %v1751 = vadd.f32 0.0, %v1750
        %v1752 = vpop.f32.mrb[0].mxu0
        %v1753 = vadd.f32 0.0, %v1752
        %1754 = vmatprep.mubr.bf16.mxu0 %v1627
        %1755 = vmatmul.mubr.bf16.gmra.mrb[0].mxu0 %v1626
        %v1756 = vpop.f32.mrb[0].mxu0
        %v1757 = vadd.f32 0.0, %v1756
        %v1758 = vpop.f32.mrb[0].mxu0
        %v1759 = vadd.f32 0.0, %v1758
        %v1760 = vpop.f32.mrb[0].mxu0
        %v1761 = vadd.f32 0.0, %v1760
        %v1762 = vpop.f32.mrb[0].mxu0
        %v1763 = vadd.f32 0.0, %v1762
        %1764 = vmatprep.mubr.bf16.mxu0 %v1629
        %1765 = vmatmul.mubr.bf16.gmra.mrb[0].mxu0 %v1628
        %v1766 = vpop.f32.mrb[0].mxu0
        %v1767 = vadd.f32 0.0, %v1766
        %v1768 = vpop.f32.mrb[0].mxu0
        %v1769 = vadd.f32 0.0, %v1768
        %v1770 = vpop.f32.mrb[0].mxu0
        %v1771 = vadd.f32 0.0, %v1770
        %v1772 = vpop.f32.mrb[0].mxu0
        %v1773 = vadd.f32 0.0, %v1772
        %1774 = vdwg.mxu0
        %v1775 = vadd.f32 %v1630, %v1697
        %v1776 = vadd.f32 %v1631, %v1699
        %v1777 = vadd.f32 %v1632, %v1701
        %v1778 = vadd.f32 %v1633, %v1703
        %v1779 = vadd.f32 %v1634, %v1707
        %v1780 = vadd.f32 %v1635, %v1709
        %v1781 = vadd.f32 %v1636, %v1711
        %v1782 = vadd.f32 %v1637, %v1713
        %v1783 = vadd.f32 %v1638, %v1717
        %v1784 = vadd.f32 %v1639, %v1719
        %v1785 = vadd.f32 %v1640, %v1721
        %v1786 = vadd.f32 %v1641, %v1723
        %v1787 = vadd.f32 %v1642, %v1727
        %v1788 = vadd.f32 %v1643, %v1729
        %v1789 = vadd.f32 %v1644, %v1731
        %v1790 = vadd.f32 %v1645, %v1733
        %v1791 = vadd.f32 %v1646, %v1737
        %v1792 = vadd.f32 %v1647, %v1739
        %v1793 = vadd.f32 %v1648, %v1741
        %v1794 = vadd.f32 %v1649, %v1743
        %v1795 = vadd.f32 %v1650, %v1747
        %v1796 = vadd.f32 %v1651, %v1749
        %v1797 = vadd.f32 %v1652, %v1751
        %v1798 = vadd.f32 %v1653, %v1753
        %v1799 = vadd.f32 %v1654, %v1757
        %v1800 = vadd.f32 %v1655, %v1759
        %v1801 = vadd.f32 %v1656, %v1761
        %v1802 = vadd.f32 %v1657, %v1763
        %v1803 = vadd.f32 %v1658, %v1767
        %v1804 = vadd.f32 %v1659, %v1769
        %v1805 = vadd.f32 %v1660, %v1771
        %v1806 = vadd.f32 %v1661, %v1773
        %1807 = vst [vmem:[#allocation5] sm:$0xff] %v1775
        %1808 = vst [vmem:[#allocation5 + $0x8] sm:$0xff] %v1776
        %1809 = vst [vmem:[#allocation5 + $0x10] sm:$0xff] %v1777
        %1810 = vst [vmem:[#allocation5 + $0x18] sm:$0xff] %v1778
        %1811 = vst [vmem:[#allocation5 + $0x20] sm:$0xff] %v1779
        %1812 = vst [vmem:[#allocation5 + $0x28] sm:$0xff] %v1780
        %1813 = vst [vmem:[#allocation5 + $0x30] sm:$0xff] %v1781
        %1814 = vst [vmem:[#allocation5 + $0x38] sm:$0xff] %v1782
        %1815 = vst [vmem:[#allocation5 + $0x40] sm:$0xff] %v1783
        %1816 = vst [vmem:[#allocation5 + $0x48] sm:$0xff] %v1784
        %1817 = vst [vmem:[#allocation5 + $0x50] sm:$0xff] %v1785
        %1818 = vst [vmem:[#allocation5 + $0x58] sm:$0xff] %v1786
        %1819 = vst [vmem:[#allocation5 + $0x60] sm:$0xff] %v1787
        %1820 = vst [vmem:[#allocation5 + $0x68] sm:$0xff] %v1788
        %1821 = vst [vmem:[#allocation5 + $0x70] sm:$0xff] %v1789
        %1822 = vst [vmem:[#allocation5 + $0x78] sm:$0xff] %v1790
        %1823 = vst [vmem:[#allocation5 + $0x80] sm:$0xff] %v1791
        %1824 = vst [vmem:[#allocation5 + $0x88] sm:$0xff] %v1792
        %1825 = vst [vmem:[#allocation5 + $0x90] sm:$0xff] %v1793
        %1826 = vst [vmem:[#allocation5 + $0x98] sm:$0xff] %v1794
        %1827 = vst [vmem:[#allocation5 + $0xa0] sm:$0xff] %v1795
        %1828 = vst [vmem:[#allocation5 + $0xa8] sm:$0xff] %v1796
        %1829 = vst [vmem:[#allocation5 + $0xb0] sm:$0xff] %v1797
        %1830 = vst [vmem:[#allocation5 + $0xb8] sm:$0xff] %v1798
        %1831 = vst [vmem:[#allocation5 + $0xc0] sm:$0xff] %v1799
        %1832 = vst [vmem:[#allocation5 + $0xc8] sm:$0xff] %v1800
        %1833 = vst [vmem:[#allocation5 + $0xd0] sm:$0xff] %v1801
        %1834 = vst [vmem:[#allocation5 + $0xd8] sm:$0xff] %v1802
        %1835 = vst [vmem:[#allocation5 + $0xe0] sm:$0xff] %v1803
        %1836 = vst [vmem:[#allocation5 + $0xe8] sm:$0xff] %v1804
        %1837 = vst [vmem:[#allocation5 + $0xf0] sm:$0xff] %v1805
        %1838 = vst [vmem:[#allocation5 + $0xf8] sm:$0xff] %v1806
        // Predicated region
        $region97: #{tpu_custom_call.1} parent=75 // pred_check
          %p1839 = pneg %p622
        $region98: #{tpu_custom_call.1} parent=75 // pred_check_branch
          %1841 = sbr.rel (%p1839) target = $region100
        $region99: #{tpu_custom_call.1} parent=75 // pred_region
          %v1842 = vld [vmem:[#allocation5] sm:$0xff]
          %v1843 = vld [vmem:[#allocation5 + $0x8] sm:$0xff]
          %v1844 = vld [vmem:[#allocation5 + $0x10] sm:$0xff]
          %v1845 = vld [vmem:[#allocation5 + $0x18] sm:$0xff]
          %v1846 = vld [vmem:[#allocation5 + $0x20] sm:$0xff]
          %v1847 = vld [vmem:[#allocation5 + $0x28] sm:$0xff]
          %v1848 = vld [vmem:[#allocation5 + $0x30] sm:$0xff]
          %v1849 = vld [vmem:[#allocation5 + $0x38] sm:$0xff]
          %v1850 = vld [vmem:[#allocation5 + $0x40] sm:$0xff]
          %v1851 = vld [vmem:[#allocation5 + $0x48] sm:$0xff]
          %v1852 = vld [vmem:[#allocation5 + $0x50] sm:$0xff]
          %v1853 = vld [vmem:[#allocation5 + $0x58] sm:$0xff]
          %v1854 = vld [vmem:[#allocation5 + $0x60] sm:$0xff]
          %v1855 = vld [vmem:[#allocation5 + $0x68] sm:$0xff]
          %v1856 = vld [vmem:[#allocation5 + $0x70] sm:$0xff]
          %v1857 = vld [vmem:[#allocation5 + $0x78] sm:$0xff]
          %v1858 = vld [vmem:[#allocation5 + $0x80] sm:$0xff]
          %v1859 = vld [vmem:[#allocation5 + $0x88] sm:$0xff]
          %v1860 = vld [vmem:[#allocation5 + $0x90] sm:$0xff]
          %v1861 = vld [vmem:[#allocation5 + $0x98] sm:$0xff]
          %v1862 = vld [vmem:[#allocation5 + $0xa0] sm:$0xff]
          %v1863 = vld [vmem:[#allocation5 + $0xa8] sm:$0xff]
          %v1864 = vld [vmem:[#allocation5 + $0xb0] sm:$0xff]
          %v1865 = vld [vmem:[#allocation5 + $0xb8] sm:$0xff]
          %v1866 = vld [vmem:[#allocation5 + $0xc0] sm:$0xff]
          %v1867 = vld [vmem:[#allocation5 + $0xc8] sm:$0xff]
          %v1868 = vld [vmem:[#allocation5 + $0xd0] sm:$0xff]
          %v1869 = vld [vmem:[#allocation5 + $0xd8] sm:$0xff]
          %v1870 = vld [vmem:[#allocation5 + $0xe0] sm:$0xff]
          %v1871 = vld [vmem:[#allocation5 + $0xe8] sm:$0xff]
          %v1872 = vld [vmem:[#allocation5 + $0xf0] sm:$0xff]
          %v1873 = vld [vmem:[#allocation5 + $0xf8] sm:$0xff]
          %v1874 = vmax.f32 %v1842, 1e-20
          %v1875 = vmax.f32 %v1844, 1e-20
          %v1876 = vmax.f32 %v1846, 1e-20
          %v1877 = vmax.f32 %v1848, 1e-20
          %v1878 = vmax.f32 %v1850, 1e-20
          %v1879 = vmax.f32 %v1852, 1e-20
          %v1880 = vmax.f32 %v1854, 1e-20
          %v1881 = vmax.f32 %v1856, 1e-20
          %v1882 = vmax.f32 %v1858, 1e-20
          %v1883 = vmax.f32 %v1860, 1e-20
          %v1884 = vmax.f32 %v1862, 1e-20
          %v1885 = vmax.f32 %v1864, 1e-20
          %v1886 = vmax.f32 %v1866, 1e-20
          %v1887 = vmax.f32 %v1868, 1e-20
          %v1888 = vmax.f32 %v1870, 1e-20
          %v1889 = vmax.f32 %v1872, 1e-20
          %v1890 = vrcp.pop %v1874
          %v1891 = vrcp.pop %v1875
          %v1892 = vrcp.pop %v1876
          %v1893 = vrcp.pop %v1877
          %v1894 = vrcp.pop %v1878
          %v1895 = vrcp.pop %v1879
          %v1896 = vrcp.pop %v1880
          %v1897 = vrcp.pop %v1881
          %v1898 = vrcp.pop %v1882
          %v1899 = vrcp.pop %v1883
          %v1900 = vrcp.pop %v1884
          %v1901 = vrcp.pop %v1885
          %v1902 = vrcp.pop %v1886
          %v1903 = vrcp.pop %v1887
          %v1904 = vrcp.pop %v1888
          %v1905 = vrcp.pop %v1889
          %v1906 = vmul.f32 %v1843, %v1890
          %v1907 = vmul.f32 %v1845, %v1891
          %v1908 = vmul.f32 %v1847, %v1892
          %v1909 = vmul.f32 %v1849, %v1893
          %v1910 = vmul.f32 %v1851, %v1894
          %v1911 = vmul.f32 %v1853, %v1895
          %v1912 = vmul.f32 %v1855, %v1896
          %v1913 = vmul.f32 %v1857, %v1897
          %v1914 = vmul.f32 %v1859, %v1898
          %v1915 = vmul.f32 %v1861, %v1899
          %v1916 = vmul.f32 %v1863, %v1900
          %v1917 = vmul.f32 %v1865, %v1901
          %v1918 = vmul.f32 %v1867, %v1902
          %v1919 = vmul.f32 %v1869, %v1903
          %v1920 = vmul.f32 %v1871, %v1904
          %v1921 = vmul.f32 %v1873, %v1905
          %v1922 = vld [vmem:[#allocation3] sm:$0xff]
          %v1923 = vld [vmem:[#allocation3 + $0x8] sm:$0xff]
          %v1924 = vld [vmem:[#allocation3 + $0x10] sm:$0xff]
          %v1925 = vld [vmem:[#allocation3 + $0x18] sm:$0xff]
          %v1926 = vld [vmem:[#allocation3 + $0x20] sm:$0xff]
          %v1927 = vld [vmem:[#allocation3 + $0x28] sm:$0xff]
          %v1928 = vld [vmem:[#allocation3 + $0x30] sm:$0xff]
          %v1929 = vld [vmem:[#allocation3 + $0x38] sm:$0xff]
          %v1930 = vld [vmem:[#allocation3 + $0x40] sm:$0xff]
          %v1931 = vld [vmem:[#allocation3 + $0x48] sm:$0xff]
          %v1932 = vld [vmem:[#allocation3 + $0x50] sm:$0xff]
          %v1933 = vld [vmem:[#allocation3 + $0x58] sm:$0xff]
          %v1934 = vld [vmem:[#allocation3 + $0x60] sm:$0xff]
          %v1935 = vld [vmem:[#allocation3 + $0x68] sm:$0xff]
          %v1936 = vld [vmem:[#allocation3 + $0x70] sm:$0xff]
          %v1937 = vld [vmem:[#allocation3 + $0x78] sm:$0xff]
          %v1938 = vadd.f32 %v1922, %v1906
          %v1939 = vadd.f32 %v1923, %v1907
          %v1940 = vadd.f32 %v1924, %v1908
          %v1941 = vadd.f32 %v1925, %v1909
          %v1942 = vadd.f32 %v1926, %v1910
          %v1943 = vadd.f32 %v1927, %v1911
          %v1944 = vadd.f32 %v1928, %v1912
          %v1945 = vadd.f32 %v1929, %v1913
          %v1946 = vadd.f32 %v1930, %v1914
          %v1947 = vadd.f32 %v1931, %v1915
          %v1948 = vadd.f32 %v1932, %v1916
          %v1949 = vadd.f32 %v1933, %v1917
          %v1950 = vadd.f32 %v1934, %v1918
          %v1951 = vadd.f32 %v1935, %v1919
          %v1952 = vadd.f32 %v1936, %v1920
          %v1953 = vadd.f32 %v1937, %v1921
          %v1954 = vpack.c.bf16 %v1939, %v1938
          %v1955 = vpack.c.bf16 %v1941, %v1940
          %v1956 = vpack.c.bf16 %v1943, %v1942
          %v1957 = vpack.c.bf16 %v1945, %v1944
          %v1958 = vpack.c.bf16 %v1947, %v1946
          %v1959 = vpack.c.bf16 %v1949, %v1948
          %v1960 = vpack.c.bf16 %v1951, %v1950
          %v1961 = vpack.c.bf16 %v1953, %v1952
          %v1962 = vld [vmem:[%s527] sm:$0xf]
          %v1963 = vld [vmem:[%s527 + $0x4] sm:$0xf]
          %v1964 = vld [vmem:[%s527 + $0x8] sm:$0xf]
          %v1965 = vld [vmem:[%s527 + $0xc] sm:$0xf]
          %v1966 = vld [vmem:[%s527 + $0x10] sm:$0xf]
          %v1967 = vld [vmem:[%s527 + $0x14] sm:$0xf]
          %v1968 = vld [vmem:[%s527 + $0x18] sm:$0xf]
          %v1969 = vld [vmem:[%s527 + $0x1c] sm:$0xf]
          %v1970 = vld [vmem:[%s527 + $0x20] sm:$0xf]
          %v1971 = vld [vmem:[%s527 + $0x24] sm:$0xf]
          %v1972 = vld [vmem:[%s527 + $0x28] sm:$0xf]
          %v1973 = vld [vmem:[%s527 + $0x2c] sm:$0xf]
          %v1974 = vld [vmem:[%s527 + $0x30] sm:$0xf]
          %v1975 = vld [vmem:[%s527 + $0x34] sm:$0xf]
          %v1976 = vld [vmem:[%s527 + $0x38] sm:$0xf]
          %v1977 = vld [vmem:[%s527 + $0x3c] sm:$0xf]
          %v1978 = vld [vmem:[%s619] sm:$0x1]
          %v1980 = vlaneseq
          %v1981 = vshrl.u32 %v1980, 7
          %v1982 = vsub.s32 0, %v1981
          %v1983 = vrot.slane %v1978, %v1982
          %v2001 = vunpack.c.l.b16 %v1962
          %v2002 = vunpack.c.l.b16 %v1963
          %v2003 = vunpack.c.l.b16 %v1964
          %v2004 = vunpack.c.l.b16 %v1965
          %v2005 = vunpack.c.l.b16 %v1966
          %v2006 = vunpack.c.l.b16 %v1967
          %v2007 = vunpack.c.l.b16 %v1968
          %v2008 = vunpack.c.l.b16 %v1969
          %v2009 = vunpack.c.l.b16 %v1970
          %v2010 = vunpack.c.l.b16 %v1971
          %v2011 = vunpack.c.l.b16 %v1972
          %v2012 = vunpack.c.l.b16 %v1973
          %v2013 = vunpack.c.l.b16 %v1974
          %v2014 = vunpack.c.l.b16 %v1975
          %v2015 = vunpack.c.l.b16 %v1976
          %v2016 = vunpack.c.l.b16 %v1977
          %v2017 = vpack.c.b16 %v2002, %v2001
          %v2018 = vpack.c.b16 %v2004, %v2003
          %v2019 = vpack.c.b16 %v2006, %v2005
          %v2020 = vpack.c.b16 %v2008, %v2007
          %v2021 = vpack.c.b16 %v2010, %v2009
          %v2022 = vpack.c.b16 %v2012, %v2011
          %v2023 = vpack.c.b16 %v2014, %v2013
          %v2024 = vpack.c.b16 %v2016, %v2015
          %2033 = vmatprep.subr.bf16.mxu0 0
          %2034 = vmatpush1.bf16.msra.mxu0 %v2017
          %2035 = vmatprep.subr.bf16.mxu0 0
          %2036 = vmatpush1.bf16.msra.mxu0 %v2018
          %2037 = vmatprep.subr.bf16.mxu0 0
          %2038 = vmatpush1.bf16.msra.mxu0 %v2019
          %2039 = vmatprep.subr.bf16.mxu0 0
          %2040 = vmatpush1.bf16.msra.mxu0 %v2020
          %2041 = vmatprep.subr.bf16.mxu0 0
          %2042 = vmatpush1.bf16.msra.mxu0 %v2021
          %2043 = vmatprep.subr.bf16.mxu0 0
          %2044 = vmatpush1.bf16.msra.mxu0 %v2022
          %2045 = vmatprep.subr.bf16.mxu0 0
          %2046 = vmatpush1.bf16.msra.mxu0 %v2023
          %2047 = vmatprep.subr.bf16.mxu0 0
          %2048 = vmatpush1.bf16.msra.mxu0 %v2024
          %2049 = vmatprep.subr.bf16.mxu0 0
          %2050 = vmatpush1.bf16.msra.mxu0 0
          %2051 = vmatprep.subr.bf16.mxu0 0
          %2052 = vmatpush1.bf16.msra.mxu0 0
          %2053 = vmatprep.subr.bf16.mxu0 0
          %2054 = vmatpush1.bf16.msra.mxu0 0
          %2055 = vmatprep.subr.bf16.mxu0 0
          %2056 = vmatpush1.bf16.msra.mxu0 0
          %2057 = vmatprep.subr.bf16.mxu0 0
          %2058 = vmatpush1.bf16.msra.mxu0 0
          %2059 = vmatprep.subr.bf16.mxu0 0
          %2060 = vmatpush1.bf16.msra.mxu0 0
          %2061 = vmatprep.subr.bf16.mxu0 0
          %2062 = vmatpush1.bf16.msra.mxu0 0
          %2063 = vmatprep.subr.bf16.mxu0 0
          %2064 = vmatpush1.bf16.msra.mxu0 0
          %2065 = vmatprep.mubr.bf16.mxu0 0
          %2066 = vmatmul.mubr.bf16.gmra.mrb[0].mxu0 %v1954
          %v2067 = vpop.f32.mrb[0].mxu0
          %v2068 = vadd.f32 %v1983, %v2067
          %v2069 = vpop.f32.mrb[0].mxu0
          %v2070 = vpop.f32.mrb[0].mxu0
          %v2071 = vadd.f32 %v1983, %v2070
          %v2072 = vpop.f32.mrb[0].mxu0
          %2073 = vmatprep.mubr.bf16.mxu0 0
          %2074 = vmatmul.mubr.bf16.gmra.mrb[0].mxu0 %v1955
          %v2075 = vpop.f32.mrb[0].mxu0
          %v2076 = vadd.f32 %v1983, %v2075
          %v2077 = vpop.f32.mrb[0].mxu0
          %v2078 = vpop.f32.mrb[0].mxu0
          %v2079 = vadd.f32 %v1983, %v2078
          %v2080 = vpop.f32.mrb[0].mxu0
          %2081 = vmatprep.mubr.bf16.mxu0 0
          %2082 = vmatmul.mubr.bf16.gmra.mrb[0].mxu0 %v1956
          %v2083 = vpop.f32.mrb[0].mxu0
          %v2084 = vadd.f32 %v1983, %v2083
          %v2085 = vpop.f32.mrb[0].mxu0
          %v2086 = vpop.f32.mrb[0].mxu0
          %v2087 = vadd.f32 %v1983, %v2086
          %v2088 = vpop.f32.mrb[0].mxu0
          %2089 = vmatprep.mubr.bf16.mxu0 0
          %2090 = vmatmul.mubr.bf16.gmra.mrb[0].mxu0 %v1957
          %v2091 = vpop.f32.mrb[0].mxu0
          %v2092 = vadd.f32 %v1983, %v2091
          %v2093 = vpop.f32.mrb[0].mxu0
          %v2094 = vpop.f32.mrb[0].mxu0
          %v2095 = vadd.f32 %v1983, %v2094
          %v2096 = vpop.f32.mrb[0].mxu0
          %2097 = vmatprep.mubr.bf16.mxu0 0
          %2098 = vmatmul.mubr.bf16.gmra.mrb[0].mxu0 %v1958
          %v2099 = vpop.f32.mrb[0].mxu0
          %v2100 = vadd.f32 %v1983, %v2099
          %v2101 = vpop.f32.mrb[0].mxu0
          %v2102 = vpop.f32.mrb[0].mxu0
          %v2103 = vadd.f32 %v1983, %v2102
          %v2104 = vpop.f32.mrb[0].mxu0
          %2105 = vmatprep.mubr.bf16.mxu0 0
          %2106 = vmatmul.mubr.bf16.gmra.mrb[0].mxu0 %v1959
          %v2107 = vpop.f32.mrb[0].mxu0
          %v2108 = vadd.f32 %v1983, %v2107
          %v2109 = vpop.f32.mrb[0].mxu0
          %v2110 = vpop.f32.mrb[0].mxu0
          %v2111 = vadd.f32 %v1983, %v2110
          %v2112 = vpop.f32.mrb[0].mxu0
          %2113 = vmatprep.mubr.bf16.mxu0 0
          %2114 = vmatmul.mubr.bf16.gmra.mrb[0].mxu0 %v1960
          %v2115 = vpop.f32.mrb[0].mxu0
          %v2116 = vadd.f32 %v1983, %v2115
          %v2117 = vpop.f32.mrb[0].mxu0
          %v2118 = vpop.f32.mrb[0].mxu0
          %v2119 = vadd.f32 %v1983, %v2118
          %v2120 = vpop.f32.mrb[0].mxu0
          %2121 = vmatprep.mubr.bf16.mxu0 0
          %2122 = vmatmul.mubr.bf16.gmra.mrb[0].mxu0 %v1961
          %v2123 = vpop.f32.mrb[0].mxu0
          %v2124 = vadd.f32 %v1983, %v2123
          %v2125 = vpop.f32.mrb[0].mxu0
          %v2126 = vpop.f32.mrb[0].mxu0
          %v2127 = vadd.f32 %v1983, %v2126
          %v2128 = vpop.f32.mrb[0].mxu0
          %2129 = vdwg.mxu0
          %p2130 = scmp.gt.s32.totalorder %s34, 0
          %s2131 = scalar_select %p2130, 1.0, 0.0
          %vm2132 = vcmp.lt.s32.totalorder %v1526, 64
          %vm2133 = vcmp.lt.s32.totalorder %v1527, 64
          %vm2134 = vcmp.lt.s32.totalorder %v1528, 64
          %vm2135 = vcmp.lt.s32.totalorder %v1529, 64
          %vm2136 = vcmp.lt.s32.totalorder %v1530, 64
          %vm2137 = vcmp.lt.s32.totalorder %v1531, 64
          %vm2138 = vcmp.lt.s32.totalorder %v1532, 64
          %vm2139 = vcmp.lt.s32.totalorder %v1533, 64
          %vm2140 = vcmp.lt.s32.totalorder %v1534, 64
          %vm2141 = vcmp.lt.s32.totalorder %v1535, 64
          %vm2142 = vcmp.lt.s32.totalorder %v1536, 64
          %vm2143 = vcmp.lt.s32.totalorder %v1537, 64
          %vm2144 = vcmp.lt.s32.totalorder %v1538, 64
          %vm2145 = vcmp.lt.s32.totalorder %v1539, 64
          %vm2146 = vcmp.lt.s32.totalorder %v1540, 64
          %vm2147 = vcmp.lt.s32.totalorder %v1541, 64
          %v2148 = vsel %vm2132, 1.0, 0.0
          %v2149 = vsel %vm2133, 1.0, 0.0
          %v2150 = vsel %vm2134, 1.0, 0.0
          %v2151 = vsel %vm2135, 1.0, 0.0
          %v2152 = vsel %vm2136, 1.0, 0.0
          %v2153 = vsel %vm2137, 1.0, 0.0
          %v2154 = vsel %vm2138, 1.0, 0.0
          %v2155 = vsel %vm2139, 1.0, 0.0
          %v2156 = vsel %vm2140, 1.0, 0.0
          %v2157 = vsel %vm2141, 1.0, 0.0
          %v2158 = vsel %vm2142, 1.0, 0.0
          %v2159 = vsel %vm2143, 1.0, 0.0
          %v2160 = vsel %vm2144, 1.0, 0.0
          %v2161 = vsel %vm2145, 1.0, 0.0
          %v2162 = vsel %vm2146, 1.0, 0.0
          %v2163 = vsel %vm2147, 1.0, 0.0
          %v2164 = vld [vmem:[#allocation2] sm:$0xff]
          %v2165 = vld [vmem:[#allocation2 + $0x8] sm:$0xff]
          %v2166 = vld [vmem:[#allocation2 + $0x10] sm:$0xff]
          %v2167 = vld [vmem:[#allocation2 + $0x18] sm:$0xff]
          %v2168 = vld [vmem:[#allocation2 + $0x20] sm:$0xff]
          %v2169 = vld [vmem:[#allocation2 + $0x28] sm:$0xff]
          %v2170 = vld [vmem:[#allocation2 + $0x30] sm:$0xff]
          %v2171 = vld [vmem:[#allocation2 + $0x38] sm:$0xff]
          %v2172 = vld [vmem:[#allocation2 + $0x40] sm:$0xff]
          %v2173 = vld [vmem:[#allocation2 + $0x48] sm:$0xff]
          %v2174 = vld [vmem:[#allocation2 + $0x50] sm:$0xff]
          %v2175 = vld [vmem:[#allocation2 + $0x58] sm:$0xff]
          %v2176 = vld [vmem:[#allocation2 + $0x60] sm:$0xff]
          %v2177 = vld [vmem:[#allocation2 + $0x68] sm:$0xff]
          %v2178 = vld [vmem:[#allocation2 + $0x70] sm:$0xff]
          %v2179 = vld [vmem:[#allocation2 + $0x78] sm:$0xff]
          %v2180 = vstv %s2131
          %v2181 = vmul.f32 %v2180, %v2164
          %v2182 = vmul.f32 %v2180, %v2165
          %v2183 = vmul.f32 %v2180, %v2166
          %v2184 = vmul.f32 %v2180, %v2167
          %v2185 = vmul.f32 %v2180, %v2168
          %v2186 = vmul.f32 %v2180, %v2169
          %v2187 = vmul.f32 %v2180, %v2170
          %v2188 = vmul.f32 %v2180, %v2171
          %v2189 = vmul.f32 %v2180, %v2172
          %v2190 = vmul.f32 %v2180, %v2173
          %v2191 = vmul.f32 %v2180, %v2174
          %v2192 = vmul.f32 %v2180, %v2175
          %v2193 = vmul.f32 %v2180, %v2176
          %v2194 = vmul.f32 %v2180, %v2177
          %v2195 = vmul.f32 %v2180, %v2178
          %v2196 = vmul.f32 %v2180, %v2179
          %v2197 = vadd.f32 %v2068, %v2181
          %v2198 = vadd.f32 %v2071, %v2182
          %v2199 = vadd.f32 %v2076, %v2183
          %v2200 = vadd.f32 %v2079, %v2184
          %v2201 = vadd.f32 %v2084, %v2185
          %v2202 = vadd.f32 %v2087, %v2186
          %v2203 = vadd.f32 %v2092, %v2187
          %v2204 = vadd.f32 %v2095, %v2188
          %v2205 = vadd.f32 %v2100, %v2189
          %v2206 = vadd.f32 %v2103, %v2190
          %v2207 = vadd.f32 %v2108, %v2191
          %v2208 = vadd.f32 %v2111, %v2192
          %v2209 = vadd.f32 %v2116, %v2193
          %v2210 = vadd.f32 %v2119, %v2194
          %v2211 = vadd.f32 %v2124, %v2195
          %v2212 = vadd.f32 %v2127, %v2196
          %v2213 = vmul.f32 %v2197, %v2148
          %v2214 = vmul.f32 %v2198, %v2149
          %v2215 = vmul.f32 %v2199, %v2150
          %v2216 = vmul.f32 %v2200, %v2151
          %v2217 = vmul.f32 %v2201, %v2152
          %v2218 = vmul.f32 %v2202, %v2153
          %v2219 = vmul.f32 %v2203, %v2154
          %v2220 = vmul.f32 %v2204, %v2155
          %v2221 = vmul.f32 %v2205, %v2156
          %v2222 = vmul.f32 %v2206, %v2157
          %v2223 = vmul.f32 %v2207, %v2158
          %v2224 = vmul.f32 %v2208, %v2159
          %v2225 = vmul.f32 %v2209, %v2160
          %v2226 = vmul.f32 %v2210, %v2161
          %v2227 = vmul.f32 %v2211, %v2162
          %v2228 = vmul.f32 %v2212, %v2163
          %2229 = vst [vmem:[#allocation2] sm:$0xff] %v2213
          %2230 = vst [vmem:[#allocation2 + $0x8] sm:$0xff] %v2214
          %2231 = vst [vmem:[#allocation2 + $0x10] sm:$0xff] %v2215
          %2232 = vst [vmem:[#allocation2 + $0x18] sm:$0xff] %v2216
          %2233 = vst [vmem:[#allocation2 + $0x20] sm:$0xff] %v2217
          %2234 = vst [vmem:[#allocation2 + $0x28] sm:$0xff] %v2218
          %2235 = vst [vmem:[#allocation2 + $0x30] sm:$0xff] %v2219
          %2236 = vst [vmem:[#allocation2 + $0x38] sm:$0xff] %v2220
          %2237 = vst [vmem:[#allocation2 + $0x40] sm:$0xff] %v2221
          %2238 = vst [vmem:[#allocation2 + $0x48] sm:$0xff] %v2222
          %2239 = vst [vmem:[#allocation2 + $0x50] sm:$0xff] %v2223
          %2240 = vst [vmem:[#allocation2 + $0x58] sm:$0xff] %v2224
          %2241 = vst [vmem:[#allocation2 + $0x60] sm:$0xff] %v2225
          %2242 = vst [vmem:[#allocation2 + $0x68] sm:$0xff] %v2226
          %2243 = vst [vmem:[#allocation2 + $0x70] sm:$0xff] %v2227
          %2244 = vst [vmem:[#allocation2 + $0x78] sm:$0xff] %v2228
        $region100: #{tpu_custom_call.1} parent=75 // pred_fallthru
          _
        %p2245 = scmp.eq.s32.totalorder %s34, 2
        %p2246 = pnand %p2245, %p622
        %p2247 = pneg %p2246
        // Predicated region
        $region101: #{tpu_custom_call.1} parent=75 // pred_check
          _
        $region102: #{tpu_custom_call.1} parent=75 // pred_check_branch
          %2249 = sbr.rel (%p2246) target = $region104
        $region103: #{tpu_custom_call.1} parent=75 // pred_region
          %v2250 = vld [vmem:[#allocation2] sm:$0xff]
          %v2251 = vld [vmem:[#allocation2 + $0x8] sm:$0xff]
          %v2252 = vld [vmem:[#allocation2 + $0x10] sm:$0xff]
          %v2253 = vld [vmem:[#allocation2 + $0x18] sm:$0xff]
          %v2254 = vld [vmem:[#allocation2 + $0x20] sm:$0xff]
          %v2255 = vld [vmem:[#allocation2 + $0x28] sm:$0xff]
          %v2256 = vld [vmem:[#allocation2 + $0x30] sm:$0xff]
          %v2257 = vld [vmem:[#allocation2 + $0x38] sm:$0xff]
          %v2258 = vld [vmem:[#allocation2 + $0x40] sm:$0xff]
          %v2259 = vld [vmem:[#allocation2 + $0x48] sm:$0xff]
          %v2260 = vld [vmem:[#allocation2 + $0x50] sm:$0xff]
          %v2261 = vld [vmem:[#allocation2 + $0x58] sm:$0xff]
          %v2262 = vld [vmem:[#allocation2 + $0x60] sm:$0xff]
          %v2263 = vld [vmem:[#allocation2 + $0x68] sm:$0xff]
          %v2264 = vld [vmem:[#allocation2 + $0x70] sm:$0xff]
          %v2265 = vld [vmem:[#allocation2 + $0x78] sm:$0xff]
          %v2266 = vld [vmem:[%s9] sm:$0x1]
          %v2268 = vlaneseq
          %v2269 = vshrl.u32 %v2268, 7
          %v2270 = vsub.s32 0, %v2269
          %v2271 = vrot.slane %v2266, %v2270
          %v2273 = vmul.f32 %v2250, %v2271
          %v2274 = vmul.f32 %v2251, %v2271
          %v2275 = vmul.f32 %v2252, %v2271
          %v2276 = vmul.f32 %v2253, %v2271
          %v2277 = vmul.f32 %v2254, %v2271
          %v2278 = vmul.f32 %v2255, %v2271
          %v2279 = vmul.f32 %v2256, %v2271
          %v2280 = vmul.f32 %v2257, %v2271
          %v2281 = vmul.f32 %v2258, %v2271
          %v2282 = vmul.f32 %v2259, %v2271
          %v2283 = vmul.f32 %v2260, %v2271
          %v2284 = vmul.f32 %v2261, %v2271
          %v2285 = vmul.f32 %v2262, %v2271
          %v2286 = vmul.f32 %v2263, %v2271
          %v2287 = vmul.f32 %v2264, %v2271
          %v2288 = vmul.f32 %v2265, %v2271
          %v2289 = vld [vmem:[%s10] sm:$0x1]
          %v2291 = vlaneseq
          %v2292 = vshrl.u32 %v2291, 7
          %v2293 = vsub.s32 0, %v2292
          %v2294 = vrot.slane %v2289, %v2293
          %v2296 = vadd.f32 %v2273, %v2294
          %v2297 = vadd.f32 %v2274, %v2294
          %v2298 = vadd.f32 %v2275, %v2294
          %v2299 = vadd.f32 %v2276, %v2294
          %v2300 = vadd.f32 %v2277, %v2294
          %v2301 = vadd.f32 %v2278, %v2294
          %v2302 = vadd.f32 %v2279, %v2294
          %v2303 = vadd.f32 %v2280, %v2294
          %v2304 = vadd.f32 %v2281, %v2294
          %v2305 = vadd.f32 %v2282, %v2294
          %v2306 = vadd.f32 %v2283, %v2294
          %v2307 = vadd.f32 %v2284, %v2294
          %v2308 = vadd.f32 %v2285, %v2294
          %v2309 = vadd.f32 %v2286, %v2294
          %v2310 = vadd.f32 %v2287, %v2294
          %v2311 = vadd.f32 %v2288, %v2294
          %v2312 = vld [vmem:[%s11] sm:$0x3]
          %2313 = vmatprep.subr.mxu0 0.0
          %2314 = vmatpush1.msra.mxu0 %v2296
          %2315 = vmatprep.subr.mxu0 0.0
          %2316 = vmatpush1.msra.mxu0 %v2297
          %2317 = vmatprep.subr.mxu0 0.0
          %2318 = vmatpush1.msra.mxu0 %v2298
          %2319 = vmatprep.subr.mxu0 0.0
          %2320 = vmatpush1.msra.mxu0 %v2299
          %2321 = vmatprep.subr.mxu0 0.0
          %2322 = vmatpush1.msra.mxu0 %v2300
          %2323 = vmatprep.subr.mxu0 0.0
          %2324 = vmatpush1.msra.mxu0 %v2301
          %2325 = vmatprep.subr.mxu0 0.0
          %2326 = vmatpush1.msra.mxu0 %v2302
          %2327 = vmatprep.subr.mxu0 0.0
          %2328 = vmatpush1.msra.mxu0 %v2303
          %2329 = vmatprep.subr.mxu0 0.0
          %2330 = vmatpush1.msra.mxu0 %v2304
          %2331 = vmatprep.subr.mxu0 0.0
          %2332 = vmatpush1.msra.mxu0 %v2305
          %2333 = vmatprep.subr.mxu0 0.0
          %2334 = vmatpush1.msra.mxu0 %v2306
          %2335 = vmatprep.subr.mxu0 0.0
          %2336 = vmatpush1.msra.mxu0 %v2307
          %2337 = vmatprep.subr.mxu0 0.0
          %2338 = vmatpush1.msra.mxu0 %v2308
          %2339 = vmatprep.subr.mxu0 0.0
          %2340 = vmatpush1.msra.mxu0 %v2309
          %2341 = vmatprep.subr.mxu0 0.0
          %2342 = vmatpush1.msra.mxu0 %v2310
          %2343 = vmatprep.subr.mxu0 0.0
          %2344 = vmatpush1.msra.mxu0 %v2311
          %2345 = vmatprep.subr.mxu0 0.0
          %2346 = vmatpush1.msra.mxu0 0.0
          %2347 = vmatprep.subr.mxu0 0.0
          %2348 = vmatpush1.msra.mxu0 0.0
          %2349 = vmatprep.subr.mxu0 0.0
          %2350 = vmatpush1.msra.mxu0 0.0
          %2351 = vmatprep.subr.mxu0 0.0
          %2352 = vmatpush1.msra.mxu0 0.0
          %2353 = vmatprep.subr.mxu0 0.0
          %2354 = vmatpush1.msra.mxu0 0.0
          %2355 = vmatprep.subr.mxu0 0.0
          %2356 = vmatpush1.msra.mxu0 0.0
          %2357 = vmatprep.subr.mxu0 0.0
          %2358 = vmatpush1.msra.mxu0 0.0
          %2359 = vmatprep.subr.mxu0 0.0
          %2360 = vmatpush1.msra.mxu0 0.0
          %2361 = vmatprep.subr.mxu0 0.0
          %2362 = vmatpush1.msra.mxu0 0.0
          %2363 = vmatprep.subr.mxu0 0.0
          %2364 = vmatpush1.msra.mxu0 0.0
          %2365 = vmatprep.subr.mxu0 0.0
          %2366 = vmatpush1.msra.mxu0 0.0
          %2367 = vmatprep.subr.mxu0 0.0
          %2368 = vmatpush1.msra.mxu0 0.0
          %2369 = vmatprep.subr.mxu0 0.0
          %2370 = vmatpush1.msra.mxu0 0.0
          %2371 = vmatprep.subr.mxu0 0.0
          %2372 = vmatpush1.msra.mxu0 0.0
          %2373 = vmatprep.subr.mxu0 0.0
          %2374 = vmatpush1.msra.mxu0 0.0
          %2375 = vmatprep.subr.mxu0 0.0
          %2376 = vmatpush1.msra.mxu0 0.0
          %2377 = vmatprep.mubr.f32.mxu0 0.0
          %2378 = vmatmul.mubr.f32.gmra.mrb[0].mxu0 %v2312
          %v2379 = vpop.f32.mrb[0].mxu0
          %v2380 = vadd.f32 0.0, %v2379
          %v2381 = vpop.f32.mrb[0].mxu0
          %2382 = vdwg.mxu0
          %v2383 = vld [vmem:[#allocation12] sm:$0xff]
          %v2384 = vld [vmem:[#allocation12 + $0x8] sm:$0xff]
          %v2385 = vld [vmem:[#allocation12 + $0x10] sm:$0xff]
          %v2386 = vld [vmem:[#allocation12 + $0x18] sm:$0xff]
          %v2387 = vld [vmem:[#allocation12 + $0x20] sm:$0xff]
          %v2388 = vld [vmem:[#allocation12 + $0x28] sm:$0xff]
          %v2389 = vld [vmem:[#allocation12 + $0x30] sm:$0xff]
          %v2390 = vld [vmem:[#allocation12 + $0x38] sm:$0xff]
          %v2391 = vld [vmem:[#allocation12 + $0x40] sm:$0xff]
          %v2392 = vld [vmem:[#allocation12 + $0x48] sm:$0xff]
          %v2393 = vld [vmem:[#allocation12 + $0x50] sm:$0xff]
          %v2394 = vld [vmem:[#allocation12 + $0x58] sm:$0xff]
          %v2395 = vld [vmem:[#allocation12 + $0x60] sm:$0xff]
          %v2396 = vld [vmem:[#allocation12 + $0x68] sm:$0xff]
          %v2397 = vld [vmem:[#allocation12 + $0x70] sm:$0xff]
          %v2398 = vld [vmem:[#allocation12 + $0x78] sm:$0xff]
          %v2399 = vld [vmem:[%s13] sm:$0x1]
          %v2401 = vlaneseq
          %v2402 = vshrl.u32 %v2401, 7
          %v2403 = vsub.s32 0, %v2402
          %v2404 = vrot.slane %v2399, %v2403
          %2406 = vmatprep.subr.mxu0 0.0
          %2407 = vmatpush1.msra.mxu0 %v2383
          %2408 = vmatprep.subr.mxu0 0.0
          %2409 = vmatpush1.msra.mxu0 %v2384
          %2410 = vmatprep.subr.mxu0 0.0
          %2411 = vmatpush1.msra.mxu0 %v2385
          %2412 = vmatprep.subr.mxu0 0.0
          %2413 = vmatpush1.msra.mxu0 %v2386
          %2414 = vmatprep.subr.mxu0 0.0
          %2415 = vmatpush1.msra.mxu0 %v2387
          %2416 = vmatprep.subr.mxu0 0.0
          %2417 = vmatpush1.msra.mxu0 %v2388
          %2418 = vmatprep.subr.mxu0 0.0
          %2419 = vmatpush1.msra.mxu0 %v2389
          %2420 = vmatprep.subr.mxu0 0.0
          %2421 = vmatpush1.msra.mxu0 %v2390
          %2422 = vmatprep.subr.mxu0 0.0
          %2423 = vmatpush1.msra.mxu0 %v2391
          %2424 = vmatprep.subr.mxu0 0.0
          %2425 = vmatpush1.msra.mxu0 %v2392
          %2426 = vmatprep.subr.mxu0 0.0
          %2427 = vmatpush1.msra.mxu0 %v2393
          %2428 = vmatprep.subr.mxu0 0.0
          %2429 = vmatpush1.msra.mxu0 %v2394
          %2430 = vmatprep.subr.mxu0 0.0
          %2431 = vmatpush1.msra.mxu0 %v2395
          %2432 = vmatprep.subr.mxu0 0.0
          %2433 = vmatpush1.msra.mxu0 %v2396
          %2434 = vmatprep.subr.mxu0 0.0
          %2435 = vmatpush1.msra.mxu0 %v2397
          %2436 = vmatprep.subr.mxu0 0.0
          %2437 = vmatpush1.msra.mxu0 %v2398
          %2438 = vmatprep.subr.mxu0 0.0
          %2439 = vmatpush1.msra.mxu0 0.0
          %2440 = vmatprep.subr.mxu0 0.0
          %2441 = vmatpush1.msra.mxu0 0.0
          %2442 = vmatprep.subr.mxu0 0.0
          %2443 = vmatpush1.msra.mxu0 0.0
          %2444 = vmatprep.subr.mxu0 0.0
          %2445 = vmatpush1.msra.mxu0 0.0
          %2446 = vmatprep.subr.mxu0 0.0
          %2447 = vmatpush1.msra.mxu0 0.0
          %2448 = vmatprep.subr.mxu0 0.0
          %2449 = vmatpush1.msra.mxu0 0.0
          %2450 = vmatprep.subr.mxu0 0.0
          %2451 = vmatpush1.msra.mxu0 0.0
          %2452 = vmatprep.subr.mxu0 0.0
          %2453 = vmatpush1.msra.mxu0 0.0
          %2454 = vmatprep.subr.mxu0 0.0
          %2455 = vmatpush1.msra.mxu0 0.0
          %2456 = vmatprep.subr.mxu0 0.0
          %2457 = vmatpush1.msra.mxu0 0.0
          %2458 = vmatprep.subr.mxu0 0.0
          %2459 = vmatpush1.msra.mxu0 0.0
          %2460 = vmatprep.subr.mxu0 0.0
          %2461 = vmatpush1.msra.mxu0 0.0
          %2462 = vmatprep.subr.mxu0 0.0
          %2463 = vmatpush1.msra.mxu0 0.0
          %2464 = vmatprep.subr.mxu0 0.0
          %2465 = vmatpush1.msra.mxu0 0.0
          %2466 = vmatprep.subr.mxu0 0.0
          %2467 = vmatpush1.msra.mxu0 0.0
          %2468 = vmatprep.subr.mxu0 0.0
          %2469 = vmatpush1.msra.mxu0 0.0
          %2470 = vmatprep.mubr.f32.mxu0 0.0
          %2471 = vmatmul.mubr.f32.gmra.mrb[0].mxu0 %v2380
          %v2472 = vpop.f32.mrb[0].mxu0
          %v2473 = vadd.f32 %v2404, %v2472
          %v2474 = vpop.f32.mrb[0].mxu0
          %2475 = vdwg.mxu0
          %2476 = vst [vmem:[#allocation13] sm:$0x3] %v2473
        $region104: #{tpu_custom_call.1} parent=75 // pred_fallthru
          _
        // Predicated region
        $region105: #{tpu_custom_call.1} parent=75 // pred_check
          %p2477 = pneg %p384
        $region106: #{tpu_custom_call.1} parent=75 // pred_check_branch
          %2479 = sbr.rel (%p2477) target = $region108
        $region107: #{tpu_custom_call.1} parent=75 // pred_region
          %s2481 = ssub.s32 32, 32
          %2482 = vsyncadd [#allocation9], %s2481
          %s2484 = sshll.u32 [#allocation13], 4
          %s2485 = int_to_ptr.vmem [resolvable:$true] %s2484
          %2487 = dma.vmem_to_hbm [thread:$0]  %s2485, 32, %s14, [#allocation9]
        $region108: #{tpu_custom_call.1} parent=75 // pred_fallthru
          _
        // Predicated region
        $region109: #{tpu_custom_call.1} parent=75 // pred_check
          %p2488 = pneg %p384
        $region110: #{tpu_custom_call.1} parent=75 // pred_check_branch
          %2490 = sbr.rel (%p2488) target = $region112
        $region111: #{tpu_custom_call.1} parent=75 // pred_region
          %2491 = dma.done [#allocation9], 32
        $region112: #{tpu_custom_call.1} parent=75 // pred_fallthru
          _
      $region76: #{tpu_custom_call.1} parent=5 // pred_fallthru
        _
      %p2492 = scmp.le.s32.totalorder 2, %s25
      // Predicated region
      $region113: #{tpu_custom_call.1} parent=5 // pred_check
        %p2493 = pneg %p2492
      $region114: #{tpu_custom_call.1} parent=5 // pred_check_branch
        %2495 = sbr.rel (%p2493) target = $region116
      $region115: #{tpu_custom_call.1} parent=5 // pred_region
        %s2496 = ssub.s32 %s25, 2
      $region116: #{tpu_custom_call.1} parent=5 // pred_fallthru
        _
    $region6: #{tpu_custom_call.1} parent=1 // loop_footer
      %s29 = sadd.s32 1, %s25
    $region7: #{tpu_custom_call.1} parent=1 // loop_footer_branch
      %24 = sbr.rel target = $region3
    $region8: #{tpu_custom_call.1} parent=1 // loop_exit
      _
    %2497 = vsyncpa [#allocation8], 1
    %s2498 = scalar_lea.sflag [#allocation8], 1
    %2499 = vsyncpa %s2498, 1
    %2500 = vsyncpa [#allocation11], 1
    %s2501 = scalar_lea.sflag [#allocation11], 1
    %2502 = vsyncpa %s2501, 1
    %2503 = vsyncpa [#allocation9], 1
    %s2504 = scalar_lea.sflag [#allocation9], 1
    %2505 = vsyncpa %s2504, 1

</llo_original>
